<compile_context>
chip_gen: v7x
topology: tpu7x:2x2x1
jax: 0.10.0
libtpu: 0.0.40
codegen_flags: <defaults>
</compile_context>

<pallas_src>
import numpy as np
import jax
import jax.numpy as jnp
from jax import lax
from jax.experimental import pallas as pl
from jax.experimental.pallas import tpu as pltpu

# --- MapConstants ---
EXPLORED_MAP = 1

# --- deterministic structuring elements (skimage.morphology.disk re-implemented) ---
def _disk(radius: int) -> np.ndarray:
    y, x = np.mgrid[-radius:radius + 1, -radius:radius + 1]
    return (x * x + y * y <= radius * radius).astype(np.float32)

DISK10 = _disk(10)          # (21, 21) dilate_explored_kernel (erosion SE)
DISK1 = _disk(1)            # (3, 3)   select_border_kernel (cross)
R1 = DISK10.shape[-1] // 2  # 10
R2 = DISK1.shape[-1] // 2   # 1

# Each disk row di covers a contiguous dj run [lo, hi] -> row-banded run sums (static).
ROW_BANDS = []
for _di in range(DISK10.shape[0]):
    _nz = np.nonzero(DISK10[_di])[0]
    ROW_BANDS.append((int(_nz[0]), int(_nz[-1])))


def _frontier_kernel(x_ref, o_ref):
    """x_ref: (block_b, M, M) EXPLORED channel block.  o_ref: (block_b*M, M) goal map rows."""
    Bt, M, _ = x_ref.shape
    BM = Bt * M
    MpC = M + 2 * R1 + 1                      # prefix-sum columns (leading zero + pad folded in)

    # Merge the batch tile into the sublane axis (layout-trivial: M % 8 == 0).
    x = x_ref[...].reshape(BM, M)
    g = jnp.where(x == 0.0, 0.0, 1.0)         # (1 - frontier) in {0,1}, f32

    # Per-item row index (used to emulate the conv's zero row-padding via masking).
    yy = lax.broadcasted_iota(jnp.int32, (Bt, M, M), 1).reshape(BM, M)

    # Constant prefix matrix: U2[j, k] = 1 iff j + R1 + 1 <= k, so
    #   S[r, k] = sum_{j + R1 + 1 <= k} g[r, j]
    # is the horizontal prefix sum of the zero-padded row (padding contributes nothing).
    jj = lax.broadcasted_iota(jnp.int32, (M, MpC), 0)
    kk = lax.broadcasted_iota(jnp.int32, (M, MpC), 1)
    u2 = jnp.where(jj + (R1 + 1) <= kk, 1.0, 0.0).astype(jnp.bfloat16)

    s = jnp.dot(g.astype(jnp.bfloat16), u2,
                preferred_element_type=jnp.float32)          # (BM, MpC), exact integer counts

    # disk(10) erosion:  acc[y, x] = sum_di ( S[y+d, x+hi+1] - S[y+d, x+lo] ),  d = di - R1.
    n_acc = 4
    accs = [jnp.zeros((BM, M), jnp.float32) for _ in range(n_acc)]
    for t, (lo, hi) in enumerate(ROW_BANDS):
        d = t - R1
        s_d = s if d == 0 else pltpu.roll(s, shift=(-d) % BM, axis=0)   # row r -> S[(r+d) mod BM]
        diff = s_d[:, hi + 1:hi + 1 + M] - s_d[:, lo:lo + M]
        valid = (yy + d >= 0) & (yy + d < M)                 # zero row-padding / batch boundary
        accs[t % n_acc] = accs[t % n_acc] + jnp.where(valid, diff, 0.0)
    acc = (accs[0] + accs[1]) + (accs[2] + accs[3])
    eroded = 1.0 - jnp.clip(acc, 0.0, 1.0)                   # binary {0,1}, f32

    # disk(1) (3x3 cross) dilation: horizontal 3-tap sum via tridiagonal matmul (zero boundary
    # built into the matrix), vertical taps via sublane rolls + border masks.
    rr = lax.broadcasted_iota(jnp.int32, (M, M), 0)
    cc = lax.broadcasted_iota(jnp.int32, (M, M), 1)
    k3 = jnp.where(jnp.abs(rr - cc) <= R2, 1.0, 0.0).astype(jnp.bfloat16)
    h3 = jnp.dot(eroded.astype(jnp.bfloat16), k3,
                 preferred_element_type=jnp.float32)         # left + center + right
    up = jnp.where(yy == M - 1, 0.0, pltpu.roll(eroded, shift=BM - 1, axis=0))   # row y+1
    dn = jnp.where(yy == 0, 0.0, pltpu.roll(eroded, shift=1, axis=0))            # row y-1
    dilated = jnp.clip(h3 + up + dn, 0.0, 1.0)

    o_ref[...] = dilated - eroded


def frontier_exploration_policy(map_features: jax.Array, *, block_b=None) -> jax.Array:
    """map_features: (B, C, M, M) float32 NCHW.  Returns (B, 1, M, M) float32 goal map."""
    B, _, M, _ = map_features.shape
    if block_b is None:
        block_b = next(bt for bt in (4, 2, 1) if B % bt == 0)
    assert B % block_b == 0, (B, block_b)

    out2d = pl.pallas_call(
        _frontier_kernel,
        out_shape=jax.ShapeDtypeStruct((B * M, M), jnp.float32),
        grid=(B // block_b,),
        in_specs=[pl.BlockSpec((block_b, None, M, M),          # channel selected in index_map
                               lambda b: (b, EXPLORED_MAP, 0, 0))],
        out_specs=pl.BlockSpec((block_b * M, M), lambda b: (b, 0)),
        compiler_params=pltpu.CompilerParams(
            dimension_semantics=("parallel",)),                # independent batch tiles (v7x)
    )(map_features.astype(jnp.float32))

    return out2d.reshape(B, 1, M, M)


def _reference(map_features: jax.Array) -> jax.Array:
    """Pure-JAX reference mirroring the PyTorch forward exactly."""
    frontier = (map_features[:, EXPLORED_MAP:EXPLORED_MAP + 1] == 0).astype(jnp.float32)
    k1 = jnp.asarray(DISK10)[None, None]
    k2 = jnp.asarray(DISK1)[None, None]

    def conv(x, k, pad):
        return jax.lax.conv_general_dilated(
            x, k, window_strides=(1, 1), padding=[(pad, pad), (pad, pad)],
            dimension_numbers=("NCHW", "OIHW", "NCHW"))

    eroded = 1.0 - jnp.clip(conv(1.0 - frontier, k1, R1), 0.0, 1.0)
    return jnp.clip(conv(eroded, k2, R2), 0.0, 1.0) - eroded


if __name__ == "__main__":
    B, C, M = 8, 8, 32   # C = 4 non-semantic + 4 semantic channels
    key = jax.random.PRNGKey(0)
    key_a, key_b = jax.random.split(key)
    mf = jax.random.uniform(key_a, (B, C, M, M), dtype=jnp.float32)
    # EXPLORED channel is a binary occupancy/explored map.
    explored_bin = (jax.random.uniform(key_b, (B, M, M)) > 0.55).astype(jnp.float32)
    mf = mf.at[:, EXPLORED_MAP].set(explored_bin)

    out = frontier_exploration_policy(mf)        # block_b=4 -> grid (2,)
    out = jax.block_until_ready(out)

    ref = _reference(mf)
    assert out.shape == (B, 1, M, M), out.shape
    np.testing.assert_allclose(np.asarray(out), np.asarray(ref), atol=1e-5)
    print("KERNEL_OK")
</pallas_src>

<mosaic_0001>
module attributes {stable_mosaic.version = 11 : i64} {
  func.func @_frontier_kernel(%arg0: i32, %arg1: memref<4x1x32x32xf32, #tpu.memory_space<vmem>>, %arg2: memref<128x32xf32, #tpu.memory_space<vmem>>) attributes {dimension_semantics = [#tpu.dimension_semantics<parallel>], iteration_bounds = array<i64: 2>, scalar_prefetch = 0 : i64, scratch_operands = 0 : i64, tpu.core_type = #tpu.core_type<tc>, window_params = [{transform_indices = @transform_0, window_bounds = array<i64: 4, 1, 32, 32>}, {transform_indices = @transform_1, window_bounds = array<i64: 128, 32>}]} {
    %c0 = arith.constant 0 : index
    %c0_0 = arith.constant 0 : index
    %c0_1 = arith.constant 0 : index
    %c0_2 = arith.constant 0 : index
    %0 = vector.load %arg1[%c0, %c0_0, %c0_1, %c0_2] : memref<4x1x32x32xf32, #tpu.memory_space<vmem>>, vector<4x1x32x32xf32>
    %1 = vector.shape_cast %0 : vector<4x1x32x32xf32> to vector<4x32x32xf32>
    %2 = vector.shape_cast %1 : vector<4x32x32xf32> to vector<128x32xf32>
    %cst = arith.constant 0.000000e+00 : f32
    %3 = vector.broadcast %cst : f32 to vector<128x32xf32>
    %4 = arith.cmpf oeq, %2, %3 : vector<128x32xf32>
    %cst_3 = arith.constant 0.000000e+00 : f32
    %cst_4 = arith.constant 1.000000e+00 : f32
    %5 = vector.broadcast %cst_3 : f32 to vector<128x32xf32>
    %6 = vector.broadcast %cst_4 : f32 to vector<128x32xf32>
    %7 = arith.select %4, %5, %6 : vector<128x32xi1>, vector<128x32xf32>
    %8 = tpu.iota {dimensions = array<i32: 1>} : vector<4x32x32xi32>
    %9 = vector.shape_cast %8 : vector<4x32x32xi32> to vector<128x32xi32>
    %10 = tpu.iota {dimensions = array<i32: 0>} : vector<32x53xi32>
    %11 = tpu.iota {dimensions = array<i32: 1>} : vector<32x53xi32>
    %c11_i32 = arith.constant 11 : i32
    %12 = vector.broadcast %c11_i32 : i32 to vector<32x53xi32>
    %13 = arith.addi %10, %12 : vector<32x53xi32>
    %14 = arith.cmpi sle, %13, %11 : vector<32x53xi32>
    %cst_5 = arith.constant 1.000000e+00 : f32
    %cst_6 = arith.constant 0.000000e+00 : f32
    %15 = vector.broadcast %cst_5 : f32 to vector<32x53xf32>
    %16 = vector.broadcast %cst_6 : f32 to vector<32x53xf32>
    %17 = arith.select %14, %15, %16 : vector<32x53xi1>, vector<32x53xf32>
    %18 = arith.truncf %17 : vector<32x53xf32> to vector<32x53xbf16>
    %19 = arith.truncf %7 : vector<128x32xf32> to vector<128x32xbf16>
    %cst_7 = arith.constant dense<0.000000e+00> : vector<128x53xf32>
    %20 = tpu.matmul %19, %18, %cst_7 {dimension_numbers = #tpu.dot_dimension_numbers<[1], [0], [0], [1], [0, 0, 1, 1], [], []>} : vector<128x32xbf16>, vector<32x53xbf16>, vector<128x53xf32> -> vector<128x53xf32>
    %cst_8 = arith.constant 0.000000e+00 : f32
    %21 = vector.broadcast %cst_8 : f32 to vector<128x32xf32>
    %cst_9 = arith.constant 0.000000e+00 : f32
    %22 = vector.broadcast %cst_9 : f32 to vector<128x32xf32>
    %cst_10 = arith.constant 0.000000e+00 : f32
    %23 = vector.broadcast %cst_10 : f32 to vector<128x32xf32>
    %cst_11 = arith.constant 0.000000e+00 : f32
    %24 = vector.broadcast %cst_11 : f32 to vector<128x32xf32>
    %c10_i32 = arith.constant 10 : i32
    %25 = tpu.dynamic_rotate %20 by %c10_i32 dim 0 : vector<128x53xf32>, i32 -> vector<128x53xf32>
    %26 = vector.extract_strided_slice %25 {offsets = [0, 11], sizes = [128, 32], strides = [1, 1]} : vector<128x53xf32> to vector<128x32xf32>
    %27 = vector.extract_strided_slice %25 {offsets = [0, 10], sizes = [128, 32], strides = [1, 1]} : vector<128x53xf32> to vector<128x32xf32>
    %28 = arith.subf %26, %27 : vector<128x32xf32>
    %c-10_i32 = arith.constant -10 : i32
    %29 = vector.broadcast %c-10_i32 : i32 to vector<128x32xi32>
    %30 = arith.addi %9, %29 : vector<128x32xi32>
    %c0_i32 = arith.constant 0 : i32
    %31 = vector.broadcast %c0_i32 : i32 to vector<128x32xi32>
    %32 = arith.cmpi sge, %30, %31 : vector<128x32xi32>
    %c-10_i32_12 = arith.constant -10 : i32
    %33 = vector.broadcast %c-10_i32_12 : i32 to vector<128x32xi32>
    %34 = arith.addi %9, %33 : vector<128x32xi32>
    %c32_i32 = arith.constant 32 : i32
    %35 = vector.broadcast %c32_i32 : i32 to vector<128x32xi32>
    %36 = arith.cmpi slt, %34, %35 : vector<128x32xi32>
    %37 = arith.andi %32, %36 : vector<128x32xi1>
    %cst_13 = arith.constant 0.000000e+00 : f32
    %38 = vector.broadcast %cst_13 : f32 to vector<128x32xf32>
    %39 = arith.select %37, %28, %38 : vector<128x32xi1>, vector<128x32xf32>
    %40 = arith.addf %21, %39 : vector<128x32xf32>
    %c9_i32 = arith.constant 9 : i32
    %41 = tpu.dynamic_rotate %20 by %c9_i32 dim 0 : vector<128x53xf32>, i32 -> vector<128x53xf32>
    %42 = vector.extract_strided_slice %41 {offsets = [0, 15], sizes = [128, 32], strides = [1, 1]} : vector<128x53xf32> to vector<128x32xf32>
    %43 = vector.extract_strided_slice %41 {offsets = [0, 6], sizes = [128, 32], strides = [1, 1]} : vector<128x53xf32> to vector<128x32xf32>
    %44 = arith.subf %42, %43 : vector<128x32xf32>
    %c-9_i32 = arith.constant -9 : i32
    %45 = vector.broadcast %c-9_i32 : i32 to vector<128x32xi32>
    %46 = arith.addi %9, %45 : vector<128x32xi32>
    %c0_i32_14 = arith.constant 0 : i32
    %47 = vector.broadcast %c0_i32_14 : i32 to vector<128x32xi32>
    %48 = arith.cmpi sge, %46, %47 : vector<128x32xi32>
    %c-9_i32_15 = arith.constant -9 : i32
    %49 = vector.broadcast %c-9_i32_15 : i32 to vector<128x32xi32>
    %50 = arith.addi %9, %49 : vector<128x32xi32>
    %c32_i32_16 = arith.constant 32 : i32
    %51 = vector.broadcast %c32_i32_16 : i32 to vector<128x32xi32>
    %52 = arith.cmpi slt, %50, %51 : vector<128x32xi32>
    %53 = arith.andi %48, %52 : vector<128x32xi1>
    %cst_17 = arith.constant 0.000000e+00 : f32
    %54 = vector.broadcast %cst_17 : f32 to vector<128x32xf32>
    %55 = arith.select %53, %44, %54 : vector<128x32xi1>, vector<128x32xf32>
    %56 = arith.addf %22, %55 : vector<128x32xf32>
    %c8_i32 = arith.constant 8 : i32
    %57 = tpu.dynamic_rotate %20 by %c8_i32 dim 0 : vector<128x53xf32>, i32 -> vector<128x53xf32>
    %58 = vector.extract_strided_slice %57 {offsets = [0, 17], sizes = [128, 32], strides = [1, 1]} : vector<128x53xf32> to vector<128x32xf32>
    %59 = vector.extract_strided_slice %57 {offsets = [0, 4], sizes = [128, 32], strides = [1, 1]} : vector<128x53xf32> to vector<128x32xf32>
    %60 = arith.subf %58, %59 : vector<128x32xf32>
    %c-8_i32 = arith.constant -8 : i32
    %61 = vector.broadcast %c-8_i32 : i32 to vector<128x32xi32>
    %62 = arith.addi %9, %61 : vector<128x32xi32>
    %c0_i32_18 = arith.constant 0 : i32
    %63 = vector.broadcast %c0_i32_18 : i32 to vector<128x32xi32>
    %64 = arith.cmpi sge, %62, %63 : vector<128x32xi32>
    %c-8_i32_19 = arith.constant -8 : i32
    %65 = vector.broadcast %c-8_i32_19 : i32 to vector<128x32xi32>
    %66 = arith.addi %9, %65 : vector<128x32xi32>
    %c32_i32_20 = arith.constant 32 : i32
    %67 = vector.broadcast %c32_i32_20 : i32 to vector<128x32xi32>
    %68 = arith.cmpi slt, %66, %67 : vector<128x32xi32>
    %69 = arith.andi %64, %68 : vector<128x32xi1>
    %cst_21 = arith.constant 0.000000e+00 : f32
    %70 = vector.broadcast %cst_21 : f32 to vector<128x32xf32>
    %71 = arith.select %69, %60, %70 : vector<128x32xi1>, vector<128x32xf32>
    %72 = arith.addf %23, %71 : vector<128x32xf32>
    %c7_i32 = arith.constant 7 : i32
    %73 = tpu.dynamic_rotate %20 by %c7_i32 dim 0 : vector<128x53xf32>, i32 -> vector<128x53xf32>
    %74 = vector.extract_strided_slice %73 {offsets = [0, 18], sizes = [128, 32], strides = [1, 1]} : vector<128x53xf32> to vector<128x32xf32>
    %75 = vector.extract_strided_slice %73 {offsets = [0, 3], sizes = [128, 32], strides = [1, 1]} : vector<128x53xf32> to vector<128x32xf32>
    %76 = arith.subf %74, %75 : vector<128x32xf32>
    %c-7_i32 = arith.constant -7 : i32
    %77 = vector.broadcast %c-7_i32 : i32 to vector<128x32xi32>
    %78 = arith.addi %9, %77 : vector<128x32xi32>
    %c0_i32_22 = arith.constant 0 : i32
    %79 = vector.broadcast %c0_i32_22 : i32 to vector<128x32xi32>
    %80 = arith.cmpi sge, %78, %79 : vector<128x32xi32>
    %c-7_i32_23 = arith.constant -7 : i32
    %81 = vector.broadcast %c-7_i32_23 : i32 to vector<128x32xi32>
    %82 = arith.addi %9, %81 : vector<128x32xi32>
    %c32_i32_24 = arith.constant 32 : i32
    %83 = vector.broadcast %c32_i32_24 : i32 to vector<128x32xi32>
    %84 = arith.cmpi slt, %82, %83 : vector<128x32xi32>
    %85 = arith.andi %80, %84 : vector<128x32xi1>
    %cst_25 = arith.constant 0.000000e+00 : f32
    %86 = vector.broadcast %cst_25 : f32 to vector<128x32xf32>
    %87 = arith.select %85, %76, %86 : vector<128x32xi1>, vector<128x32xf32>
    %88 = arith.addf %24, %87 : vector<128x32xf32>
    %c6_i32 = arith.constant 6 : i32
    %89 = tpu.dynamic_rotate %20 by %c6_i32 dim 0 : vector<128x53xf32>, i32 -> vector<128x53xf32>
    %90 = vector.extract_strided_slice %89 {offsets = [0, 19], sizes = [128, 32], strides = [1, 1]} : vector<128x53xf32> to vector<128x32xf32>
    %91 = vector.extract_strided_slice %89 {offsets = [0, 2], sizes = [128, 32], strides = [1, 1]} : vector<128x53xf32> to vector<128x32xf32>
    %92 = arith.subf %90, %91 : vector<128x32xf32>
    %c-6_i32 = arith.constant -6 : i32
    %93 = vector.broadcast %c-6_i32 : i32 to vector<128x32xi32>
    %94 = arith.addi %9, %93 : vector<128x32xi32>
    %c0_i32_26 = arith.constant 0 : i32
    %95 = vector.broadcast %c0_i32_26 : i32 to vector<128x32xi32>
    %96 = arith.cmpi sge, %94, %95 : vector<128x32xi32>
    %c-6_i32_27 = arith.constant -6 : i32
    %97 = vector.broadcast %c-6_i32_27 : i32 to vector<128x32xi32>
    %98 = arith.addi %9, %97 : vector<128x32xi32>
    %c32_i32_28 = arith.constant 32 : i32
    %99 = vector.broadcast %c32_i32_28 : i32 to vector<128x32xi32>
    %100 = arith.cmpi slt, %98, %99 : vector<128x32xi32>
    %101 = arith.andi %96, %100 : vector<128x32xi1>
    %cst_29 = arith.constant 0.000000e+00 : f32
    %102 = vector.broadcast %cst_29 : f32 to vector<128x32xf32>
    %103 = arith.select %101, %92, %102 : vector<128x32xi1>, vector<128x32xf32>
    %104 = arith.addf %40, %103 : vector<128x32xf32>
    %c5_i32 = arith.constant 5 : i32
    %105 = tpu.dynamic_rotate %20 by %c5_i32 dim 0 : vector<128x53xf32>, i32 -> vector<128x53xf32>
    %106 = vector.extract_strided_slice %105 {offsets = [0, 19], sizes = [128, 32], strides = [1, 1]} : vector<128x53xf32> to vector<128x32xf32>
    %107 = vector.extract_strided_slice %105 {offsets = [0, 2], sizes = [128, 32], strides = [1, 1]} : vector<128x53xf32> to vector<128x32xf32>
    %108 = arith.subf %106, %107 : vector<128x32xf32>
    %c-5_i32 = arith.constant -5 : i32
    %109 = vector.broadcast %c-5_i32 : i32 to vector<128x32xi32>
    %110 = arith.addi %9, %109 : vector<128x32xi32>
    %c0_i32_30 = arith.constant 0 : i32
    %111 = vector.broadcast %c0_i32_30 : i32 to vector<128x32xi32>
    %112 = arith.cmpi sge, %110, %111 : vector<128x32xi32>
    %c-5_i32_31 = arith.constant -5 : i32
    %113 = vector.broadcast %c-5_i32_31 : i32 to vector<128x32xi32>
    %114 = arith.addi %9, %113 : vector<128x32xi32>
    %c32_i32_32 = arith.constant 32 : i32
    %115 = vector.broadcast %c32_i32_32 : i32 to vector<128x32xi32>
    %116 = arith.cmpi slt, %114, %115 : vector<128x32xi32>
    %117 = arith.andi %112, %116 : vector<128x32xi1>
    %cst_33 = arith.constant 0.000000e+00 : f32
    %118 = vector.broadcast %cst_33 : f32 to vector<128x32xf32>
    %119 = arith.select %117, %108, %118 : vector<128x32xi1>, vector<128x32xf32>
    %120 = arith.addf %56, %119 : vector<128x32xf32>
    %c4_i32 = arith.constant 4 : i32
    %121 = tpu.dynamic_rotate %20 by %c4_i32 dim 0 : vector<128x53xf32>, i32 -> vector<128x53xf32>
    %122 = vector.extract_strided_slice %121 {offsets = [0, 20], sizes = [128, 32], strides = [1, 1]} : vector<128x53xf32> to vector<128x32xf32>
    %123 = vector.extract_strided_slice %121 {offsets = [0, 1], sizes = [128, 32], strides = [1, 1]} : vector<128x53xf32> to vector<128x32xf32>
    %124 = arith.subf %122, %123 : vector<128x32xf32>
    %c-4_i32 = arith.constant -4 : i32
    %125 = vector.broadcast %c-4_i32 : i32 to vector<128x32xi32>
    %126 = arith.addi %9, %125 : vector<128x32xi32>
    %c0_i32_34 = arith.constant 0 : i32
    %127 = vector.broadcast %c0_i32_34 : i32 to vector<128x32xi32>
    %128 = arith.cmpi sge, %126, %127 : vector<128x32xi32>
    %c-4_i32_35 = arith.constant -4 : i32
    %129 = vector.broadcast %c-4_i32_35 : i32 to vector<128x32xi32>
    %130 = arith.addi %9, %129 : vector<128x32xi32>
    %c32_i32_36 = arith.constant 32 : i32
    %131 = vector.broadcast %c32_i32_36 : i32 to vector<128x32xi32>
    %132 = arith.cmpi slt, %130, %131 : vector<128x32xi32>
    %133 = arith.andi %128, %132 : vector<128x32xi1>
    %cst_37 = arith.constant 0.000000e+00 : f32
    %134 = vector.broadcast %cst_37 : f32 to vector<128x32xf32>
    %135 = arith.select %133, %124, %134 : vector<128x32xi1>, vector<128x32xf32>
    %136 = arith.addf %72, %135 : vector<128x32xf32>
    %c3_i32 = arith.constant 3 : i32
    %137 = tpu.dynamic_rotate %20 by %c3_i32 dim 0 : vector<128x53xf32>, i32 -> vector<128x53xf32>
    %138 = vector.extract_strided_slice %137 {offsets = [0, 20], sizes = [128, 32], strides = [1, 1]} : vector<128x53xf32> to vector<128x32xf32>
    %139 = vector.extract_strided_slice %137 {offsets = [0, 1], sizes = [128, 32], strides = [1, 1]} : vector<128x53xf32> to vector<128x32xf32>
    %140 = arith.subf %138, %139 : vector<128x32xf32>
    %c-3_i32 = arith.constant -3 : i32
    %141 = vector.broadcast %c-3_i32 : i32 to vector<128x32xi32>
    %142 = arith.addi %9, %141 : vector<128x32xi32>
    %c0_i32_38 = arith.constant 0 : i32
    %143 = vector.broadcast %c0_i32_38 : i32 to vector<128x32xi32>
    %144 = arith.cmpi sge, %142, %143 : vector<128x32xi32>
    %c-3_i32_39 = arith.constant -3 : i32
    %145 = vector.broadcast %c-3_i32_39 : i32 to vector<128x32xi32>
    %146 = arith.addi %9, %145 : vector<128x32xi32>
    %c32_i32_40 = arith.constant 32 : i32
    %147 = vector.broadcast %c32_i32_40 : i32 to vector<128x32xi32>
    %148 = arith.cmpi slt, %146, %147 : vector<128x32xi32>
    %149 = arith.andi %144, %148 : vector<128x32xi1>
    %cst_41 = arith.constant 0.000000e+00 : f32
    %150 = vector.broadcast %cst_41 : f32 to vector<128x32xf32>
    %151 = arith.select %149, %140, %150 : vector<128x32xi1>, vector<128x32xf32>
    %152 = arith.addf %88, %151 : vector<128x32xf32>
    %c2_i32 = arith.constant 2 : i32
    %153 = tpu.dynamic_rotate %20 by %c2_i32 dim 0 : vector<128x53xf32>, i32 -> vector<128x53xf32>
    %154 = vector.extract_strided_slice %153 {offsets = [0, 20], sizes = [128, 32], strides = [1, 1]} : vector<128x53xf32> to vector<128x32xf32>
    %155 = vector.extract_strided_slice %153 {offsets = [0, 1], sizes = [128, 32], strides = [1, 1]} : vector<128x53xf32> to vector<128x32xf32>
    %156 = arith.subf %154, %155 : vector<128x32xf32>
    %c-2_i32 = arith.constant -2 : i32
    %157 = vector.broadcast %c-2_i32 : i32 to vector<128x32xi32>
    %158 = arith.addi %9, %157 : vector<128x32xi32>
    %c0_i32_42 = arith.constant 0 : i32
    %159 = vector.broadcast %c0_i32_42 : i32 to vector<128x32xi32>
    %160 = arith.cmpi sge, %158, %159 : vector<128x32xi32>
    %c-2_i32_43 = arith.constant -2 : i32
    %161 = vector.broadcast %c-2_i32_43 : i32 to vector<128x32xi32>
    %162 = arith.addi %9, %161 : vector<128x32xi32>
    %c32_i32_44 = arith.constant 32 : i32
    %163 = vector.broadcast %c32_i32_44 : i32 to vector<128x32xi32>
    %164 = arith.cmpi slt, %162, %163 : vector<128x32xi32>
    %165 = arith.andi %160, %164 : vector<128x32xi1>
    %cst_45 = arith.constant 0.000000e+00 : f32
    %166 = vector.broadcast %cst_45 : f32 to vector<128x32xf32>
    %167 = arith.select %165, %156, %166 : vector<128x32xi1>, vector<128x32xf32>
    %168 = arith.addf %104, %167 : vector<128x32xf32>
    %c1_i32 = arith.constant 1 : i32
    %169 = tpu.dynamic_rotate %20 by %c1_i32 dim 0 : vector<128x53xf32>, i32 -> vector<128x53xf32>
    %170 = vector.extract_strided_slice %169 {offsets = [0, 20], sizes = [128, 32], strides = [1, 1]} : vector<128x53xf32> to vector<128x32xf32>
    %171 = vector.extract_strided_slice %169 {offsets = [0, 1], sizes = [128, 32], strides = [1, 1]} : vector<128x53xf32> to vector<128x32xf32>
    %172 = arith.subf %170, %171 : vector<128x32xf32>
    %c-1_i32 = arith.constant -1 : i32
    %173 = vector.broadcast %c-1_i32 : i32 to vector<128x32xi32>
    %174 = arith.addi %9, %173 : vector<128x32xi32>
    %c0_i32_46 = arith.constant 0 : i32
    %175 = vector.broadcast %c0_i32_46 : i32 to vector<128x32xi32>
    %176 = arith.cmpi sge, %174, %175 : vector<128x32xi32>
    %c-1_i32_47 = arith.constant -1 : i32
    %177 = vector.broadcast %c-1_i32_47 : i32 to vector<128x32xi32>
    %178 = arith.addi %9, %177 : vector<128x32xi32>
    %c32_i32_48 = arith.constant 32 : i32
    %179 = vector.broadcast %c32_i32_48 : i32 to vector<128x32xi32>
    %180 = arith.cmpi slt, %178, %179 : vector<128x32xi32>
    %181 = arith.andi %176, %180 : vector<128x32xi1>
    %cst_49 = arith.constant 0.000000e+00 : f32
    %182 = vector.broadcast %cst_49 : f32 to vector<128x32xf32>
    %183 = arith.select %181, %172, %182 : vector<128x32xi1>, vector<128x32xf32>
    %184 = arith.addf %120, %183 : vector<128x32xf32>
    %185 = vector.extract_strided_slice %20 {offsets = [0, 21], sizes = [128, 32], strides = [1, 1]} : vector<128x53xf32> to vector<128x32xf32>
    %186 = vector.extract_strided_slice %20 {offsets = [0, 0], sizes = [128, 32], strides = [1, 1]} : vector<128x53xf32> to vector<128x32xf32>
    %187 = arith.subf %185, %186 : vector<128x32xf32>
    %c0_i32_50 = arith.constant 0 : i32
    %188 = vector.broadcast %c0_i32_50 : i32 to vector<128x32xi32>
    %189 = arith.addi %9, %188 : vector<128x32xi32>
    %c0_i32_51 = arith.constant 0 : i32
    %190 = vector.broadcast %c0_i32_51 : i32 to vector<128x32xi32>
    %191 = arith.cmpi sge, %189, %190 : vector<128x32xi32>
    %c0_i32_52 = arith.constant 0 : i32
    %192 = vector.broadcast %c0_i32_52 : i32 to vector<128x32xi32>
    %193 = arith.addi %9, %192 : vector<128x32xi32>
    %c32_i32_53 = arith.constant 32 : i32
    %194 = vector.broadcast %c32_i32_53 : i32 to vector<128x32xi32>
    %195 = arith.cmpi slt, %193, %194 : vector<128x32xi32>
    %196 = arith.andi %191, %195 : vector<128x32xi1>
    %cst_54 = arith.constant 0.000000e+00 : f32
    %197 = vector.broadcast %cst_54 : f32 to vector<128x32xf32>
    %198 = arith.select %196, %187, %197 : vector<128x32xi1>, vector<128x32xf32>
    %199 = arith.addf %136, %198 : vector<128x32xf32>
    %c127_i32 = arith.constant 127 : i32
    %200 = tpu.dynamic_rotate %20 by %c127_i32 dim 0 : vector<128x53xf32>, i32 -> vector<128x53xf32>
    %201 = vector.extract_strided_slice %200 {offsets = [0, 20], sizes = [128, 32], strides = [1, 1]} : vector<128x53xf32> to vector<128x32xf32>
    %202 = vector.extract_strided_slice %200 {offsets = [0, 1], sizes = [128, 32], strides = [1, 1]} : vector<128x53xf32> to vector<128x32xf32>
    %203 = arith.subf %201, %202 : vector<128x32xf32>
    %c1_i32_55 = arith.constant 1 : i32
    %204 = vector.broadcast %c1_i32_55 : i32 to vector<128x32xi32>
    %205 = arith.addi %9, %204 : vector<128x32xi32>
    %c0_i32_56 = arith.constant 0 : i32
    %206 = vector.broadcast %c0_i32_56 : i32 to vector<128x32xi32>
    %207 = arith.cmpi sge, %205, %206 : vector<128x32xi32>
    %c1_i32_57 = arith.constant 1 : i32
    %208 = vector.broadcast %c1_i32_57 : i32 to vector<128x32xi32>
    %209 = arith.addi %9, %208 : vector<128x32xi32>
    %c32_i32_58 = arith.constant 32 : i32
    %210 = vector.broadcast %c32_i32_58 : i32 to vector<128x32xi32>
    %211 = arith.cmpi slt, %209, %210 : vector<128x32xi32>
    %212 = arith.andi %207, %211 : vector<128x32xi1>
    %cst_59 = arith.constant 0.000000e+00 : f32
    %213 = vector.broadcast %cst_59 : f32 to vector<128x32xf32>
    %214 = arith.select %212, %203, %213 : vector<128x32xi1>, vector<128x32xf32>
    %215 = arith.addf %152, %214 : vector<128x32xf32>
    %c126_i32 = arith.constant 126 : i32
    %216 = tpu.dynamic_rotate %20 by %c126_i32 dim 0 : vector<128x53xf32>, i32 -> vector<128x53xf32>
    %217 = vector.extract_strided_slice %216 {offsets = [0, 20], sizes = [128, 32], strides = [1, 1]} : vector<128x53xf32> to vector<128x32xf32>
    %218 = vector.extract_strided_slice %216 {offsets = [0, 1], sizes = [128, 32], strides = [1, 1]} : vector<128x53xf32> to vector<128x32xf32>
    %219 = arith.subf %217, %218 : vector<128x32xf32>
    %c2_i32_60 = arith.constant 2 : i32
    %220 = vector.broadcast %c2_i32_60 : i32 to vector<128x32xi32>
    %221 = arith.addi %9, %220 : vector<128x32xi32>
    %c0_i32_61 = arith.constant 0 : i32
    %222 = vector.broadcast %c0_i32_61 : i32 to vector<128x32xi32>
    %223 = arith.cmpi sge, %221, %222 : vector<128x32xi32>
    %c2_i32_62 = arith.constant 2 : i32
    %224 = vector.broadcast %c2_i32_62 : i32 to vector<128x32xi32>
    %225 = arith.addi %9, %224 : vector<128x32xi32>
    %c32_i32_63 = arith.constant 32 : i32
    %226 = vector.broadcast %c32_i32_63 : i32 to vector<128x32xi32>
    %227 = arith.cmpi slt, %225, %226 : vector<128x32xi32>
    %228 = arith.andi %223, %227 : vector<128x32xi1>
    %cst_64 = arith.constant 0.000000e+00 : f32
    %229 = vector.broadcast %cst_64 : f32 to vector<128x32xf32>
    %230 = arith.select %228, %219, %229 : vector<128x32xi1>, vector<128x32xf32>
    %231 = arith.addf %168, %230 : vector<128x32xf32>
    %c125_i32 = arith.constant 125 : i32
    %232 = tpu.dynamic_rotate %20 by %c125_i32 dim 0 : vector<128x53xf32>, i32 -> vector<128x53xf32>
    %233 = vector.extract_strided_slice %232 {offsets = [0, 20], sizes = [128, 32], strides = [1, 1]} : vector<128x53xf32> to vector<128x32xf32>
    %234 = vector.extract_strided_slice %232 {offsets = [0, 1], sizes = [128, 32], strides = [1, 1]} : vector<128x53xf32> to vector<128x32xf32>
    %235 = arith.subf %233, %234 : vector<128x32xf32>
    %c3_i32_65 = arith.constant 3 : i32
    %236 = vector.broadcast %c3_i32_65 : i32 to vector<128x32xi32>
    %237 = arith.addi %9, %236 : vector<128x32xi32>
    %c0_i32_66 = arith.constant 0 : i32
    %238 = vector.broadcast %c0_i32_66 : i32 to vector<128x32xi32>
    %239 = arith.cmpi sge, %237, %238 : vector<128x32xi32>
    %c3_i32_67 = arith.constant 3 : i32
    %240 = vector.broadcast %c3_i32_67 : i32 to vector<128x32xi32>
    %241 = arith.addi %9, %240 : vector<128x32xi32>
    %c32_i32_68 = arith.constant 32 : i32
    %242 = vector.broadcast %c32_i32_68 : i32 to vector<128x32xi32>
    %243 = arith.cmpi slt, %241, %242 : vector<128x32xi32>
    %244 = arith.andi %239, %243 : vector<128x32xi1>
    %cst_69 = arith.constant 0.000000e+00 : f32
    %245 = vector.broadcast %cst_69 : f32 to vector<128x32xf32>
    %246 = arith.select %244, %235, %245 : vector<128x32xi1>, vector<128x32xf32>
    %247 = arith.addf %184, %246 : vector<128x32xf32>
    %c124_i32 = arith.constant 124 : i32
    %248 = tpu.dynamic_rotate %20 by %c124_i32 dim 0 : vector<128x53xf32>, i32 -> vector<128x53xf32>
    %249 = vector.extract_strided_slice %248 {offsets = [0, 20], sizes = [128, 32], strides = [1, 1]} : vector<128x53xf32> to vector<128x32xf32>
    %250 = vector.extract_strided_slice %248 {offsets = [0, 1], sizes = [128, 32], strides = [1, 1]} : vector<128x53xf32> to vector<128x32xf32>
    %251 = arith.subf %249, %250 : vector<128x32xf32>
    %c4_i32_70 = arith.constant 4 : i32
    %252 = vector.broadcast %c4_i32_70 : i32 to vector<128x32xi32>
    %253 = arith.addi %9, %252 : vector<128x32xi32>
    %c0_i32_71 = arith.constant 0 : i32
    %254 = vector.broadcast %c0_i32_71 : i32 to vector<128x32xi32>
    %255 = arith.cmpi sge, %253, %254 : vector<128x32xi32>
    %c4_i32_72 = arith.constant 4 : i32
    %256 = vector.broadcast %c4_i32_72 : i32 to vector<128x32xi32>
    %257 = arith.addi %9, %256 : vector<128x32xi32>
    %c32_i32_73 = arith.constant 32 : i32
    %258 = vector.broadcast %c32_i32_73 : i32 to vector<128x32xi32>
    %259 = arith.cmpi slt, %257, %258 : vector<128x32xi32>
    %260 = arith.andi %255, %259 : vector<128x32xi1>
    %cst_74 = arith.constant 0.000000e+00 : f32
    %261 = vector.broadcast %cst_74 : f32 to vector<128x32xf32>
    %262 = arith.select %260, %251, %261 : vector<128x32xi1>, vector<128x32xf32>
    %263 = arith.addf %199, %262 : vector<128x32xf32>
    %c123_i32 = arith.constant 123 : i32
    %264 = tpu.dynamic_rotate %20 by %c123_i32 dim 0 : vector<128x53xf32>, i32 -> vector<128x53xf32>
    %265 = vector.extract_strided_slice %264 {offsets = [0, 19], sizes = [128, 32], strides = [1, 1]} : vector<128x53xf32> to vector<128x32xf32>
    %266 = vector.extract_strided_slice %264 {offsets = [0, 2], sizes = [128, 32], strides = [1, 1]} : vector<128x53xf32> to vector<128x32xf32>
    %267 = arith.subf %265, %266 : vector<128x32xf32>
    %c5_i32_75 = arith.constant 5 : i32
    %268 = vector.broadcast %c5_i32_75 : i32 to vector<128x32xi32>
    %269 = arith.addi %9, %268 : vector<128x32xi32>
    %c0_i32_76 = arith.constant 0 : i32
    %270 = vector.broadcast %c0_i32_76 : i32 to vector<128x32xi32>
    %271 = arith.cmpi sge, %269, %270 : vector<128x32xi32>
    %c5_i32_77 = arith.constant 5 : i32
    %272 = vector.broadcast %c5_i32_77 : i32 to vector<128x32xi32>
    %273 = arith.addi %9, %272 : vector<128x32xi32>
    %c32_i32_78 = arith.constant 32 : i32
    %274 = vector.broadcast %c32_i32_78 : i32 to vector<128x32xi32>
    %275 = arith.cmpi slt, %273, %274 : vector<128x32xi32>
    %276 = arith.andi %271, %275 : vector<128x32xi1>
    %cst_79 = arith.constant 0.000000e+00 : f32
    %277 = vector.broadcast %cst_79 : f32 to vector<128x32xf32>
    %278 = arith.select %276, %267, %277 : vector<128x32xi1>, vector<128x32xf32>
    %279 = arith.addf %215, %278 : vector<128x32xf32>
    %c122_i32 = arith.constant 122 : i32
    %280 = tpu.dynamic_rotate %20 by %c122_i32 dim 0 : vector<128x53xf32>, i32 -> vector<128x53xf32>
    %281 = vector.extract_strided_slice %280 {offsets = [0, 19], sizes = [128, 32], strides = [1, 1]} : vector<128x53xf32> to vector<128x32xf32>
    %282 = vector.extract_strided_slice %280 {offsets = [0, 2], sizes = [128, 32], strides = [1, 1]} : vector<128x53xf32> to vector<128x32xf32>
    %283 = arith.subf %281, %282 : vector<128x32xf32>
    %c6_i32_80 = arith.constant 6 : i32
    %284 = vector.broadcast %c6_i32_80 : i32 to vector<128x32xi32>
    %285 = arith.addi %9, %284 : vector<128x32xi32>
    %c0_i32_81 = arith.constant 0 : i32
    %286 = vector.broadcast %c0_i32_81 : i32 to vector<128x32xi32>
    %287 = arith.cmpi sge, %285, %286 : vector<128x32xi32>
    %c6_i32_82 = arith.constant 6 : i32
    %288 = vector.broadcast %c6_i32_82 : i32 to vector<128x32xi32>
    %289 = arith.addi %9, %288 : vector<128x32xi32>
    %c32_i32_83 = arith.constant 32 : i32
    %290 = vector.broadcast %c32_i32_83 : i32 to vector<128x32xi32>
    %291 = arith.cmpi slt, %289, %290 : vector<128x32xi32>
    %292 = arith.andi %287, %291 : vector<128x32xi1>
    %cst_84 = arith.constant 0.000000e+00 : f32
    %293 = vector.broadcast %cst_84 : f32 to vector<128x32xf32>
    %294 = arith.select %292, %283, %293 : vector<128x32xi1>, vector<128x32xf32>
    %295 = arith.addf %231, %294 : vector<128x32xf32>
    %c121_i32 = arith.constant 121 : i32
    %296 = tpu.dynamic_rotate %20 by %c121_i32 dim 0 : vector<128x53xf32>, i32 -> vector<128x53xf32>
    %297 = vector.extract_strided_slice %296 {offsets = [0, 18], sizes = [128, 32], strides = [1, 1]} : vector<128x53xf32> to vector<128x32xf32>
    %298 = vector.extract_strided_slice %296 {offsets = [0, 3], sizes = [128, 32], strides = [1, 1]} : vector<128x53xf32> to vector<128x32xf32>
    %299 = arith.subf %297, %298 : vector<128x32xf32>
    %c7_i32_85 = arith.constant 7 : i32
    %300 = vector.broadcast %c7_i32_85 : i32 to vector<128x32xi32>
    %301 = arith.addi %9, %300 : vector<128x32xi32>
    %c0_i32_86 = arith.constant 0 : i32
    %302 = vector.broadcast %c0_i32_86 : i32 to vector<128x32xi32>
    %303 = arith.cmpi sge, %301, %302 : vector<128x32xi32>
    %c7_i32_87 = arith.constant 7 : i32
    %304 = vector.broadcast %c7_i32_87 : i32 to vector<128x32xi32>
    %305 = arith.addi %9, %304 : vector<128x32xi32>
    %c32_i32_88 = arith.constant 32 : i32
    %306 = vector.broadcast %c32_i32_88 : i32 to vector<128x32xi32>
    %307 = arith.cmpi slt, %305, %306 : vector<128x32xi32>
    %308 = arith.andi %303, %307 : vector<128x32xi1>
    %cst_89 = arith.constant 0.000000e+00 : f32
    %309 = vector.broadcast %cst_89 : f32 to vector<128x32xf32>
    %310 = arith.select %308, %299, %309 : vector<128x32xi1>, vector<128x32xf32>
    %311 = arith.addf %247, %310 : vector<128x32xf32>
    %c120_i32 = arith.constant 120 : i32
    %312 = tpu.dynamic_rotate %20 by %c120_i32 dim 0 : vector<128x53xf32>, i32 -> vector<128x53xf32>
    %313 = vector.extract_strided_slice %312 {offsets = [0, 17], sizes = [128, 32], strides = [1, 1]} : vector<128x53xf32> to vector<128x32xf32>
    %314 = vector.extract_strided_slice %312 {offsets = [0, 4], sizes = [128, 32], strides = [1, 1]} : vector<128x53xf32> to vector<128x32xf32>
    %315 = arith.subf %313, %314 : vector<128x32xf32>
    %c8_i32_90 = arith.constant 8 : i32
    %316 = vector.broadcast %c8_i32_90 : i32 to vector<128x32xi32>
    %317 = arith.addi %9, %316 : vector<128x32xi32>
    %c0_i32_91 = arith.constant 0 : i32
    %318 = vector.broadcast %c0_i32_91 : i32 to vector<128x32xi32>
    %319 = arith.cmpi sge, %317, %318 : vector<128x32xi32>
    %c8_i32_92 = arith.constant 8 : i32
    %320 = vector.broadcast %c8_i32_92 : i32 to vector<128x32xi32>
    %321 = arith.addi %9, %320 : vector<128x32xi32>
    %c32_i32_93 = arith.constant 32 : i32
    %322 = vector.broadcast %c32_i32_93 : i32 to vector<128x32xi32>
    %323 = arith.cmpi slt, %321, %322 : vector<128x32xi32>
    %324 = arith.andi %319, %323 : vector<128x32xi1>
    %cst_94 = arith.constant 0.000000e+00 : f32
    %325 = vector.broadcast %cst_94 : f32 to vector<128x32xf32>
    %326 = arith.select %324, %315, %325 : vector<128x32xi1>, vector<128x32xf32>
    %327 = arith.addf %263, %326 : vector<128x32xf32>
    %c119_i32 = arith.constant 119 : i32
    %328 = tpu.dynamic_rotate %20 by %c119_i32 dim 0 : vector<128x53xf32>, i32 -> vector<128x53xf32>
    %329 = vector.extract_strided_slice %328 {offsets = [0, 15], sizes = [128, 32], strides = [1, 1]} : vector<128x53xf32> to vector<128x32xf32>
    %330 = vector.extract_strided_slice %328 {offsets = [0, 6], sizes = [128, 32], strides = [1, 1]} : vector<128x53xf32> to vector<128x32xf32>
    %331 = arith.subf %329, %330 : vector<128x32xf32>
    %c9_i32_95 = arith.constant 9 : i32
    %332 = vector.broadcast %c9_i32_95 : i32 to vector<128x32xi32>
    %333 = arith.addi %9, %332 : vector<128x32xi32>
    %c0_i32_96 = arith.constant 0 : i32
    %334 = vector.broadcast %c0_i32_96 : i32 to vector<128x32xi32>
    %335 = arith.cmpi sge, %333, %334 : vector<128x32xi32>
    %c9_i32_97 = arith.constant 9 : i32
    %336 = vector.broadcast %c9_i32_97 : i32 to vector<128x32xi32>
    %337 = arith.addi %9, %336 : vector<128x32xi32>
    %c32_i32_98 = arith.constant 32 : i32
    %338 = vector.broadcast %c32_i32_98 : i32 to vector<128x32xi32>
    %339 = arith.cmpi slt, %337, %338 : vector<128x32xi32>
    %340 = arith.andi %335, %339 : vector<128x32xi1>
    %cst_99 = arith.constant 0.000000e+00 : f32
    %341 = vector.broadcast %cst_99 : f32 to vector<128x32xf32>
    %342 = arith.select %340, %331, %341 : vector<128x32xi1>, vector<128x32xf32>
    %343 = arith.addf %279, %342 : vector<128x32xf32>
    %c118_i32 = arith.constant 118 : i32
    %344 = tpu.dynamic_rotate %20 by %c118_i32 dim 0 : vector<128x53xf32>, i32 -> vector<128x53xf32>
    %345 = vector.extract_strided_slice %344 {offsets = [0, 11], sizes = [128, 32], strides = [1, 1]} : vector<128x53xf32> to vector<128x32xf32>
    %346 = vector.extract_strided_slice %344 {offsets = [0, 10], sizes = [128, 32], strides = [1, 1]} : vector<128x53xf32> to vector<128x32xf32>
    %347 = arith.subf %345, %346 : vector<128x32xf32>
    %c10_i32_100 = arith.constant 10 : i32
    %348 = vector.broadcast %c10_i32_100 : i32 to vector<128x32xi32>
    %349 = arith.addi %9, %348 : vector<128x32xi32>
    %c0_i32_101 = arith.constant 0 : i32
    %350 = vector.broadcast %c0_i32_101 : i32 to vector<128x32xi32>
    %351 = arith.cmpi sge, %349, %350 : vector<128x32xi32>
    %c10_i32_102 = arith.constant 10 : i32
    %352 = vector.broadcast %c10_i32_102 : i32 to vector<128x32xi32>
    %353 = arith.addi %9, %352 : vector<128x32xi32>
    %c32_i32_103 = arith.constant 32 : i32
    %354 = vector.broadcast %c32_i32_103 : i32 to vector<128x32xi32>
    %355 = arith.cmpi slt, %353, %354 : vector<128x32xi32>
    %356 = arith.andi %351, %355 : vector<128x32xi1>
    %cst_104 = arith.constant 0.000000e+00 : f32
    %357 = vector.broadcast %cst_104 : f32 to vector<128x32xf32>
    %358 = arith.select %356, %347, %357 : vector<128x32xi1>, vector<128x32xf32>
    %359 = arith.addf %295, %358 : vector<128x32xf32>
    %360 = arith.addf %359, %311 : vector<128x32xf32>
    %361 = arith.addf %327, %343 : vector<128x32xf32>
    %362 = arith.addf %360, %361 : vector<128x32xf32>
    %cst_105 = arith.constant 0.000000e+00 : f32
    %cst_106 = arith.constant 1.000000e+00 : f32
    %363 = vector.broadcast %cst_105 : f32 to vector<128x32xf32>
    %364 = arith.maximumf %363, %362 : vector<128x32xf32>
    %365 = vector.broadcast %cst_106 : f32 to vector<128x32xf32>
    %366 = arith.minimumf %365, %364 : vector<128x32xf32>
    %cst_107 = arith.constant 1.000000e+00 : f32
    %367 = vector.broadcast %cst_107 : f32 to vector<128x32xf32>
    %368 = arith.subf %367, %366 : vector<128x32xf32>
    %369 = tpu.iota {dimensions = array<i32: 0>} : vector<32x32xi32>
    %370 = tpu.iota {dimensions = array<i32: 1>} : vector<32x32xi32>
    %371 = arith.subi %369, %370 : vector<32x32xi32>
    %372 = math.absi %371 : vector<32x32xi32>
    %c1_i32_108 = arith.constant 1 : i32
    %373 = vector.broadcast %c1_i32_108 : i32 to vector<32x32xi32>
    %374 = arith.cmpi sle, %372, %373 : vector<32x32xi32>
    %cst_109 = arith.constant 1.000000e+00 : f32
    %cst_110 = arith.constant 0.000000e+00 : f32
    %375 = vector.broadcast %cst_109 : f32 to vector<32x32xf32>
    %376 = vector.broadcast %cst_110 : f32 to vector<32x32xf32>
    %377 = arith.select %374, %375, %376 : vector<32x32xi1>, vector<32x32xf32>
    %378 = arith.truncf %377 : vector<32x32xf32> to vector<32x32xbf16>
    %379 = arith.truncf %368 : vector<128x32xf32> to vector<128x32xbf16>
    %cst_111 = arith.constant dense<0.000000e+00> : vector<128x32xf32>
    %380 = tpu.matmul %379, %378, %cst_111 {dimension_numbers = #tpu.dot_dimension_numbers<[1], [0], [0], [1], [0, 0, 1, 1], [], []>} : vector<128x32xbf16>, vector<32x32xbf16>, vector<128x32xf32> -> vector<128x32xf32>
    %c31_i32 = arith.constant 31 : i32
    %381 = vector.broadcast %c31_i32 : i32 to vector<128x32xi32>
    %382 = arith.cmpi eq, %9, %381 : vector<128x32xi32>
    %c127_i32_112 = arith.constant 127 : i32
    %383 = tpu.dynamic_rotate %368 by %c127_i32_112 dim 0 : vector<128x32xf32>, i32 -> vector<128x32xf32>
    %cst_113 = arith.constant 0.000000e+00 : f32
    %384 = vector.broadcast %cst_113 : f32 to vector<128x32xf32>
    %385 = arith.select %382, %384, %383 : vector<128x32xi1>, vector<128x32xf32>
    %c0_i32_114 = arith.constant 0 : i32
    %386 = vector.broadcast %c0_i32_114 : i32 to vector<128x32xi32>
    %387 = arith.cmpi eq, %9, %386 : vector<128x32xi32>
    %c1_i32_115 = arith.constant 1 : i32
    %388 = tpu.dynamic_rotate %368 by %c1_i32_115 dim 0 : vector<128x32xf32>, i32 -> vector<128x32xf32>
    %cst_116 = arith.constant 0.000000e+00 : f32
    %389 = vector.broadcast %cst_116 : f32 to vector<128x32xf32>
    %390 = arith.select %387, %389, %388 : vector<128x32xi1>, vector<128x32xf32>
    %391 = arith.addf %380, %385 : vector<128x32xf32>
    %392 = arith.addf %391, %390 : vector<128x32xf32>
    %cst_117 = arith.constant 0.000000e+00 : f32
    %cst_118 = arith.constant 1.000000e+00 : f32
    %393 = vector.broadcast %cst_117 : f32 to vector<128x32xf32>
    %394 = arith.maximumf %393, %392 : vector<128x32xf32>
    %395 = vector.broadcast %cst_118 : f32 to vector<128x32xf32>
    %396 = arith.minimumf %395, %394 : vector<128x32xf32>
    %397 = arith.subf %396, %368 : vector<128x32xf32>
    %c0_119 = arith.constant 0 : index
    %c0_120 = arith.constant 0 : index
    %398 = vector.load %arg2[%c0_119, %c0_120] : memref<128x32xf32, #tpu.memory_space<vmem>>, vector<128x32xf32>
    tpu.vector_store %arg2[%c0_119, %c0_120], %397 {strides = array<i32>} : memref<128x32xf32, #tpu.memory_space<vmem>>, vector<128x32xf32>,
    return
  }
  func.func @transform_0(%arg0: i32) -> (i32, i32, i32, i32) {
    %c1_i32 = arith.constant 1 : i32
    %c0_i32 = arith.constant 0 : i32
    %c0_i32_0 = arith.constant 0 : i32
    %c0_i32_1 = arith.constant 0 : i32
    return %arg0, %c1_i32, %c0_i32, %c0_i32_0 : i32, i32, i32, i32
  }
  func.func @transform_1(%arg0: i32) -> (i32, i32) {
    %c0_i32 = arith.constant 0 : i32
    %c0_i32_0 = arith.constant 0 : i32
    return %arg0, %c0_i32 : i32, i32
  }
}

</mosaic_0001>

<llo_original>
// kernel: tpu_custom_call.1
$region0: #{tpu_custom_call.1}
  #allocation0 [shape = 'u32[]', space=smem, size = 0x4, offset = 0x4, fixed_abs, tag = 'smem constant byte address 0x4 - core index']
  #allocation1 [shape = 'u32[144,128]{1,0:T(1,128)}', space=vmem, size = 0x12000, scoped, tag = 'internal scratch']
  #allocation4 [shape = 's32[]', space=sflag, size = 0x4, offset = 0, fixed_abs, tag = 'sflag constant byte address 0x0 - dummy sync flag']
  %s0 = inlined_call_operand.hbm [shape: f32[8,8,32,32], index: 0, kind: input, shape index: {}]
  %s1 = inlined_call_operand.vmem [shape: f32[256,32], index: 1, kind: output, shape index: {}]
  %s2 = sld [smem:[#allocation0]]
  $region41: #{tpu_custom_call.1} parent=0
    _
  %s4 = ssub.s32 1, %s2
  %s5 = scalar_select 0, %s4, %s2
  $region1: #{tpu_custom_call.1} parent=0
    #allocation2 [shape = 'u8[131072]{0}', space=vmem, size = 0x20000, scoped, tag = 'input window, operand 0']
    #allocation3 [shape = 's32[2]{0}', space=sflag, size = 0x8, scoped, tag = 'scoped memory for tpu_custom_call.1']
    %6 = vsyncpa [#allocation3], 0
    %s7 = scalar_lea.sflag [#allocation3], 1
    %8 = vsyncpa %s7, 0
    loop: start=0, step=1, limit=4
    $region2: #{tpu_custom_call.1} parent=1 // loop_pre_header
      _
    $region3: #{tpu_custom_call.1} parent=1 // loop_header
      %s10 = sphi 0, %s14
      %p11 = scmp.ge.s32.totalorder %s10, 4
      %s20 = sphi 0, %s22
      %s23 = sphi 0, %s20
      %s24 = sphi 0, %s23
      %s40 = sphi 0, %s24
      %s46 = sphi 0, %s48
      %s49 = sphi 0, %s46
      %s50 = sphi 0, %s49
      %s66 = sphi 0, %s50
    $region4: #{tpu_custom_call.1} parent=1 // loop_header_branch
      %13 = sbr.rel (%p11) target = $region8
    $region5: #{tpu_custom_call.1} parent=1 // loop_body
      %s15 = ssub.s32 %s10, 1
      %s16 = ssub.s32 %s10, 2
      %s17 = sadd.s32 %s10, 1
      %s18 = ssub.s32 %s10, %s17
      %p19 = scmp.eq.s32.totalorder %s18, 0
      %s21 = sadd.s32 %s20, 1
      %s22 = scalar_select %p19, %s20, %s21
      %p25 = pneg %p19
      %p26 = scmp.eq.s32.totalorder %s10, 1
      %p27 = por %p25, %p26
      %p28 = scmp.ne.s32.totalorder %s20, %s23
      %p29 = scmp.eq.s32.totalorder %s10, 0
      %p30 = por %p28, %p29
      %p31 = scmp.ne.s32.totalorder %s20, %s23
      %p32 = scmp.eq.s32.totalorder %s15, 1
      %p33 = por %p31, %p32
      %p34 = scmp.ne.s32.totalorder %s23, %s24
      %p35 = scmp.eq.s32.totalorder %s15, 0
      %p36 = por %p34, %p35
      %p37 = scmp.ne.s32.totalorder %s23, %s24
      %p38 = scmp.eq.s32.totalorder %s16, 1
      %p39 = por %p37, %p38
      %p41 = scmp.ne.s32.totalorder %s24, %s40
      %p42 = scmp.eq.s32.totalorder %s16, 0
      %p43 = por %p41, %p42
      %s44 = ssub.s32 %s10, %s17
      %p45 = scmp.eq.s32.totalorder %s44, 0
      %s47 = sadd.s32 %s46, 1
      %s48 = scalar_select %p45, %s46, %s47
      %p51 = pneg %p45
      %p52 = scmp.eq.s32.totalorder %s10, 1
      %p53 = por %p51, %p52
      %p54 = scmp.ne.s32.totalorder %s46, %s49
      %p55 = scmp.eq.s32.totalorder %s10, 0
      %p56 = por %p54, %p55
      %p57 = scmp.ne.s32.totalorder %s46, %s49
      %p58 = scmp.eq.s32.totalorder %s15, 1
      %p59 = por %p57, %p58
      %p60 = scmp.ne.s32.totalorder %s49, %s50
      %p61 = scmp.eq.s32.totalorder %s15, 0
      %p62 = por %p60, %p61
      %p63 = scmp.ne.s32.totalorder %s49, %s50
      %p64 = scmp.eq.s32.totalorder %s16, 1
      %p65 = por %p63, %p64
      %p67 = scmp.ne.s32.totalorder %s50, %s66
      %p68 = scmp.eq.s32.totalorder %s16, 0
      %p69 = por %p67, %p68
      %p70 = scmp.le.s32.totalorder 1, %s10
      %p71 = scmp.lt.s32.totalorder %s10, 3
      %p72 = pnand %p70, %p71
      %p73 = pneg %p72
      // Predicated region
      $region9: #{tpu_custom_call.1} parent=5 // pred_check
        _
      $region10: #{tpu_custom_call.1} parent=5 // pred_check_branch
        %75 = sbr.rel (%p72) target = $region12
      $region11: #{tpu_custom_call.1} parent=5 // pred_region
        %s76 = ssub.s32 %s10, 1
      $region12: #{tpu_custom_call.1} parent=5 // pred_fallthru
        _
      %p77 = scmp.lt.s32.totalorder %s10, 2
      // Predicated region
      $region13: #{tpu_custom_call.1} parent=5 // pred_check
        %p78 = pneg %p77
      $region14: #{tpu_custom_call.1} parent=5 // pred_check_branch
        %80 = sbr.rel (%p78) target = $region16
      $region15: #{tpu_custom_call.1} parent=5 // pred_region
        // Predicated region
        $region17: #{tpu_custom_call.1} parent=15 // pred_check
          %p81 = pneg %p30
        $region18: #{tpu_custom_call.1} parent=15 // pred_check_branch
          %83 = sbr.rel (%p81) target = $region20
        $region19: #{tpu_custom_call.1} parent=15 // pred_region
          #allocation5 [shape = 'u32[6]{0}', space=smem, size = 0x18, scoped, tag = 'DMA stride descriptor']
          %s84 = sand.u32 %s20, 1
          %s85 = scalar_lea.sflag [#allocation3], %s84
          %s86 = sand.u32 %s20, 1
          %s87 = smul.addr %s86, 128
          %s88 = scalar_lea.vmem [#allocation2], %s87
          %s89 = smul.u32 4, %s10
          %s91 = ssub.s32 2048, 2048
          %92 = vsyncadd %s85, %s91
          %s93 = smul.addr %s89, 32
          %s94 = sadd.s32 4, %s93
          %s95 = smul.addr %s94, 128
          %s96 = scalar_lea.hbm %s0, %s95
          %s98 = sshll.u32 1, 14
          %s99 = sxor.u32 4294967295, %s98
          %s101 = sld [smem:[#allocation0]]
          %s102 = sadd.s32 2, %s101
          %s104 = sshll.u32 7, 26
          %s105 = sxor.u32 4294967295, %s104
          %s106 = sand.u32 0, %s105
          %s107 = sshll.u32 %s102, 26
          %s108 = sor.u32 %s106, %s107
          %s109 = sshll.u32 %s88, 4
          %s110 = int_to_ptr.vmem [resolvable:$true] %s109
          %116 = sst [smem:[#allocation5]] 4096
          %s117 = scalar_lea.smem [#allocation5], 1
          %118 = sst [smem:[%s117]] 512
          %s119 = scalar_lea.smem [#allocation5], 2
          %120 = sst [smem:[%s119]] 4
          %s121 = scalar_lea.smem [#allocation5], 3
          %122 = sst [smem:[%s121]] 128
          %s123 = scalar_lea.smem [#allocation5], 4
          %124 = sst [smem:[%s123]] 128
          %s125 = scalar_lea.smem [#allocation5], 5
          %126 = sst [smem:[%s125]] 8
          %128 = dma.general %s96, 2048, %s110, %s85, [#allocation4], [#allocation5], %s108, 0
        $region20: #{tpu_custom_call.1} parent=15 // pred_fallthru
          _
      $region16: #{tpu_custom_call.1} parent=5 // pred_fallthru
        _
      %p129 = scmp.le.s32.totalorder 1, %s10
      %p130 = scmp.lt.s32.totalorder %s10, 3
      %p131 = pnand %p129, %p130
      %p132 = pneg %p131
      // Predicated region
      $region21: #{tpu_custom_call.1} parent=5 // pred_check
        _
      $region22: #{tpu_custom_call.1} parent=5 // pred_check_branch
        %134 = sbr.rel (%p131) target = $region24
      $region23: #{tpu_custom_call.1} parent=5 // pred_region
        %s135 = ssub.s32 %s10, 1
        %s136 = sand.u32 %s23, 1
        %s137 = scalar_lea.sflag [#allocation3], %s136
        %s138 = sand.u32 %s23, 1
        %s139 = smul.addr %s138, 128
        %s140 = scalar_lea.vmem [#allocation2], %s139
        // Predicated region
        $region25: #{tpu_custom_call.1} parent=23 // pred_check
          %p141 = pneg %p36
        $region26: #{tpu_custom_call.1} parent=23 // pred_check_branch
          %143 = sbr.rel (%p141) target = $region28
        $region27: #{tpu_custom_call.1} parent=23 // pred_region
          %144 = dma.done %s137, 2048
        $region28: #{tpu_custom_call.1} parent=23 // pred_fallthru
          _
        %s145 = sand.u32 %s23, 1
        %s146 = scalar_lea.sflag [#allocation3], %s145
        %s147 = sand.u32 %s23, 1
        %s148 = smul.addr %s147, 128
        %s149 = scalar_lea.vmem [#allocation2], %s148
        %p150 = pneg %p36
        %p151 = pneg %p33
        %p152 = pneg %p62
        %p153 = pneg %p59
        %s154 = smul.u32 16, %s15
        %p155 = scmp.lt.s32.totalorder %s154, 31
        %s156 = scalar_select %p155, %s154, 31
        %s157 = smul.addr %s156, 8
        %s158 = scalar_lea.vmem %s1, %s157
        %s159 = smul.u32 4, %s15
        %s160 = smul.u32 16, %s15
        %p161 = scmp.lt.s32.totalorder %s160, 31
        %s162 = scalar_select %p161, %s160, 31
        %s163 = smul.addr %s162, 8
        %s164 = scalar_lea.vmem %s1, %s163
        %s165 = smul.u32 16, %s15
        %v167 = vld [vmem:[%s140] sm:$0xff]
        %v168 = vld [vmem:[%s140 + $0x8] sm:$0xff]
        %v169 = vld [vmem:[%s140 + $0x10] sm:$0xff]
        %v170 = vld [vmem:[%s140 + $0x18] sm:$0xff]
        %v171 = vld [vmem:[%s140 + $0x20] sm:$0xff]
        %v172 = vld [vmem:[%s140 + $0x28] sm:$0xff]
        %v173 = vld [vmem:[%s140 + $0x30] sm:$0xff]
        %v174 = vld [vmem:[%s140 + $0x38] sm:$0xff]
        %v175 = vld [vmem:[%s140 + $0x40] sm:$0xff]
        %v176 = vld [vmem:[%s140 + $0x48] sm:$0xff]
        %v177 = vld [vmem:[%s140 + $0x50] sm:$0xff]
        %v178 = vld [vmem:[%s140 + $0x58] sm:$0xff]
        %v179 = vld [vmem:[%s140 + $0x60] sm:$0xff]
        %v180 = vld [vmem:[%s140 + $0x68] sm:$0xff]
        %v181 = vld [vmem:[%s140 + $0x70] sm:$0xff]
        %v182 = vld [vmem:[%s140 + $0x78] sm:$0xff]
        %vm183 = vcmp.eq.f32.partialorder %v167, 0.0
        %vm184 = vcmp.eq.f32.partialorder %v168, 0.0
        %vm185 = vcmp.eq.f32.partialorder %v169, 0.0
        %vm186 = vcmp.eq.f32.partialorder %v170, 0.0
        %vm187 = vcmp.eq.f32.partialorder %v171, 0.0
        %vm188 = vcmp.eq.f32.partialorder %v172, 0.0
        %vm189 = vcmp.eq.f32.partialorder %v173, 0.0
        %vm190 = vcmp.eq.f32.partialorder %v174, 0.0
        %vm191 = vcmp.eq.f32.partialorder %v175, 0.0
        %vm192 = vcmp.eq.f32.partialorder %v176, 0.0
        %vm193 = vcmp.eq.f32.partialorder %v177, 0.0
        %vm194 = vcmp.eq.f32.partialorder %v178, 0.0
        %vm195 = vcmp.eq.f32.partialorder %v179, 0.0
        %vm196 = vcmp.eq.f32.partialorder %v180, 0.0
        %vm197 = vcmp.eq.f32.partialorder %v181, 0.0
        %vm198 = vcmp.eq.f32.partialorder %v182, 0.0
        %v199 = vsel %vm183, 0.0, 1.0
        %v200 = vsel %vm184, 0.0, 1.0
        %v201 = vsel %vm185, 0.0, 1.0
        %v202 = vsel %vm186, 0.0, 1.0
        %v203 = vsel %vm187, 0.0, 1.0
        %v204 = vsel %vm188, 0.0, 1.0
        %v205 = vsel %vm189, 0.0, 1.0
        %v206 = vsel %vm190, 0.0, 1.0
        %v207 = vsel %vm191, 0.0, 1.0
        %v208 = vsel %vm192, 0.0, 1.0
        %v209 = vsel %vm193, 0.0, 1.0
        %v210 = vsel %vm194, 0.0, 1.0
        %v211 = vsel %vm195, 0.0, 1.0
        %v212 = vsel %vm196, 0.0, 1.0
        %v213 = vsel %vm197, 0.0, 1.0
        %v214 = vsel %vm198, 0.0, 1.0
        %v215 = vlaneseq
        %v216 = vshrl.u32 %v215, 7
        %v217 = vadd.s32 %v216, 8
        %v218 = vadd.s32 %v216, 16
        %v219 = vadd.s32 %v216, 24
        %v220 = vlaneseq
        %v221 = vand.u32 %v220, 127
        %v222 = vadd.s32 %v216, 11
        %v223 = vadd.s32 %v217, 11
        %v224 = vadd.s32 %v218, 11
        %v225 = vadd.s32 %v219, 11
        %vm226 = vcmp.le.s32.totalorder %v222, %v221
        %vm227 = vcmp.le.s32.totalorder %v223, %v221
        %vm228 = vcmp.le.s32.totalorder %v224, %v221
        %vm229 = vcmp.le.s32.totalorder %v225, %v221
        %v230 = vsel %vm226, 1.0, 0.0
        %v231 = vsel %vm227, 1.0, 0.0
        %v232 = vsel %vm228, 1.0, 0.0
        %v233 = vsel %vm229, 1.0, 0.0
        %v234 = vpack.c.bf16 %v231, %v230
        %v235 = vpack.c.bf16 %v233, %v232
        %v236 = vpack.c.bf16 %v200, %v199
        %v237 = vpack.c.bf16 %v202, %v201
        %v238 = vpack.c.bf16 %v204, %v203
        %v239 = vpack.c.bf16 %v206, %v205
        %v240 = vpack.c.bf16 %v208, %v207
        %v241 = vpack.c.bf16 %v210, %v209
        %v242 = vpack.c.bf16 %v212, %v211
        %v243 = vpack.c.bf16 %v214, %v213
        %vm244 = vcmask 261120
        %v246 = vsel %vm244, %v236, 0
        %v249 = vsel %vm244, %v237, 0
        %v252 = vsel %vm244, %v238, 0
        %v255 = vsel %vm244, %v239, 0
        %v258 = vsel %vm244, %v240, 0
        %v261 = vsel %vm244, %v241, 0
        %v264 = vsel %vm244, %v242, 0
        %v267 = vsel %vm244, %v243, 0
        %269 = vmatprep.subr.bf16.mxu0 0
        %270 = vmatpush1.bf16.msra.mxu0 %v234
        %271 = vmatprep.subr.bf16.mxu0 0
        %272 = vmatpush1.bf16.msra.mxu0 %v235
        %273 = vmatprep.subr.bf16.mxu0 0
        %274 = vmatpush1.bf16.msra.mxu0 0
        %275 = vmatprep.subr.bf16.mxu0 0
        %276 = vmatpush1.bf16.msra.mxu0 0
        %277 = vmatprep.subr.bf16.mxu0 0
        %278 = vmatpush1.bf16.msra.mxu0 0
        %279 = vmatprep.subr.bf16.mxu0 0
        %280 = vmatpush1.bf16.msra.mxu0 0
        %281 = vmatprep.subr.bf16.mxu0 0
        %282 = vmatpush1.bf16.msra.mxu0 0
        %283 = vmatprep.subr.bf16.mxu0 0
        %284 = vmatpush1.bf16.msra.mxu0 0
        %285 = vmatprep.subr.bf16.mxu0 0
        %286 = vmatpush1.bf16.msra.mxu0 0
        %287 = vmatprep.subr.bf16.mxu0 0
        %288 = vmatpush1.bf16.msra.mxu0 0
        %289 = vmatprep.subr.bf16.mxu0 0
        %290 = vmatpush1.bf16.msra.mxu0 0
        %291 = vmatprep.subr.bf16.mxu0 0
        %292 = vmatpush1.bf16.msra.mxu0 0
        %293 = vmatprep.subr.bf16.mxu0 0
        %294 = vmatpush1.bf16.msra.mxu0 0
        %295 = vmatprep.subr.bf16.mxu0 0
        %296 = vmatpush1.bf16.msra.mxu0 0
        %297 = vmatprep.subr.bf16.mxu0 0
        %298 = vmatpush1.bf16.msra.mxu0 0
        %299 = vmatprep.subr.bf16.mxu0 0
        %300 = vmatpush1.bf16.msra.mxu0 0
        %301 = vmatprep.mubr.bf16.mxu0 0
        %302 = vmatmul.mubr.bf16.gmra.mrb[0].mxu0 %v246
        %v303 = vpop.f32.mrb[0].mxu0
        %v304 = vadd.f32 0.0, %v303
        %v305 = vpop.f32.mrb[0].mxu0
        %v306 = vpop.f32.mrb[0].mxu0
        %v307 = vadd.f32 0.0, %v306
        %v308 = vpop.f32.mrb[0].mxu0
        %309 = vmatprep.mubr.bf16.mxu0 0
        %310 = vmatmul.mubr.bf16.gmra.mrb[0].mxu0 %v249
        %v311 = vpop.f32.mrb[0].mxu0
        %v312 = vadd.f32 0.0, %v311
        %v313 = vpop.f32.mrb[0].mxu0
        %v314 = vpop.f32.mrb[0].mxu0
        %v315 = vadd.f32 0.0, %v314
        %v316 = vpop.f32.mrb[0].mxu0
        %317 = vmatprep.mubr.bf16.mxu0 0
        %318 = vmatmul.mubr.bf16.gmra.mrb[0].mxu0 %v252
        %v319 = vpop.f32.mrb[0].mxu0
        %v320 = vadd.f32 0.0, %v319
        %v321 = vpop.f32.mrb[0].mxu0
        %v322 = vpop.f32.mrb[0].mxu0
        %v323 = vadd.f32 0.0, %v322
        %v324 = vpop.f32.mrb[0].mxu0
        %325 = vmatprep.mubr.bf16.mxu0 0
        %326 = vmatmul.mubr.bf16.gmra.mrb[0].mxu0 %v255
        %v327 = vpop.f32.mrb[0].mxu0
        %v328 = vadd.f32 0.0, %v327
        %v329 = vpop.f32.mrb[0].mxu0
        %v330 = vpop.f32.mrb[0].mxu0
        %v331 = vadd.f32 0.0, %v330
        %v332 = vpop.f32.mrb[0].mxu0
        %333 = vmatprep.mubr.bf16.mxu0 0
        %334 = vmatmul.mubr.bf16.gmra.mrb[0].mxu0 %v258
        %v335 = vpop.f32.mrb[0].mxu0
        %v336 = vadd.f32 0.0, %v335
        %v337 = vpop.f32.mrb[0].mxu0
        %v338 = vpop.f32.mrb[0].mxu0
        %v339 = vadd.f32 0.0, %v338
        %v340 = vpop.f32.mrb[0].mxu0
        %341 = vmatprep.mubr.bf16.mxu0 0
        %342 = vmatmul.mubr.bf16.gmra.mrb[0].mxu0 %v261
        %v343 = vpop.f32.mrb[0].mxu0
        %v344 = vadd.f32 0.0, %v343
        %v345 = vpop.f32.mrb[0].mxu0
        %v346 = vpop.f32.mrb[0].mxu0
        %v347 = vadd.f32 0.0, %v346
        %v348 = vpop.f32.mrb[0].mxu0
        %349 = vmatprep.mubr.bf16.mxu0 0
        %350 = vmatmul.mubr.bf16.gmra.mrb[0].mxu0 %v264
        %v351 = vpop.f32.mrb[0].mxu0
        %v352 = vadd.f32 0.0, %v351
        %v353 = vpop.f32.mrb[0].mxu0
        %v354 = vpop.f32.mrb[0].mxu0
        %v355 = vadd.f32 0.0, %v354
        %v356 = vpop.f32.mrb[0].mxu0
        %357 = vmatprep.mubr.bf16.mxu0 0
        %358 = vmatmul.mubr.bf16.gmra.mrb[0].mxu0 %v267
        %v359 = vpop.f32.mrb[0].mxu0
        %v360 = vadd.f32 0.0, %v359
        %v361 = vpop.f32.mrb[0].mxu0
        %v362 = vpop.f32.mrb[0].mxu0
        %v363 = vadd.f32 0.0, %v362
        %v364 = vpop.f32.mrb[0].mxu0
        %365 = vdwg.mxu0
        %v366 = vrot.slane %v304, 6
        %v367 = vrot.slane %v307, 6
        %v368 = vrot.slane %v312, 6
        %v369 = vrot.slane %v315, 6
        %v370 = vrot.slane %v320, 6
        %v371 = vrot.slane %v323, 6
        %v372 = vrot.slane %v328, 6
        %v373 = vrot.slane %v331, 6
        %v374 = vrot.slane %v336, 6
        %v375 = vrot.slane %v339, 6
        %v376 = vrot.slane %v344, 6
        %v377 = vrot.slane %v347, 6
        %v378 = vrot.slane %v352, 6
        %v379 = vrot.slane %v355, 6
        %v380 = vrot.slane %v360, 6
        %v381 = vrot.slane %v363, 6
        %vm382 = vcmp.lt.s32.totalorder %v216, 2
        %v383 = vsel %vm382, %v380, %v381
        %v384 = vsel %vm382, %v379, %v380
        %v385 = vsel %vm382, %v378, %v379
        %v386 = vsel %vm382, %v377, %v378
        %v387 = vsel %vm382, %v376, %v377
        %v388 = vsel %vm382, %v375, %v376
        %v389 = vsel %vm382, %v374, %v375
        %v390 = vsel %vm382, %v373, %v374
        %v391 = vsel %vm382, %v372, %v373
        %v392 = vsel %vm382, %v371, %v372
        %v393 = vsel %vm382, %v370, %v371
        %v394 = vsel %vm382, %v369, %v370
        %v395 = vsel %vm382, %v368, %v369
        %v396 = vsel %vm382, %v367, %v368
        %v397 = vsel %vm382, %v366, %v367
        %v398 = vsel %vm382, %v381, %v366
        %415 = vrot.lane.b32.xlu0 %v383, 1
        %v416 = vpop.permute.xlu0 %415
        %417 = vrot.lane.b32.xlu0 %v398, 1
        %v418 = vpop.permute.xlu0 %417
        %419 = vrot.lane.b32.xlu0 %v397, 1
        %v420 = vpop.permute.xlu0 %419
        %421 = vrot.lane.b32.xlu0 %v396, 1
        %v422 = vpop.permute.xlu0 %421
        %423 = vrot.lane.b32.xlu0 %v395, 1
        %v424 = vpop.permute.xlu0 %423
        %425 = vrot.lane.b32.xlu0 %v394, 1
        %v426 = vpop.permute.xlu0 %425
        %427 = vrot.lane.b32.xlu0 %v393, 1
        %v428 = vpop.permute.xlu0 %427
        %429 = vrot.lane.b32.xlu0 %v392, 1
        %v430 = vpop.permute.xlu0 %429
        %431 = vrot.lane.b32.xlu0 %v391, 1
        %v432 = vpop.permute.xlu0 %431
        %433 = vrot.lane.b32.xlu0 %v390, 1
        %v434 = vpop.permute.xlu0 %433
        %435 = vrot.lane.b32.xlu0 %v389, 1
        %v436 = vpop.permute.xlu0 %435
        %437 = vrot.lane.b32.xlu0 %v388, 1
        %v438 = vpop.permute.xlu0 %437
        %439 = vrot.lane.b32.xlu0 %v387, 1
        %v440 = vpop.permute.xlu0 %439
        %441 = vrot.lane.b32.xlu0 %v386, 1
        %v442 = vpop.permute.xlu0 %441
        %443 = vrot.lane.b32.xlu0 %v385, 1
        %v444 = vpop.permute.xlu0 %443
        %445 = vrot.lane.b32.xlu0 %v384, 1
        %v446 = vpop.permute.xlu0 %445
        %v463 = vsub.f32 %v383, %v416
        %v464 = vsub.f32 %v398, %v418
        %v465 = vsub.f32 %v397, %v420
        %v466 = vsub.f32 %v396, %v422
        %v467 = vsub.f32 %v395, %v424
        %v468 = vsub.f32 %v394, %v426
        %v469 = vsub.f32 %v393, %v428
        %v470 = vsub.f32 %v392, %v430
        %v471 = vsub.f32 %v391, %v432
        %v472 = vsub.f32 %v390, %v434
        %v473 = vsub.f32 %v389, %v436
        %v474 = vsub.f32 %v388, %v438
        %v475 = vsub.f32 %v387, %v440
        %v476 = vsub.f32 %v386, %v442
        %v477 = vsub.f32 %v385, %v444
        %v478 = vsub.f32 %v384, %v446
        %v479 = vadd.s32 %v216, 4294967286
        %v480 = vadd.s32 %v217, 4294967286
        %v481 = vadd.s32 %v218, 4294967286
        %v482 = vadd.s32 %v219, 4294967286
        %vm483 = vcmp.ge.s32.totalorder %v479, 0
        %vm484 = vcmp.ge.s32.totalorder %v480, 0
        %vm485 = vcmp.ge.s32.totalorder %v481, 0
        %vm486 = vcmp.ge.s32.totalorder %v482, 0
        %vm487 = vcmp.lt.s32.totalorder %v479, 32
        %vm488 = vcmp.lt.s32.totalorder %v480, 32
        %vm489 = vcmp.lt.s32.totalorder %v481, 32
        %vm490 = vcmp.lt.s32.totalorder %v482, 32
        %vm491 = vmand %vm483, %vm487
        %vm492 = vmand %vm484, %vm488
        %vm493 = vmand %vm485, %vm489
        %vm494 = vmand %vm486, %vm490
        %v495 = vsel %vm491, %v463, 0.0
        %v496 = vsel %vm492, %v464, 0.0
        %v497 = vsel %vm493, %v465, 0.0
        %v498 = vsel %vm494, %v466, 0.0
        %v499 = vsel %vm491, %v467, 0.0
        %v500 = vsel %vm492, %v468, 0.0
        %v501 = vsel %vm493, %v469, 0.0
        %v502 = vsel %vm494, %v470, 0.0
        %v503 = vsel %vm491, %v471, 0.0
        %v504 = vsel %vm492, %v472, 0.0
        %v505 = vsel %vm493, %v473, 0.0
        %v506 = vsel %vm494, %v474, 0.0
        %v507 = vsel %vm491, %v475, 0.0
        %v508 = vsel %vm492, %v476, 0.0
        %v509 = vsel %vm493, %v477, 0.0
        %v510 = vsel %vm494, %v478, 0.0
        %v511 = vadd.f32 %v495, 0.0
        %v512 = vadd.f32 %v496, 0.0
        %v513 = vadd.f32 %v497, 0.0
        %v514 = vadd.f32 %v498, 0.0
        %v515 = vadd.f32 %v499, 0.0
        %v516 = vadd.f32 %v500, 0.0
        %v517 = vadd.f32 %v501, 0.0
        %v518 = vadd.f32 %v502, 0.0
        %v519 = vadd.f32 %v503, 0.0
        %v520 = vadd.f32 %v504, 0.0
        %v521 = vadd.f32 %v505, 0.0
        %v522 = vadd.f32 %v506, 0.0
        %v523 = vadd.f32 %v507, 0.0
        %v524 = vadd.f32 %v508, 0.0
        %v525 = vadd.f32 %v509, 0.0
        %v526 = vadd.f32 %v510, 0.0
        %v527 = vrot.slane %v304, 7
        %v528 = vrot.slane %v307, 7
        %v529 = vrot.slane %v312, 7
        %v530 = vrot.slane %v315, 7
        %v531 = vrot.slane %v320, 7
        %v532 = vrot.slane %v323, 7
        %v533 = vrot.slane %v328, 7
        %v534 = vrot.slane %v331, 7
        %v535 = vrot.slane %v336, 7
        %v536 = vrot.slane %v339, 7
        %v537 = vrot.slane %v344, 7
        %v538 = vrot.slane %v347, 7
        %v539 = vrot.slane %v352, 7
        %v540 = vrot.slane %v355, 7
        %v541 = vrot.slane %v360, 7
        %v542 = vrot.slane %v363, 7
        %vm543 = vcmp.lt.s32.totalorder %v216, 1
        %v544 = vsel %vm543, %v541, %v542
        %v545 = vsel %vm543, %v540, %v541
        %v546 = vsel %vm543, %v539, %v540
        %v547 = vsel %vm543, %v538, %v539
        %v548 = vsel %vm543, %v537, %v538
        %v549 = vsel %vm543, %v536, %v537
        %v550 = vsel %vm543, %v535, %v536
        %v551 = vsel %vm543, %v534, %v535
        %v552 = vsel %vm543, %v533, %v534
        %v553 = vsel %vm543, %v532, %v533
        %v554 = vsel %vm543, %v531, %v532
        %v555 = vsel %vm543, %v530, %v531
        %v556 = vsel %vm543, %v529, %v530
        %v557 = vsel %vm543, %v528, %v529
        %v558 = vsel %vm543, %v527, %v528
        %v559 = vsel %vm543, %v542, %v527
        %576 = vrot.lane.b32.xlu0 %v544, 9
        %v577 = vpop.permute.xlu0 %576
        %578 = vrot.lane.b32.xlu0 %v559, 9
        %v579 = vpop.permute.xlu0 %578
        %580 = vrot.lane.b32.xlu0 %v558, 9
        %v581 = vpop.permute.xlu0 %580
        %582 = vrot.lane.b32.xlu0 %v557, 9
        %v583 = vpop.permute.xlu0 %582
        %584 = vrot.lane.b32.xlu0 %v556, 9
        %v585 = vpop.permute.xlu0 %584
        %586 = vrot.lane.b32.xlu0 %v555, 9
        %v587 = vpop.permute.xlu0 %586
        %588 = vrot.lane.b32.xlu0 %v554, 9
        %v589 = vpop.permute.xlu0 %588
        %590 = vrot.lane.b32.xlu0 %v553, 9
        %v591 = vpop.permute.xlu0 %590
        %592 = vrot.lane.b32.xlu0 %v552, 9
        %v593 = vpop.permute.xlu0 %592
        %594 = vrot.lane.b32.xlu0 %v551, 9
        %v595 = vpop.permute.xlu0 %594
        %596 = vrot.lane.b32.xlu0 %v550, 9
        %v597 = vpop.permute.xlu0 %596
        %598 = vrot.lane.b32.xlu0 %v549, 9
        %v599 = vpop.permute.xlu0 %598
        %600 = vrot.lane.b32.xlu0 %v548, 9
        %v601 = vpop.permute.xlu0 %600
        %602 = vrot.lane.b32.xlu0 %v547, 9
        %v603 = vpop.permute.xlu0 %602
        %604 = vrot.lane.b32.xlu0 %v546, 9
        %v605 = vpop.permute.xlu0 %604
        %606 = vrot.lane.b32.xlu0 %v545, 9
        %v607 = vpop.permute.xlu0 %606
        %v624 = vsub.f32 %v544, %v577
        %v625 = vsub.f32 %v559, %v579
        %v626 = vsub.f32 %v558, %v581
        %v627 = vsub.f32 %v557, %v583
        %v628 = vsub.f32 %v556, %v585
        %v629 = vsub.f32 %v555, %v587
        %v630 = vsub.f32 %v554, %v589
        %v631 = vsub.f32 %v553, %v591
        %v632 = vsub.f32 %v552, %v593
        %v633 = vsub.f32 %v551, %v595
        %v634 = vsub.f32 %v550, %v597
        %v635 = vsub.f32 %v549, %v599
        %v636 = vsub.f32 %v548, %v601
        %v637 = vsub.f32 %v547, %v603
        %v638 = vsub.f32 %v546, %v605
        %v639 = vsub.f32 %v545, %v607
        %v640 = vadd.s32 %v216, 4294967287
        %v641 = vadd.s32 %v217, 4294967287
        %v642 = vadd.s32 %v218, 4294967287
        %v643 = vadd.s32 %v219, 4294967287
        %vm644 = vcmp.ge.s32.totalorder %v640, 0
        %vm645 = vcmp.ge.s32.totalorder %v641, 0
        %vm646 = vcmp.ge.s32.totalorder %v642, 0
        %vm647 = vcmp.ge.s32.totalorder %v643, 0
        %vm648 = vcmp.lt.s32.totalorder %v640, 32
        %vm649 = vcmp.lt.s32.totalorder %v641, 32
        %vm650 = vcmp.lt.s32.totalorder %v642, 32
        %vm651 = vcmp.lt.s32.totalorder %v643, 32
        %vm652 = vmand %vm644, %vm648
        %vm653 = vmand %vm645, %vm649
        %vm654 = vmand %vm646, %vm650
        %vm655 = vmand %vm647, %vm651
        %v656 = vsel %vm652, %v624, 0.0
        %v657 = vsel %vm653, %v625, 0.0
        %v658 = vsel %vm654, %v626, 0.0
        %v659 = vsel %vm655, %v627, 0.0
        %v660 = vsel %vm652, %v628, 0.0
        %v661 = vsel %vm653, %v629, 0.0
        %v662 = vsel %vm654, %v630, 0.0
        %v663 = vsel %vm655, %v631, 0.0
        %v664 = vsel %vm652, %v632, 0.0
        %v665 = vsel %vm653, %v633, 0.0
        %v666 = vsel %vm654, %v634, 0.0
        %v667 = vsel %vm655, %v635, 0.0
        %v668 = vsel %vm652, %v636, 0.0
        %v669 = vsel %vm653, %v637, 0.0
        %v670 = vsel %vm654, %v638, 0.0
        %v671 = vsel %vm655, %v639, 0.0
        %v672 = vadd.f32 %v656, 0.0
        %v673 = vadd.f32 %v657, 0.0
        %v674 = vadd.f32 %v658, 0.0
        %v675 = vadd.f32 %v659, 0.0
        %v676 = vadd.f32 %v660, 0.0
        %v677 = vadd.f32 %v661, 0.0
        %v678 = vadd.f32 %v662, 0.0
        %v679 = vadd.f32 %v663, 0.0
        %v680 = vadd.f32 %v664, 0.0
        %v681 = vadd.f32 %v665, 0.0
        %v682 = vadd.f32 %v666, 0.0
        %v683 = vadd.f32 %v667, 0.0
        %v684 = vadd.f32 %v668, 0.0
        %v685 = vadd.f32 %v669, 0.0
        %v686 = vadd.f32 %v670, 0.0
        %v687 = vadd.f32 %v671, 0.0
        %704 = vrot.lane.b32.xlu0 %v363, 13
        %v705 = vpop.permute.xlu0 %704
        %706 = vrot.lane.b32.xlu0 %v304, 13
        %v707 = vpop.permute.xlu0 %706
        %708 = vrot.lane.b32.xlu0 %v307, 13
        %v709 = vpop.permute.xlu0 %708
        %710 = vrot.lane.b32.xlu0 %v312, 13
        %v711 = vpop.permute.xlu0 %710
        %712 = vrot.lane.b32.xlu0 %v315, 13
        %v713 = vpop.permute.xlu0 %712
        %714 = vrot.lane.b32.xlu0 %v320, 13
        %v715 = vpop.permute.xlu0 %714
        %716 = vrot.lane.b32.xlu0 %v323, 13
        %v717 = vpop.permute.xlu0 %716
        %718 = vrot.lane.b32.xlu0 %v328, 13
        %v719 = vpop.permute.xlu0 %718
        %720 = vrot.lane.b32.xlu0 %v331, 13
        %v721 = vpop.permute.xlu0 %720
        %722 = vrot.lane.b32.xlu0 %v336, 13
        %v723 = vpop.permute.xlu0 %722
        %724 = vrot.lane.b32.xlu0 %v339, 13
        %v725 = vpop.permute.xlu0 %724
        %726 = vrot.lane.b32.xlu0 %v344, 13
        %v727 = vpop.permute.xlu0 %726
        %728 = vrot.lane.b32.xlu0 %v347, 13
        %v729 = vpop.permute.xlu0 %728
        %730 = vrot.lane.b32.xlu0 %v352, 13
        %v731 = vpop.permute.xlu0 %730
        %732 = vrot.lane.b32.xlu0 %v355, 13
        %v733 = vpop.permute.xlu0 %732
        %734 = vrot.lane.b32.xlu0 %v360, 13
        %v735 = vpop.permute.xlu0 %734
        %v752 = vsub.f32 %v363, %v705
        %v753 = vsub.f32 %v304, %v707
        %v754 = vsub.f32 %v307, %v709
        %v755 = vsub.f32 %v312, %v711
        %v756 = vsub.f32 %v315, %v713
        %v757 = vsub.f32 %v320, %v715
        %v758 = vsub.f32 %v323, %v717
        %v759 = vsub.f32 %v328, %v719
        %v760 = vsub.f32 %v331, %v721
        %v761 = vsub.f32 %v336, %v723
        %v762 = vsub.f32 %v339, %v725
        %v763 = vsub.f32 %v344, %v727
        %v764 = vsub.f32 %v347, %v729
        %v765 = vsub.f32 %v352, %v731
        %v766 = vsub.f32 %v355, %v733
        %v767 = vsub.f32 %v360, %v735
        %v768 = vadd.s32 %v216, 4294967288
        %v769 = vadd.s32 %v217, 4294967288
        %v770 = vadd.s32 %v218, 4294967288
        %v771 = vadd.s32 %v219, 4294967288
        %vm772 = vcmp.ge.s32.totalorder %v768, 0
        %vm773 = vcmp.ge.s32.totalorder %v769, 0
        %vm774 = vcmp.ge.s32.totalorder %v770, 0
        %vm775 = vcmp.ge.s32.totalorder %v771, 0
        %vm776 = vcmp.lt.s32.totalorder %v768, 32
        %vm777 = vcmp.lt.s32.totalorder %v769, 32
        %vm778 = vcmp.lt.s32.totalorder %v770, 32
        %vm779 = vcmp.lt.s32.totalorder %v771, 32
        %vm780 = vmand %vm772, %vm776
        %vm781 = vmand %vm773, %vm777
        %vm782 = vmand %vm774, %vm778
        %vm783 = vmand %vm775, %vm779
        %v784 = vsel %vm780, %v752, 0.0
        %v785 = vsel %vm781, %v753, 0.0
        %v786 = vsel %vm782, %v754, 0.0
        %v787 = vsel %vm783, %v755, 0.0
        %v788 = vsel %vm780, %v756, 0.0
        %v789 = vsel %vm781, %v757, 0.0
        %v790 = vsel %vm782, %v758, 0.0
        %v791 = vsel %vm783, %v759, 0.0
        %v792 = vsel %vm780, %v760, 0.0
        %v793 = vsel %vm781, %v761, 0.0
        %v794 = vsel %vm782, %v762, 0.0
        %v795 = vsel %vm783, %v763, 0.0
        %v796 = vsel %vm780, %v764, 0.0
        %v797 = vsel %vm781, %v765, 0.0
        %v798 = vsel %vm782, %v766, 0.0
        %v799 = vsel %vm783, %v767, 0.0
        %v800 = vadd.f32 %v784, 0.0
        %v801 = vadd.f32 %v785, 0.0
        %v802 = vadd.f32 %v786, 0.0
        %v803 = vadd.f32 %v787, 0.0
        %v804 = vadd.f32 %v788, 0.0
        %v805 = vadd.f32 %v789, 0.0
        %v806 = vadd.f32 %v790, 0.0
        %v807 = vadd.f32 %v791, 0.0
        %v808 = vadd.f32 %v792, 0.0
        %v809 = vadd.f32 %v793, 0.0
        %v810 = vadd.f32 %v794, 0.0
        %v811 = vadd.f32 %v795, 0.0
        %v812 = vadd.f32 %v796, 0.0
        %v813 = vadd.f32 %v797, 0.0
        %v814 = vadd.f32 %v798, 0.0
        %v815 = vadd.f32 %v799, 0.0
        %v816 = vrot.slane %v304, 1
        %v817 = vrot.slane %v307, 1
        %v818 = vrot.slane %v312, 1
        %v819 = vrot.slane %v315, 1
        %v820 = vrot.slane %v320, 1
        %v821 = vrot.slane %v323, 1
        %v822 = vrot.slane %v328, 1
        %v823 = vrot.slane %v331, 1
        %v824 = vrot.slane %v336, 1
        %v825 = vrot.slane %v339, 1
        %v826 = vrot.slane %v344, 1
        %v827 = vrot.slane %v347, 1
        %v828 = vrot.slane %v352, 1
        %v829 = vrot.slane %v355, 1
        %v830 = vrot.slane %v360, 1
        %v831 = vrot.slane %v363, 1
        %vm832 = vcmp.lt.s32.totalorder %v216, 7
        %v833 = vsel %vm832, %v830, %v831
        %v834 = vsel %vm832, %v829, %v830
        %v835 = vsel %vm832, %v828, %v829
        %v836 = vsel %vm832, %v827, %v828
        %v837 = vsel %vm832, %v826, %v827
        %v838 = vsel %vm832, %v825, %v826
        %v839 = vsel %vm832, %v824, %v825
        %v840 = vsel %vm832, %v823, %v824
        %v841 = vsel %vm832, %v822, %v823
        %v842 = vsel %vm832, %v821, %v822
        %v843 = vsel %vm832, %v820, %v821
        %v844 = vsel %vm832, %v819, %v820
        %v845 = vsel %vm832, %v818, %v819
        %v846 = vsel %vm832, %v817, %v818
        %v847 = vsel %vm832, %v816, %v817
        %v848 = vsel %vm832, %v831, %v816
        %865 = vrot.lane.b32.xlu0 %v848, 15
        %v866 = vpop.permute.xlu0 %865
        %867 = vrot.lane.b32.xlu0 %v847, 15
        %v868 = vpop.permute.xlu0 %867
        %869 = vrot.lane.b32.xlu0 %v846, 15
        %v870 = vpop.permute.xlu0 %869
        %871 = vrot.lane.b32.xlu0 %v845, 15
        %v872 = vpop.permute.xlu0 %871
        %873 = vrot.lane.b32.xlu0 %v844, 15
        %v874 = vpop.permute.xlu0 %873
        %875 = vrot.lane.b32.xlu0 %v843, 15
        %v876 = vpop.permute.xlu0 %875
        %877 = vrot.lane.b32.xlu0 %v842, 15
        %v878 = vpop.permute.xlu0 %877
        %879 = vrot.lane.b32.xlu0 %v841, 15
        %v880 = vpop.permute.xlu0 %879
        %881 = vrot.lane.b32.xlu0 %v840, 15
        %v882 = vpop.permute.xlu0 %881
        %883 = vrot.lane.b32.xlu0 %v839, 15
        %v884 = vpop.permute.xlu0 %883
        %885 = vrot.lane.b32.xlu0 %v838, 15
        %v886 = vpop.permute.xlu0 %885
        %887 = vrot.lane.b32.xlu0 %v837, 15
        %v888 = vpop.permute.xlu0 %887
        %889 = vrot.lane.b32.xlu0 %v836, 15
        %v890 = vpop.permute.xlu0 %889
        %891 = vrot.lane.b32.xlu0 %v835, 15
        %v892 = vpop.permute.xlu0 %891
        %893 = vrot.lane.b32.xlu0 %v834, 15
        %v894 = vpop.permute.xlu0 %893
        %895 = vrot.lane.b32.xlu0 %v833, 15
        %v896 = vpop.permute.xlu0 %895
        %v913 = vsub.f32 %v848, %v866
        %v914 = vsub.f32 %v847, %v868
        %v915 = vsub.f32 %v846, %v870
        %v916 = vsub.f32 %v845, %v872
        %v917 = vsub.f32 %v844, %v874
        %v918 = vsub.f32 %v843, %v876
        %v919 = vsub.f32 %v842, %v878
        %v920 = vsub.f32 %v841, %v880
        %v921 = vsub.f32 %v840, %v882
        %v922 = vsub.f32 %v839, %v884
        %v923 = vsub.f32 %v838, %v886
        %v924 = vsub.f32 %v837, %v888
        %v925 = vsub.f32 %v836, %v890
        %v926 = vsub.f32 %v835, %v892
        %v927 = vsub.f32 %v834, %v894
        %v928 = vsub.f32 %v833, %v896
        %v929 = vadd.s32 %v216, 4294967289
        %v930 = vadd.s32 %v217, 4294967289
        %v931 = vadd.s32 %v218, 4294967289
        %v932 = vadd.s32 %v219, 4294967289
        %vm933 = vcmp.ge.s32.totalorder %v929, 0
        %vm934 = vcmp.ge.s32.totalorder %v930, 0
        %vm935 = vcmp.ge.s32.totalorder %v931, 0
        %vm936 = vcmp.ge.s32.totalorder %v932, 0
        %vm937 = vcmp.lt.s32.totalorder %v929, 32
        %vm938 = vcmp.lt.s32.totalorder %v930, 32
        %vm939 = vcmp.lt.s32.totalorder %v931, 32
        %vm940 = vcmp.lt.s32.totalorder %v932, 32
        %vm941 = vmand %vm933, %vm937
        %vm942 = vmand %vm934, %vm938
        %vm943 = vmand %vm935, %vm939
        %vm944 = vmand %vm936, %vm940
        %v945 = vsel %vm941, %v913, 0.0
        %v946 = vsel %vm942, %v914, 0.0
        %v947 = vsel %vm943, %v915, 0.0
        %v948 = vsel %vm944, %v916, 0.0
        %v949 = vsel %vm941, %v917, 0.0
        %v950 = vsel %vm942, %v918, 0.0
        %v951 = vsel %vm943, %v919, 0.0
        %v952 = vsel %vm944, %v920, 0.0
        %v953 = vsel %vm941, %v921, 0.0
        %v954 = vsel %vm942, %v922, 0.0
        %v955 = vsel %vm943, %v923, 0.0
        %v956 = vsel %vm944, %v924, 0.0
        %v957 = vsel %vm941, %v925, 0.0
        %v958 = vsel %vm942, %v926, 0.0
        %v959 = vsel %vm943, %v927, 0.0
        %v960 = vsel %vm944, %v928, 0.0
        %v961 = vadd.f32 %v945, 0.0
        %v962 = vadd.f32 %v946, 0.0
        %v963 = vadd.f32 %v947, 0.0
        %v964 = vadd.f32 %v948, 0.0
        %v965 = vadd.f32 %v949, 0.0
        %v966 = vadd.f32 %v950, 0.0
        %v967 = vadd.f32 %v951, 0.0
        %v968 = vadd.f32 %v952, 0.0
        %v969 = vadd.f32 %v953, 0.0
        %v970 = vadd.f32 %v954, 0.0
        %v971 = vadd.f32 %v955, 0.0
        %v972 = vadd.f32 %v956, 0.0
        %v973 = vadd.f32 %v957, 0.0
        %v974 = vadd.f32 %v958, 0.0
        %v975 = vadd.f32 %v959, 0.0
        %v976 = vadd.f32 %v960, 0.0
        %v977 = vrot.slane %v304, 2
        %v978 = vrot.slane %v307, 2
        %v979 = vrot.slane %v312, 2
        %v980 = vrot.slane %v315, 2
        %v981 = vrot.slane %v320, 2
        %v982 = vrot.slane %v323, 2
        %v983 = vrot.slane %v328, 2
        %v984 = vrot.slane %v331, 2
        %v985 = vrot.slane %v336, 2
        %v986 = vrot.slane %v339, 2
        %v987 = vrot.slane %v344, 2
        %v988 = vrot.slane %v347, 2
        %v989 = vrot.slane %v352, 2
        %v990 = vrot.slane %v355, 2
        %v991 = vrot.slane %v360, 2
        %v992 = vrot.slane %v363, 2
        %vm993 = vcmp.lt.s32.totalorder %v216, 6
        %v994 = vsel %vm993, %v991, %v992
        %v995 = vsel %vm993, %v990, %v991
        %v996 = vsel %vm993, %v989, %v990
        %v997 = vsel %vm993, %v988, %v989
        %v998 = vsel %vm993, %v987, %v988
        %v999 = vsel %vm993, %v986, %v987
        %v1000 = vsel %vm993, %v985, %v986
        %v1001 = vsel %vm993, %v984, %v985
        %v1002 = vsel %vm993, %v983, %v984
        %v1003 = vsel %vm993, %v982, %v983
        %v1004 = vsel %vm993, %v981, %v982
        %v1005 = vsel %vm993, %v980, %v981
        %v1006 = vsel %vm993, %v979, %v980
        %v1007 = vsel %vm993, %v978, %v979
        %v1008 = vsel %vm993, %v977, %v978
        %v1009 = vsel %vm993, %v992, %v977
        %1026 = vrot.lane.b32.xlu0 %v1009, 17
        %v1027 = vpop.permute.xlu0 %1026
        %1028 = vrot.lane.b32.xlu0 %v1008, 17
        %v1029 = vpop.permute.xlu0 %1028
        %1030 = vrot.lane.b32.xlu0 %v1007, 17
        %v1031 = vpop.permute.xlu0 %1030
        %1032 = vrot.lane.b32.xlu0 %v1006, 17
        %v1033 = vpop.permute.xlu0 %1032
        %1034 = vrot.lane.b32.xlu0 %v1005, 17
        %v1035 = vpop.permute.xlu0 %1034
        %1036 = vrot.lane.b32.xlu0 %v1004, 17
        %v1037 = vpop.permute.xlu0 %1036
        %1038 = vrot.lane.b32.xlu0 %v1003, 17
        %v1039 = vpop.permute.xlu0 %1038
        %1040 = vrot.lane.b32.xlu0 %v1002, 17
        %v1041 = vpop.permute.xlu0 %1040
        %1042 = vrot.lane.b32.xlu0 %v1001, 17
        %v1043 = vpop.permute.xlu0 %1042
        %1044 = vrot.lane.b32.xlu0 %v1000, 17
        %v1045 = vpop.permute.xlu0 %1044
        %1046 = vrot.lane.b32.xlu0 %v999, 17
        %v1047 = vpop.permute.xlu0 %1046
        %1048 = vrot.lane.b32.xlu0 %v998, 17
        %v1049 = vpop.permute.xlu0 %1048
        %1050 = vrot.lane.b32.xlu0 %v997, 17
        %v1051 = vpop.permute.xlu0 %1050
        %1052 = vrot.lane.b32.xlu0 %v996, 17
        %v1053 = vpop.permute.xlu0 %1052
        %1054 = vrot.lane.b32.xlu0 %v995, 17
        %v1055 = vpop.permute.xlu0 %1054
        %1056 = vrot.lane.b32.xlu0 %v994, 17
        %v1057 = vpop.permute.xlu0 %1056
        %v1074 = vsub.f32 %v1009, %v1027
        %v1075 = vsub.f32 %v1008, %v1029
        %v1076 = vsub.f32 %v1007, %v1031
        %v1077 = vsub.f32 %v1006, %v1033
        %v1078 = vsub.f32 %v1005, %v1035
        %v1079 = vsub.f32 %v1004, %v1037
        %v1080 = vsub.f32 %v1003, %v1039
        %v1081 = vsub.f32 %v1002, %v1041
        %v1082 = vsub.f32 %v1001, %v1043
        %v1083 = vsub.f32 %v1000, %v1045
        %v1084 = vsub.f32 %v999, %v1047
        %v1085 = vsub.f32 %v998, %v1049
        %v1086 = vsub.f32 %v997, %v1051
        %v1087 = vsub.f32 %v996, %v1053
        %v1088 = vsub.f32 %v995, %v1055
        %v1089 = vsub.f32 %v994, %v1057
        %v1090 = vadd.s32 %v216, 4294967290
        %v1091 = vadd.s32 %v217, 4294967290
        %v1092 = vadd.s32 %v218, 4294967290
        %v1093 = vadd.s32 %v219, 4294967290
        %vm1094 = vcmp.ge.s32.totalorder %v1090, 0
        %vm1095 = vcmp.ge.s32.totalorder %v1091, 0
        %vm1096 = vcmp.ge.s32.totalorder %v1092, 0
        %vm1097 = vcmp.ge.s32.totalorder %v1093, 0
        %vm1098 = vcmp.lt.s32.totalorder %v1090, 32
        %vm1099 = vcmp.lt.s32.totalorder %v1091, 32
        %vm1100 = vcmp.lt.s32.totalorder %v1092, 32
        %vm1101 = vcmp.lt.s32.totalorder %v1093, 32
        %vm1102 = vmand %vm1094, %vm1098
        %vm1103 = vmand %vm1095, %vm1099
        %vm1104 = vmand %vm1096, %vm1100
        %vm1105 = vmand %vm1097, %vm1101
        %v1106 = vsel %vm1102, %v1074, 0.0
        %v1107 = vsel %vm1103, %v1075, 0.0
        %v1108 = vsel %vm1104, %v1076, 0.0
        %v1109 = vsel %vm1105, %v1077, 0.0
        %v1110 = vsel %vm1102, %v1078, 0.0
        %v1111 = vsel %vm1103, %v1079, 0.0
        %v1112 = vsel %vm1104, %v1080, 0.0
        %v1113 = vsel %vm1105, %v1081, 0.0
        %v1114 = vsel %vm1102, %v1082, 0.0
        %v1115 = vsel %vm1103, %v1083, 0.0
        %v1116 = vsel %vm1104, %v1084, 0.0
        %v1117 = vsel %vm1105, %v1085, 0.0
        %v1118 = vsel %vm1102, %v1086, 0.0
        %v1119 = vsel %vm1103, %v1087, 0.0
        %v1120 = vsel %vm1104, %v1088, 0.0
        %v1121 = vsel %vm1105, %v1089, 0.0
        %1138 = vrot.lane.b32.xlu0 %v1106, 120
        %v1139 = vpop.permute.xlu0 %1138
        %1140 = vrot.lane.b32.xlu0 %v1107, 120
        %v1141 = vpop.permute.xlu0 %1140
        %1142 = vrot.lane.b32.xlu0 %v1108, 120
        %v1143 = vpop.permute.xlu0 %1142
        %1144 = vrot.lane.b32.xlu0 %v1109, 120
        %v1145 = vpop.permute.xlu0 %1144
        %1146 = vrot.lane.b32.xlu0 %v1110, 120
        %v1147 = vpop.permute.xlu0 %1146
        %1148 = vrot.lane.b32.xlu0 %v1111, 120
        %v1149 = vpop.permute.xlu0 %1148
        %1150 = vrot.lane.b32.xlu0 %v1112, 120
        %v1151 = vpop.permute.xlu0 %1150
        %1152 = vrot.lane.b32.xlu0 %v1113, 120
        %v1153 = vpop.permute.xlu0 %1152
        %1154 = vrot.lane.b32.xlu0 %v1114, 120
        %v1155 = vpop.permute.xlu0 %1154
        %1156 = vrot.lane.b32.xlu0 %v1115, 120
        %v1157 = vpop.permute.xlu0 %1156
        %1158 = vrot.lane.b32.xlu0 %v1116, 120
        %v1159 = vpop.permute.xlu0 %1158
        %1160 = vrot.lane.b32.xlu0 %v1117, 120
        %v1161 = vpop.permute.xlu0 %1160
        %1162 = vrot.lane.b32.xlu0 %v1118, 120
        %v1163 = vpop.permute.xlu0 %1162
        %1164 = vrot.lane.b32.xlu0 %v1119, 120
        %v1165 = vpop.permute.xlu0 %1164
        %1166 = vrot.lane.b32.xlu0 %v1120, 120
        %v1167 = vpop.permute.xlu0 %1166
        %1168 = vrot.lane.b32.xlu0 %v1121, 120
        %v1169 = vpop.permute.xlu0 %1168
        %v1186 = vadd.f32 %v511, %v1139
        %v1187 = vadd.f32 %v512, %v1141
        %v1188 = vadd.f32 %v513, %v1143
        %v1189 = vadd.f32 %v514, %v1145
        %v1190 = vadd.f32 %v515, %v1147
        %v1191 = vadd.f32 %v516, %v1149
        %v1192 = vadd.f32 %v517, %v1151
        %v1193 = vadd.f32 %v518, %v1153
        %v1194 = vadd.f32 %v519, %v1155
        %v1195 = vadd.f32 %v520, %v1157
        %v1196 = vadd.f32 %v521, %v1159
        %v1197 = vadd.f32 %v522, %v1161
        %v1198 = vadd.f32 %v523, %v1163
        %v1199 = vadd.f32 %v524, %v1165
        %v1200 = vadd.f32 %v525, %v1167
        %v1201 = vadd.f32 %v526, %v1169
        %v1202 = vrot.slane %v304, 3
        %v1203 = vrot.slane %v307, 3
        %v1204 = vrot.slane %v312, 3
        %v1205 = vrot.slane %v315, 3
        %v1206 = vrot.slane %v320, 3
        %v1207 = vrot.slane %v323, 3
        %v1208 = vrot.slane %v328, 3
        %v1209 = vrot.slane %v331, 3
        %v1210 = vrot.slane %v336, 3
        %v1211 = vrot.slane %v339, 3
        %v1212 = vrot.slane %v344, 3
        %v1213 = vrot.slane %v347, 3
        %v1214 = vrot.slane %v352, 3
        %v1215 = vrot.slane %v355, 3
        %v1216 = vrot.slane %v360, 3
        %v1217 = vrot.slane %v363, 3
        %vm1218 = vcmp.lt.s32.totalorder %v216, 5
        %v1219 = vsel %vm1218, %v1216, %v1217
        %v1220 = vsel %vm1218, %v1215, %v1216
        %v1221 = vsel %vm1218, %v1214, %v1215
        %v1222 = vsel %vm1218, %v1213, %v1214
        %v1223 = vsel %vm1218, %v1212, %v1213
        %v1224 = vsel %vm1218, %v1211, %v1212
        %v1225 = vsel %vm1218, %v1210, %v1211
        %v1226 = vsel %vm1218, %v1209, %v1210
        %v1227 = vsel %vm1218, %v1208, %v1209
        %v1228 = vsel %vm1218, %v1207, %v1208
        %v1229 = vsel %vm1218, %v1206, %v1207
        %v1230 = vsel %vm1218, %v1205, %v1206
        %v1231 = vsel %vm1218, %v1204, %v1205
        %v1232 = vsel %vm1218, %v1203, %v1204
        %v1233 = vsel %vm1218, %v1202, %v1203
        %v1234 = vsel %vm1218, %v1217, %v1202
        %1251 = vrot.lane.b32.xlu0 %v1234, 17
        %v1252 = vpop.permute.xlu0 %1251
        %1253 = vrot.lane.b32.xlu0 %v1233, 17
        %v1254 = vpop.permute.xlu0 %1253
        %1255 = vrot.lane.b32.xlu0 %v1232, 17
        %v1256 = vpop.permute.xlu0 %1255
        %1257 = vrot.lane.b32.xlu0 %v1231, 17
        %v1258 = vpop.permute.xlu0 %1257
        %1259 = vrot.lane.b32.xlu0 %v1230, 17
        %v1260 = vpop.permute.xlu0 %1259
        %1261 = vrot.lane.b32.xlu0 %v1229, 17
        %v1262 = vpop.permute.xlu0 %1261
        %1263 = vrot.lane.b32.xlu0 %v1228, 17
        %v1264 = vpop.permute.xlu0 %1263
        %1265 = vrot.lane.b32.xlu0 %v1227, 17
        %v1266 = vpop.permute.xlu0 %1265
        %1267 = vrot.lane.b32.xlu0 %v1226, 17
        %v1268 = vpop.permute.xlu0 %1267
        %1269 = vrot.lane.b32.xlu0 %v1225, 17
        %v1270 = vpop.permute.xlu0 %1269
        %1271 = vrot.lane.b32.xlu0 %v1224, 17
        %v1272 = vpop.permute.xlu0 %1271
        %1273 = vrot.lane.b32.xlu0 %v1223, 17
        %v1274 = vpop.permute.xlu0 %1273
        %1275 = vrot.lane.b32.xlu0 %v1222, 17
        %v1276 = vpop.permute.xlu0 %1275
        %1277 = vrot.lane.b32.xlu0 %v1221, 17
        %v1278 = vpop.permute.xlu0 %1277
        %1279 = vrot.lane.b32.xlu0 %v1220, 17
        %v1280 = vpop.permute.xlu0 %1279
        %1281 = vrot.lane.b32.xlu0 %v1219, 17
        %v1282 = vpop.permute.xlu0 %1281
        %v1299 = vsub.f32 %v1234, %v1252
        %v1300 = vsub.f32 %v1233, %v1254
        %v1301 = vsub.f32 %v1232, %v1256
        %v1302 = vsub.f32 %v1231, %v1258
        %v1303 = vsub.f32 %v1230, %v1260
        %v1304 = vsub.f32 %v1229, %v1262
        %v1305 = vsub.f32 %v1228, %v1264
        %v1306 = vsub.f32 %v1227, %v1266
        %v1307 = vsub.f32 %v1226, %v1268
        %v1308 = vsub.f32 %v1225, %v1270
        %v1309 = vsub.f32 %v1224, %v1272
        %v1310 = vsub.f32 %v1223, %v1274
        %v1311 = vsub.f32 %v1222, %v1276
        %v1312 = vsub.f32 %v1221, %v1278
        %v1313 = vsub.f32 %v1220, %v1280
        %v1314 = vsub.f32 %v1219, %v1282
        %v1315 = vadd.s32 %v216, 4294967291
        %v1316 = vadd.s32 %v217, 4294967291
        %v1317 = vadd.s32 %v218, 4294967291
        %v1318 = vadd.s32 %v219, 4294967291
        %vm1319 = vcmp.ge.s32.totalorder %v1315, 0
        %vm1320 = vcmp.ge.s32.totalorder %v1316, 0
        %vm1321 = vcmp.ge.s32.totalorder %v1317, 0
        %vm1322 = vcmp.ge.s32.totalorder %v1318, 0
        %vm1323 = vcmp.lt.s32.totalorder %v1315, 32
        %vm1324 = vcmp.lt.s32.totalorder %v1316, 32
        %vm1325 = vcmp.lt.s32.totalorder %v1317, 32
        %vm1326 = vcmp.lt.s32.totalorder %v1318, 32
        %vm1327 = vmand %vm1319, %vm1323
        %vm1328 = vmand %vm1320, %vm1324
        %vm1329 = vmand %vm1321, %vm1325
        %vm1330 = vmand %vm1322, %vm1326
        %v1331 = vsel %vm1327, %v1299, 0.0
        %v1332 = vsel %vm1328, %v1300, 0.0
        %v1333 = vsel %vm1329, %v1301, 0.0
        %v1334 = vsel %vm1330, %v1302, 0.0
        %v1335 = vsel %vm1327, %v1303, 0.0
        %v1336 = vsel %vm1328, %v1304, 0.0
        %v1337 = vsel %vm1329, %v1305, 0.0
        %v1338 = vsel %vm1330, %v1306, 0.0
        %v1339 = vsel %vm1327, %v1307, 0.0
        %v1340 = vsel %vm1328, %v1308, 0.0
        %v1341 = vsel %vm1329, %v1309, 0.0
        %v1342 = vsel %vm1330, %v1310, 0.0
        %v1343 = vsel %vm1327, %v1311, 0.0
        %v1344 = vsel %vm1328, %v1312, 0.0
        %v1345 = vsel %vm1329, %v1313, 0.0
        %v1346 = vsel %vm1330, %v1314, 0.0
        %1363 = vrot.lane.b32.xlu0 %v1331, 124
        %v1364 = vpop.permute.xlu0 %1363
        %1365 = vrot.lane.b32.xlu0 %v1332, 124
        %v1366 = vpop.permute.xlu0 %1365
        %1367 = vrot.lane.b32.xlu0 %v1333, 124
        %v1368 = vpop.permute.xlu0 %1367
        %1369 = vrot.lane.b32.xlu0 %v1334, 124
        %v1370 = vpop.permute.xlu0 %1369
        %1371 = vrot.lane.b32.xlu0 %v1335, 124
        %v1372 = vpop.permute.xlu0 %1371
        %1373 = vrot.lane.b32.xlu0 %v1336, 124
        %v1374 = vpop.permute.xlu0 %1373
        %1375 = vrot.lane.b32.xlu0 %v1337, 124
        %v1376 = vpop.permute.xlu0 %1375
        %1377 = vrot.lane.b32.xlu0 %v1338, 124
        %v1378 = vpop.permute.xlu0 %1377
        %1379 = vrot.lane.b32.xlu0 %v1339, 124
        %v1380 = vpop.permute.xlu0 %1379
        %1381 = vrot.lane.b32.xlu0 %v1340, 124
        %v1382 = vpop.permute.xlu0 %1381
        %1383 = vrot.lane.b32.xlu0 %v1341, 124
        %v1384 = vpop.permute.xlu0 %1383
        %1385 = vrot.lane.b32.xlu0 %v1342, 124
        %v1386 = vpop.permute.xlu0 %1385
        %1387 = vrot.lane.b32.xlu0 %v1343, 124
        %v1388 = vpop.permute.xlu0 %1387
        %1389 = vrot.lane.b32.xlu0 %v1344, 124
        %v1390 = vpop.permute.xlu0 %1389
        %1391 = vrot.lane.b32.xlu0 %v1345, 124
        %v1392 = vpop.permute.xlu0 %1391
        %1393 = vrot.lane.b32.xlu0 %v1346, 124
        %v1394 = vpop.permute.xlu0 %1393
        %v1411 = vadd.f32 %v672, %v1364
        %v1412 = vadd.f32 %v673, %v1366
        %v1413 = vadd.f32 %v674, %v1368
        %v1414 = vadd.f32 %v675, %v1370
        %v1415 = vadd.f32 %v676, %v1372
        %v1416 = vadd.f32 %v677, %v1374
        %v1417 = vadd.f32 %v678, %v1376
        %v1418 = vadd.f32 %v679, %v1378
        %v1419 = vadd.f32 %v680, %v1380
        %v1420 = vadd.f32 %v681, %v1382
        %v1421 = vadd.f32 %v682, %v1384
        %v1422 = vadd.f32 %v683, %v1386
        %v1423 = vadd.f32 %v684, %v1388
        %v1424 = vadd.f32 %v685, %v1390
        %v1425 = vadd.f32 %v686, %v1392
        %v1426 = vadd.f32 %v687, %v1394
        %v1427 = vrot.slane %v304, 4
        %v1428 = vrot.slane %v307, 4
        %v1429 = vrot.slane %v312, 4
        %v1430 = vrot.slane %v315, 4
        %v1431 = vrot.slane %v320, 4
        %v1432 = vrot.slane %v323, 4
        %v1433 = vrot.slane %v328, 4
        %v1434 = vrot.slane %v331, 4
        %v1435 = vrot.slane %v336, 4
        %v1436 = vrot.slane %v339, 4
        %v1437 = vrot.slane %v344, 4
        %v1438 = vrot.slane %v347, 4
        %v1439 = vrot.slane %v352, 4
        %v1440 = vrot.slane %v355, 4
        %v1441 = vrot.slane %v360, 4
        %v1442 = vrot.slane %v363, 4
        %vm1443 = vcmp.lt.s32.totalorder %v216, 4
        %v1444 = vsel %vm1443, %v1441, %v1442
        %v1445 = vsel %vm1443, %v1440, %v1441
        %v1446 = vsel %vm1443, %v1439, %v1440
        %v1447 = vsel %vm1443, %v1438, %v1439
        %v1448 = vsel %vm1443, %v1437, %v1438
        %v1449 = vsel %vm1443, %v1436, %v1437
        %v1450 = vsel %vm1443, %v1435, %v1436
        %v1451 = vsel %vm1443, %v1434, %v1435
        %v1452 = vsel %vm1443, %v1433, %v1434
        %v1453 = vsel %vm1443, %v1432, %v1433
        %v1454 = vsel %vm1443, %v1431, %v1432
        %v1455 = vsel %vm1443, %v1430, %v1431
        %v1456 = vsel %vm1443, %v1429, %v1430
        %v1457 = vsel %vm1443, %v1428, %v1429
        %v1458 = vsel %vm1443, %v1427, %v1428
        %v1459 = vsel %vm1443, %v1442, %v1427
        %1476 = vrot.lane.b32.xlu0 %v1459, 19
        %v1477 = vpop.permute.xlu0 %1476
        %1478 = vrot.lane.b32.xlu0 %v1458, 19
        %v1479 = vpop.permute.xlu0 %1478
        %1480 = vrot.lane.b32.xlu0 %v1457, 19
        %v1481 = vpop.permute.xlu0 %1480
        %1482 = vrot.lane.b32.xlu0 %v1456, 19
        %v1483 = vpop.permute.xlu0 %1482
        %1484 = vrot.lane.b32.xlu0 %v1455, 19
        %v1485 = vpop.permute.xlu0 %1484
        %1486 = vrot.lane.b32.xlu0 %v1454, 19
        %v1487 = vpop.permute.xlu0 %1486
        %1488 = vrot.lane.b32.xlu0 %v1453, 19
        %v1489 = vpop.permute.xlu0 %1488
        %1490 = vrot.lane.b32.xlu0 %v1452, 19
        %v1491 = vpop.permute.xlu0 %1490
        %1492 = vrot.lane.b32.xlu0 %v1451, 19
        %v1493 = vpop.permute.xlu0 %1492
        %1494 = vrot.lane.b32.xlu0 %v1450, 19
        %v1495 = vpop.permute.xlu0 %1494
        %1496 = vrot.lane.b32.xlu0 %v1449, 19
        %v1497 = vpop.permute.xlu0 %1496
        %1498 = vrot.lane.b32.xlu0 %v1448, 19
        %v1499 = vpop.permute.xlu0 %1498
        %1500 = vrot.lane.b32.xlu0 %v1447, 19
        %v1501 = vpop.permute.xlu0 %1500
        %1502 = vrot.lane.b32.xlu0 %v1446, 19
        %v1503 = vpop.permute.xlu0 %1502
        %1504 = vrot.lane.b32.xlu0 %v1445, 19
        %v1505 = vpop.permute.xlu0 %1504
        %1506 = vrot.lane.b32.xlu0 %v1444, 19
        %v1507 = vpop.permute.xlu0 %1506
        %v1524 = vsub.f32 %v1459, %v1477
        %v1525 = vsub.f32 %v1458, %v1479
        %v1526 = vsub.f32 %v1457, %v1481
        %v1527 = vsub.f32 %v1456, %v1483
        %v1528 = vsub.f32 %v1455, %v1485
        %v1529 = vsub.f32 %v1454, %v1487
        %v1530 = vsub.f32 %v1453, %v1489
        %v1531 = vsub.f32 %v1452, %v1491
        %v1532 = vsub.f32 %v1451, %v1493
        %v1533 = vsub.f32 %v1450, %v1495
        %v1534 = vsub.f32 %v1449, %v1497
        %v1535 = vsub.f32 %v1448, %v1499
        %v1536 = vsub.f32 %v1447, %v1501
        %v1537 = vsub.f32 %v1446, %v1503
        %v1538 = vsub.f32 %v1445, %v1505
        %v1539 = vsub.f32 %v1444, %v1507
        %v1540 = vadd.s32 %v216, 4294967292
        %v1541 = vadd.s32 %v217, 4294967292
        %v1542 = vadd.s32 %v218, 4294967292
        %v1543 = vadd.s32 %v219, 4294967292
        %vm1544 = vcmp.ge.s32.totalorder %v1540, 0
        %vm1545 = vcmp.ge.s32.totalorder %v1541, 0
        %vm1546 = vcmp.ge.s32.totalorder %v1542, 0
        %vm1547 = vcmp.ge.s32.totalorder %v1543, 0
        %vm1548 = vcmp.lt.s32.totalorder %v1540, 32
        %vm1549 = vcmp.lt.s32.totalorder %v1541, 32
        %vm1550 = vcmp.lt.s32.totalorder %v1542, 32
        %vm1551 = vcmp.lt.s32.totalorder %v1543, 32
        %vm1552 = vmand %vm1544, %vm1548
        %vm1553 = vmand %vm1545, %vm1549
        %vm1554 = vmand %vm1546, %vm1550
        %vm1555 = vmand %vm1547, %vm1551
        %v1556 = vsel %vm1552, %v1524, 0.0
        %v1557 = vsel %vm1553, %v1525, 0.0
        %v1558 = vsel %vm1554, %v1526, 0.0
        %v1559 = vsel %vm1555, %v1527, 0.0
        %v1560 = vsel %vm1552, %v1528, 0.0
        %v1561 = vsel %vm1553, %v1529, 0.0
        %v1562 = vsel %vm1554, %v1530, 0.0
        %v1563 = vsel %vm1555, %v1531, 0.0
        %v1564 = vsel %vm1552, %v1532, 0.0
        %v1565 = vsel %vm1553, %v1533, 0.0
        %v1566 = vsel %vm1554, %v1534, 0.0
        %v1567 = vsel %vm1555, %v1535, 0.0
        %v1568 = vsel %vm1552, %v1536, 0.0
        %v1569 = vsel %vm1553, %v1537, 0.0
        %v1570 = vsel %vm1554, %v1538, 0.0
        %v1571 = vsel %vm1555, %v1539, 0.0
        %1588 = vrot.lane.b32.xlu0 %v1556, 125
        %v1589 = vpop.permute.xlu0 %1588
        %1590 = vrot.lane.b32.xlu0 %v1557, 125
        %v1591 = vpop.permute.xlu0 %1590
        %1592 = vrot.lane.b32.xlu0 %v1558, 125
        %v1593 = vpop.permute.xlu0 %1592
        %1594 = vrot.lane.b32.xlu0 %v1559, 125
        %v1595 = vpop.permute.xlu0 %1594
        %1596 = vrot.lane.b32.xlu0 %v1560, 125
        %v1597 = vpop.permute.xlu0 %1596
        %1598 = vrot.lane.b32.xlu0 %v1561, 125
        %v1599 = vpop.permute.xlu0 %1598
        %1600 = vrot.lane.b32.xlu0 %v1562, 125
        %v1601 = vpop.permute.xlu0 %1600
        %1602 = vrot.lane.b32.xlu0 %v1563, 125
        %v1603 = vpop.permute.xlu0 %1602
        %1604 = vrot.lane.b32.xlu0 %v1564, 125
        %v1605 = vpop.permute.xlu0 %1604
        %1606 = vrot.lane.b32.xlu0 %v1565, 125
        %v1607 = vpop.permute.xlu0 %1606
        %1608 = vrot.lane.b32.xlu0 %v1566, 125
        %v1609 = vpop.permute.xlu0 %1608
        %1610 = vrot.lane.b32.xlu0 %v1567, 125
        %v1611 = vpop.permute.xlu0 %1610
        %1612 = vrot.lane.b32.xlu0 %v1568, 125
        %v1613 = vpop.permute.xlu0 %1612
        %1614 = vrot.lane.b32.xlu0 %v1569, 125
        %v1615 = vpop.permute.xlu0 %1614
        %1616 = vrot.lane.b32.xlu0 %v1570, 125
        %v1617 = vpop.permute.xlu0 %1616
        %1618 = vrot.lane.b32.xlu0 %v1571, 125
        %v1619 = vpop.permute.xlu0 %1618
        %v1636 = vadd.f32 %v800, %v1589
        %v1637 = vadd.f32 %v801, %v1591
        %v1638 = vadd.f32 %v802, %v1593
        %v1639 = vadd.f32 %v803, %v1595
        %v1640 = vadd.f32 %v804, %v1597
        %v1641 = vadd.f32 %v805, %v1599
        %v1642 = vadd.f32 %v806, %v1601
        %v1643 = vadd.f32 %v807, %v1603
        %v1644 = vadd.f32 %v808, %v1605
        %v1645 = vadd.f32 %v809, %v1607
        %v1646 = vadd.f32 %v810, %v1609
        %v1647 = vadd.f32 %v811, %v1611
        %v1648 = vadd.f32 %v812, %v1613
        %v1649 = vadd.f32 %v813, %v1615
        %v1650 = vadd.f32 %v814, %v1617
        %v1651 = vadd.f32 %v815, %v1619
        %v1652 = vrot.slane %v304, 5
        %v1653 = vrot.slane %v307, 5
        %v1654 = vrot.slane %v312, 5
        %v1655 = vrot.slane %v315, 5
        %v1656 = vrot.slane %v320, 5
        %v1657 = vrot.slane %v323, 5
        %v1658 = vrot.slane %v328, 5
        %v1659 = vrot.slane %v331, 5
        %v1660 = vrot.slane %v336, 5
        %v1661 = vrot.slane %v339, 5
        %v1662 = vrot.slane %v344, 5
        %v1663 = vrot.slane %v347, 5
        %v1664 = vrot.slane %v352, 5
        %v1665 = vrot.slane %v355, 5
        %v1666 = vrot.slane %v360, 5
        %v1667 = vrot.slane %v363, 5
        %vm1668 = vcmp.lt.s32.totalorder %v216, 3
        %v1669 = vsel %vm1668, %v1666, %v1667
        %v1670 = vsel %vm1668, %v1665, %v1666
        %v1671 = vsel %vm1668, %v1664, %v1665
        %v1672 = vsel %vm1668, %v1663, %v1664
        %v1673 = vsel %vm1668, %v1662, %v1663
        %v1674 = vsel %vm1668, %v1661, %v1662
        %v1675 = vsel %vm1668, %v1660, %v1661
        %v1676 = vsel %vm1668, %v1659, %v1660
        %v1677 = vsel %vm1668, %v1658, %v1659
        %v1678 = vsel %vm1668, %v1657, %v1658
        %v1679 = vsel %vm1668, %v1656, %v1657
        %v1680 = vsel %vm1668, %v1655, %v1656
        %v1681 = vsel %vm1668, %v1654, %v1655
        %v1682 = vsel %vm1668, %v1653, %v1654
        %v1683 = vsel %vm1668, %v1652, %v1653
        %v1684 = vsel %vm1668, %v1667, %v1652
        %1701 = vrot.lane.b32.xlu0 %v1684, 19
        %v1702 = vpop.permute.xlu0 %1701
        %1703 = vrot.lane.b32.xlu0 %v1683, 19
        %v1704 = vpop.permute.xlu0 %1703
        %1705 = vrot.lane.b32.xlu0 %v1682, 19
        %v1706 = vpop.permute.xlu0 %1705
        %1707 = vrot.lane.b32.xlu0 %v1681, 19
        %v1708 = vpop.permute.xlu0 %1707
        %1709 = vrot.lane.b32.xlu0 %v1680, 19
        %v1710 = vpop.permute.xlu0 %1709
        %1711 = vrot.lane.b32.xlu0 %v1679, 19
        %v1712 = vpop.permute.xlu0 %1711
        %1713 = vrot.lane.b32.xlu0 %v1678, 19
        %v1714 = vpop.permute.xlu0 %1713
        %1715 = vrot.lane.b32.xlu0 %v1677, 19
        %v1716 = vpop.permute.xlu0 %1715
        %1717 = vrot.lane.b32.xlu0 %v1676, 19
        %v1718 = vpop.permute.xlu0 %1717
        %1719 = vrot.lane.b32.xlu0 %v1675, 19
        %v1720 = vpop.permute.xlu0 %1719
        %1721 = vrot.lane.b32.xlu0 %v1674, 19
        %v1722 = vpop.permute.xlu0 %1721
        %1723 = vrot.lane.b32.xlu0 %v1673, 19
        %v1724 = vpop.permute.xlu0 %1723
        %1725 = vrot.lane.b32.xlu0 %v1672, 19
        %v1726 = vpop.permute.xlu0 %1725
        %1727 = vrot.lane.b32.xlu0 %v1671, 19
        %v1728 = vpop.permute.xlu0 %1727
        %1729 = vrot.lane.b32.xlu0 %v1670, 19
        %v1730 = vpop.permute.xlu0 %1729
        %1731 = vrot.lane.b32.xlu0 %v1669, 19
        %v1732 = vpop.permute.xlu0 %1731
        %v1749 = vsub.f32 %v1684, %v1702
        %v1750 = vsub.f32 %v1683, %v1704
        %v1751 = vsub.f32 %v1682, %v1706
        %v1752 = vsub.f32 %v1681, %v1708
        %v1753 = vsub.f32 %v1680, %v1710
        %v1754 = vsub.f32 %v1679, %v1712
        %v1755 = vsub.f32 %v1678, %v1714
        %v1756 = vsub.f32 %v1677, %v1716
        %v1757 = vsub.f32 %v1676, %v1718
        %v1758 = vsub.f32 %v1675, %v1720
        %v1759 = vsub.f32 %v1674, %v1722
        %v1760 = vsub.f32 %v1673, %v1724
        %v1761 = vsub.f32 %v1672, %v1726
        %v1762 = vsub.f32 %v1671, %v1728
        %v1763 = vsub.f32 %v1670, %v1730
        %v1764 = vsub.f32 %v1669, %v1732
        %v1765 = vadd.s32 %v216, 4294967293
        %v1766 = vadd.s32 %v217, 4294967293
        %v1767 = vadd.s32 %v218, 4294967293
        %v1768 = vadd.s32 %v219, 4294967293
        %vm1769 = vcmp.ge.s32.totalorder %v1765, 0
        %vm1770 = vcmp.ge.s32.totalorder %v1766, 0
        %vm1771 = vcmp.ge.s32.totalorder %v1767, 0
        %vm1772 = vcmp.ge.s32.totalorder %v1768, 0
        %vm1773 = vcmp.lt.s32.totalorder %v1765, 32
        %vm1774 = vcmp.lt.s32.totalorder %v1766, 32
        %vm1775 = vcmp.lt.s32.totalorder %v1767, 32
        %vm1776 = vcmp.lt.s32.totalorder %v1768, 32
        %vm1777 = vmand %vm1769, %vm1773
        %vm1778 = vmand %vm1770, %vm1774
        %vm1779 = vmand %vm1771, %vm1775
        %vm1780 = vmand %vm1772, %vm1776
        %v1781 = vsel %vm1777, %v1749, 0.0
        %v1782 = vsel %vm1778, %v1750, 0.0
        %v1783 = vsel %vm1779, %v1751, 0.0
        %v1784 = vsel %vm1780, %v1752, 0.0
        %v1785 = vsel %vm1777, %v1753, 0.0
        %v1786 = vsel %vm1778, %v1754, 0.0
        %v1787 = vsel %vm1779, %v1755, 0.0
        %v1788 = vsel %vm1780, %v1756, 0.0
        %v1789 = vsel %vm1777, %v1757, 0.0
        %v1790 = vsel %vm1778, %v1758, 0.0
        %v1791 = vsel %vm1779, %v1759, 0.0
        %v1792 = vsel %vm1780, %v1760, 0.0
        %v1793 = vsel %vm1777, %v1761, 0.0
        %v1794 = vsel %vm1778, %v1762, 0.0
        %v1795 = vsel %vm1779, %v1763, 0.0
        %v1796 = vsel %vm1780, %v1764, 0.0
        %1813 = vrot.lane.b32.xlu0 %v1781, 126
        %v1814 = vpop.permute.xlu0 %1813
        %1815 = vrot.lane.b32.xlu0 %v1782, 126
        %v1816 = vpop.permute.xlu0 %1815
        %1817 = vrot.lane.b32.xlu0 %v1783, 126
        %v1818 = vpop.permute.xlu0 %1817
        %1819 = vrot.lane.b32.xlu0 %v1784, 126
        %v1820 = vpop.permute.xlu0 %1819
        %1821 = vrot.lane.b32.xlu0 %v1785, 126
        %v1822 = vpop.permute.xlu0 %1821
        %1823 = vrot.lane.b32.xlu0 %v1786, 126
        %v1824 = vpop.permute.xlu0 %1823
        %1825 = vrot.lane.b32.xlu0 %v1787, 126
        %v1826 = vpop.permute.xlu0 %1825
        %1827 = vrot.lane.b32.xlu0 %v1788, 126
        %v1828 = vpop.permute.xlu0 %1827
        %1829 = vrot.lane.b32.xlu0 %v1789, 126
        %v1830 = vpop.permute.xlu0 %1829
        %1831 = vrot.lane.b32.xlu0 %v1790, 126
        %v1832 = vpop.permute.xlu0 %1831
        %1833 = vrot.lane.b32.xlu0 %v1791, 126
        %v1834 = vpop.permute.xlu0 %1833
        %1835 = vrot.lane.b32.xlu0 %v1792, 126
        %v1836 = vpop.permute.xlu0 %1835
        %1837 = vrot.lane.b32.xlu0 %v1793, 126
        %v1838 = vpop.permute.xlu0 %1837
        %1839 = vrot.lane.b32.xlu0 %v1794, 126
        %v1840 = vpop.permute.xlu0 %1839
        %1841 = vrot.lane.b32.xlu0 %v1795, 126
        %v1842 = vpop.permute.xlu0 %1841
        %1843 = vrot.lane.b32.xlu0 %v1796, 126
        %v1844 = vpop.permute.xlu0 %1843
        %v1861 = vadd.f32 %v961, %v1814
        %v1862 = vadd.f32 %v962, %v1816
        %v1863 = vadd.f32 %v963, %v1818
        %v1864 = vadd.f32 %v964, %v1820
        %v1865 = vadd.f32 %v965, %v1822
        %v1866 = vadd.f32 %v966, %v1824
        %v1867 = vadd.f32 %v967, %v1826
        %v1868 = vadd.f32 %v968, %v1828
        %v1869 = vadd.f32 %v969, %v1830
        %v1870 = vadd.f32 %v970, %v1832
        %v1871 = vadd.f32 %v971, %v1834
        %v1872 = vadd.f32 %v972, %v1836
        %v1873 = vadd.f32 %v973, %v1838
        %v1874 = vadd.f32 %v974, %v1840
        %v1875 = vadd.f32 %v975, %v1842
        %v1876 = vadd.f32 %v976, %v1844
        %1877 = vrot.lane.b32.xlu0 %v398, 19
        %v1878 = vpop.permute.xlu0 %1877
        %1879 = vrot.lane.b32.xlu0 %v397, 19
        %v1880 = vpop.permute.xlu0 %1879
        %1881 = vrot.lane.b32.xlu0 %v396, 19
        %v1882 = vpop.permute.xlu0 %1881
        %1883 = vrot.lane.b32.xlu0 %v395, 19
        %v1884 = vpop.permute.xlu0 %1883
        %1885 = vrot.lane.b32.xlu0 %v394, 19
        %v1886 = vpop.permute.xlu0 %1885
        %1887 = vrot.lane.b32.xlu0 %v393, 19
        %v1888 = vpop.permute.xlu0 %1887
        %1889 = vrot.lane.b32.xlu0 %v392, 19
        %v1890 = vpop.permute.xlu0 %1889
        %1891 = vrot.lane.b32.xlu0 %v391, 19
        %v1892 = vpop.permute.xlu0 %1891
        %1893 = vrot.lane.b32.xlu0 %v390, 19
        %v1894 = vpop.permute.xlu0 %1893
        %1895 = vrot.lane.b32.xlu0 %v389, 19
        %v1896 = vpop.permute.xlu0 %1895
        %1897 = vrot.lane.b32.xlu0 %v388, 19
        %v1898 = vpop.permute.xlu0 %1897
        %1899 = vrot.lane.b32.xlu0 %v387, 19
        %v1900 = vpop.permute.xlu0 %1899
        %1901 = vrot.lane.b32.xlu0 %v386, 19
        %v1902 = vpop.permute.xlu0 %1901
        %1903 = vrot.lane.b32.xlu0 %v385, 19
        %v1904 = vpop.permute.xlu0 %1903
        %1905 = vrot.lane.b32.xlu0 %v384, 19
        %v1906 = vpop.permute.xlu0 %1905
        %1907 = vrot.lane.b32.xlu0 %v383, 19
        %v1908 = vpop.permute.xlu0 %1907
        %v1925 = vsub.f32 %v398, %v1878
        %v1926 = vsub.f32 %v397, %v1880
        %v1927 = vsub.f32 %v396, %v1882
        %v1928 = vsub.f32 %v395, %v1884
        %v1929 = vsub.f32 %v394, %v1886
        %v1930 = vsub.f32 %v393, %v1888
        %v1931 = vsub.f32 %v392, %v1890
        %v1932 = vsub.f32 %v391, %v1892
        %v1933 = vsub.f32 %v390, %v1894
        %v1934 = vsub.f32 %v389, %v1896
        %v1935 = vsub.f32 %v388, %v1898
        %v1936 = vsub.f32 %v387, %v1900
        %v1937 = vsub.f32 %v386, %v1902
        %v1938 = vsub.f32 %v385, %v1904
        %v1939 = vsub.f32 %v384, %v1906
        %v1940 = vsub.f32 %v383, %v1908
        %v1941 = vadd.s32 %v216, 4294967294
        %v1942 = vadd.s32 %v217, 4294967294
        %v1943 = vadd.s32 %v218, 4294967294
        %v1944 = vadd.s32 %v219, 4294967294
        %vm1945 = vcmp.ge.s32.totalorder %v1941, 0
        %vm1946 = vcmp.ge.s32.totalorder %v1942, 0
        %vm1947 = vcmp.ge.s32.totalorder %v1943, 0
        %vm1948 = vcmp.ge.s32.totalorder %v1944, 0
        %vm1949 = vcmp.lt.s32.totalorder %v1941, 32
        %vm1950 = vcmp.lt.s32.totalorder %v1942, 32
        %vm1951 = vcmp.lt.s32.totalorder %v1943, 32
        %vm1952 = vcmp.lt.s32.totalorder %v1944, 32
        %vm1953 = vmand %vm1945, %vm1949
        %vm1954 = vmand %vm1946, %vm1950
        %vm1955 = vmand %vm1947, %vm1951
        %vm1956 = vmand %vm1948, %vm1952
        %v1957 = vsel %vm1953, %v1925, 0.0
        %v1958 = vsel %vm1954, %v1926, 0.0
        %v1959 = vsel %vm1955, %v1927, 0.0
        %v1960 = vsel %vm1956, %v1928, 0.0
        %v1961 = vsel %vm1953, %v1929, 0.0
        %v1962 = vsel %vm1954, %v1930, 0.0
        %v1963 = vsel %vm1955, %v1931, 0.0
        %v1964 = vsel %vm1956, %v1932, 0.0
        %v1965 = vsel %vm1953, %v1933, 0.0
        %v1966 = vsel %vm1954, %v1934, 0.0
        %v1967 = vsel %vm1955, %v1935, 0.0
        %v1968 = vsel %vm1956, %v1936, 0.0
        %v1969 = vsel %vm1953, %v1937, 0.0
        %v1970 = vsel %vm1954, %v1938, 0.0
        %v1971 = vsel %vm1955, %v1939, 0.0
        %v1972 = vsel %vm1956, %v1940, 0.0
        %1989 = vrot.lane.b32.xlu0 %v1957, 119
        %v1990 = vpop.permute.xlu0 %1989
        %1991 = vrot.lane.b32.xlu0 %v1958, 119
        %v1992 = vpop.permute.xlu0 %1991
        %1993 = vrot.lane.b32.xlu0 %v1959, 119
        %v1994 = vpop.permute.xlu0 %1993
        %1995 = vrot.lane.b32.xlu0 %v1960, 119
        %v1996 = vpop.permute.xlu0 %1995
        %1997 = vrot.lane.b32.xlu0 %v1961, 119
        %v1998 = vpop.permute.xlu0 %1997
        %1999 = vrot.lane.b32.xlu0 %v1962, 119
        %v2000 = vpop.permute.xlu0 %1999
        %2001 = vrot.lane.b32.xlu0 %v1963, 119
        %v2002 = vpop.permute.xlu0 %2001
        %2003 = vrot.lane.b32.xlu0 %v1964, 119
        %v2004 = vpop.permute.xlu0 %2003
        %2005 = vrot.lane.b32.xlu0 %v1965, 119
        %v2006 = vpop.permute.xlu0 %2005
        %2007 = vrot.lane.b32.xlu0 %v1966, 119
        %v2008 = vpop.permute.xlu0 %2007
        %2009 = vrot.lane.b32.xlu0 %v1967, 119
        %v2010 = vpop.permute.xlu0 %2009
        %2011 = vrot.lane.b32.xlu0 %v1968, 119
        %v2012 = vpop.permute.xlu0 %2011
        %2013 = vrot.lane.b32.xlu0 %v1969, 119
        %v2014 = vpop.permute.xlu0 %2013
        %2015 = vrot.lane.b32.xlu0 %v1970, 119
        %v2016 = vpop.permute.xlu0 %2015
        %2017 = vrot.lane.b32.xlu0 %v1971, 119
        %v2018 = vpop.permute.xlu0 %2017
        %2019 = vrot.lane.b32.xlu0 %v1972, 119
        %v2020 = vpop.permute.xlu0 %2019
        %v2037 = vadd.f32 %v1186, %v1990
        %v2038 = vadd.f32 %v1187, %v1992
        %v2039 = vadd.f32 %v1188, %v1994
        %v2040 = vadd.f32 %v1189, %v1996
        %v2041 = vadd.f32 %v1190, %v1998
        %v2042 = vadd.f32 %v1191, %v2000
        %v2043 = vadd.f32 %v1192, %v2002
        %v2044 = vadd.f32 %v1193, %v2004
        %v2045 = vadd.f32 %v1194, %v2006
        %v2046 = vadd.f32 %v1195, %v2008
        %v2047 = vadd.f32 %v1196, %v2010
        %v2048 = vadd.f32 %v1197, %v2012
        %v2049 = vadd.f32 %v1198, %v2014
        %v2050 = vadd.f32 %v1199, %v2016
        %v2051 = vadd.f32 %v1200, %v2018
        %v2052 = vadd.f32 %v1201, %v2020
        %2053 = vrot.lane.b32.xlu0 %v559, 19
        %v2054 = vpop.permute.xlu0 %2053
        %2055 = vrot.lane.b32.xlu0 %v558, 19
        %v2056 = vpop.permute.xlu0 %2055
        %2057 = vrot.lane.b32.xlu0 %v557, 19
        %v2058 = vpop.permute.xlu0 %2057
        %2059 = vrot.lane.b32.xlu0 %v556, 19
        %v2060 = vpop.permute.xlu0 %2059
        %2061 = vrot.lane.b32.xlu0 %v555, 19
        %v2062 = vpop.permute.xlu0 %2061
        %2063 = vrot.lane.b32.xlu0 %v554, 19
        %v2064 = vpop.permute.xlu0 %2063
        %2065 = vrot.lane.b32.xlu0 %v553, 19
        %v2066 = vpop.permute.xlu0 %2065
        %2067 = vrot.lane.b32.xlu0 %v552, 19
        %v2068 = vpop.permute.xlu0 %2067
        %2069 = vrot.lane.b32.xlu0 %v551, 19
        %v2070 = vpop.permute.xlu0 %2069
        %2071 = vrot.lane.b32.xlu0 %v550, 19
        %v2072 = vpop.permute.xlu0 %2071
        %2073 = vrot.lane.b32.xlu0 %v549, 19
        %v2074 = vpop.permute.xlu0 %2073
        %2075 = vrot.lane.b32.xlu0 %v548, 19
        %v2076 = vpop.permute.xlu0 %2075
        %2077 = vrot.lane.b32.xlu0 %v547, 19
        %v2078 = vpop.permute.xlu0 %2077
        %2079 = vrot.lane.b32.xlu0 %v546, 19
        %v2080 = vpop.permute.xlu0 %2079
        %2081 = vrot.lane.b32.xlu0 %v545, 19
        %v2082 = vpop.permute.xlu0 %2081
        %2083 = vrot.lane.b32.xlu0 %v544, 19
        %v2084 = vpop.permute.xlu0 %2083
        %v2101 = vsub.f32 %v559, %v2054
        %v2102 = vsub.f32 %v558, %v2056
        %v2103 = vsub.f32 %v557, %v2058
        %v2104 = vsub.f32 %v556, %v2060
        %v2105 = vsub.f32 %v555, %v2062
        %v2106 = vsub.f32 %v554, %v2064
        %v2107 = vsub.f32 %v553, %v2066
        %v2108 = vsub.f32 %v552, %v2068
        %v2109 = vsub.f32 %v551, %v2070
        %v2110 = vsub.f32 %v550, %v2072
        %v2111 = vsub.f32 %v549, %v2074
        %v2112 = vsub.f32 %v548, %v2076
        %v2113 = vsub.f32 %v547, %v2078
        %v2114 = vsub.f32 %v546, %v2080
        %v2115 = vsub.f32 %v545, %v2082
        %v2116 = vsub.f32 %v544, %v2084
        %v2117 = vadd.s32 %v216, 4294967295
        %v2118 = vadd.s32 %v217, 4294967295
        %v2119 = vadd.s32 %v218, 4294967295
        %v2120 = vadd.s32 %v219, 4294967295
        %vm2121 = vcmp.ge.s32.totalorder %v2117, 0
        %vm2122 = vcmp.ge.s32.totalorder %v2118, 0
        %vm2123 = vcmp.ge.s32.totalorder %v2119, 0
        %vm2124 = vcmp.ge.s32.totalorder %v2120, 0
        %vm2125 = vcmp.lt.s32.totalorder %v2117, 32
        %vm2126 = vcmp.lt.s32.totalorder %v2118, 32
        %vm2127 = vcmp.lt.s32.totalorder %v2119, 32
        %vm2128 = vcmp.lt.s32.totalorder %v2120, 32
        %vm2129 = vmand %vm2121, %vm2125
        %vm2130 = vmand %vm2122, %vm2126
        %vm2131 = vmand %vm2123, %vm2127
        %vm2132 = vmand %vm2124, %vm2128
        %v2133 = vsel %vm2129, %v2101, 0.0
        %v2134 = vsel %vm2130, %v2102, 0.0
        %v2135 = vsel %vm2131, %v2103, 0.0
        %v2136 = vsel %vm2132, %v2104, 0.0
        %v2137 = vsel %vm2129, %v2105, 0.0
        %v2138 = vsel %vm2130, %v2106, 0.0
        %v2139 = vsel %vm2131, %v2107, 0.0
        %v2140 = vsel %vm2132, %v2108, 0.0
        %v2141 = vsel %vm2129, %v2109, 0.0
        %v2142 = vsel %vm2130, %v2110, 0.0
        %v2143 = vsel %vm2131, %v2111, 0.0
        %v2144 = vsel %vm2132, %v2112, 0.0
        %v2145 = vsel %vm2129, %v2113, 0.0
        %v2146 = vsel %vm2130, %v2114, 0.0
        %v2147 = vsel %vm2131, %v2115, 0.0
        %v2148 = vsel %vm2132, %v2116, 0.0
        %2165 = vrot.lane.b32.xlu0 %v2133, 123
        %v2166 = vpop.permute.xlu0 %2165
        %2167 = vrot.lane.b32.xlu0 %v2134, 123
        %v2168 = vpop.permute.xlu0 %2167
        %2169 = vrot.lane.b32.xlu0 %v2135, 123
        %v2170 = vpop.permute.xlu0 %2169
        %2171 = vrot.lane.b32.xlu0 %v2136, 123
        %v2172 = vpop.permute.xlu0 %2171
        %2173 = vrot.lane.b32.xlu0 %v2137, 123
        %v2174 = vpop.permute.xlu0 %2173
        %2175 = vrot.lane.b32.xlu0 %v2138, 123
        %v2176 = vpop.permute.xlu0 %2175
        %2177 = vrot.lane.b32.xlu0 %v2139, 123
        %v2178 = vpop.permute.xlu0 %2177
        %2179 = vrot.lane.b32.xlu0 %v2140, 123
        %v2180 = vpop.permute.xlu0 %2179
        %2181 = vrot.lane.b32.xlu0 %v2141, 123
        %v2182 = vpop.permute.xlu0 %2181
        %2183 = vrot.lane.b32.xlu0 %v2142, 123
        %v2184 = vpop.permute.xlu0 %2183
        %2185 = vrot.lane.b32.xlu0 %v2143, 123
        %v2186 = vpop.permute.xlu0 %2185
        %2187 = vrot.lane.b32.xlu0 %v2144, 123
        %v2188 = vpop.permute.xlu0 %2187
        %2189 = vrot.lane.b32.xlu0 %v2145, 123
        %v2190 = vpop.permute.xlu0 %2189
        %2191 = vrot.lane.b32.xlu0 %v2146, 123
        %v2192 = vpop.permute.xlu0 %2191
        %2193 = vrot.lane.b32.xlu0 %v2147, 123
        %v2194 = vpop.permute.xlu0 %2193
        %2195 = vrot.lane.b32.xlu0 %v2148, 123
        %v2196 = vpop.permute.xlu0 %2195
        %v2213 = vadd.f32 %v1411, %v2166
        %v2214 = vadd.f32 %v1412, %v2168
        %v2215 = vadd.f32 %v1413, %v2170
        %v2216 = vadd.f32 %v1414, %v2172
        %v2217 = vadd.f32 %v1415, %v2174
        %v2218 = vadd.f32 %v1416, %v2176
        %v2219 = vadd.f32 %v1417, %v2178
        %v2220 = vadd.f32 %v1418, %v2180
        %v2221 = vadd.f32 %v1419, %v2182
        %v2222 = vadd.f32 %v1420, %v2184
        %v2223 = vadd.f32 %v1421, %v2186
        %v2224 = vadd.f32 %v1422, %v2188
        %v2225 = vadd.f32 %v1423, %v2190
        %v2226 = vadd.f32 %v1424, %v2192
        %v2227 = vadd.f32 %v1425, %v2194
        %v2228 = vadd.f32 %v1426, %v2196
        %2229 = vrot.lane.b32.xlu0 %v304, 21
        %v2230 = vpop.permute.xlu0 %2229
        %2231 = vrot.lane.b32.xlu0 %v307, 21
        %v2232 = vpop.permute.xlu0 %2231
        %2233 = vrot.lane.b32.xlu0 %v312, 21
        %v2234 = vpop.permute.xlu0 %2233
        %2235 = vrot.lane.b32.xlu0 %v315, 21
        %v2236 = vpop.permute.xlu0 %2235
        %2237 = vrot.lane.b32.xlu0 %v320, 21
        %v2238 = vpop.permute.xlu0 %2237
        %2239 = vrot.lane.b32.xlu0 %v323, 21
        %v2240 = vpop.permute.xlu0 %2239
        %2241 = vrot.lane.b32.xlu0 %v328, 21
        %v2242 = vpop.permute.xlu0 %2241
        %2243 = vrot.lane.b32.xlu0 %v331, 21
        %v2244 = vpop.permute.xlu0 %2243
        %2245 = vrot.lane.b32.xlu0 %v336, 21
        %v2246 = vpop.permute.xlu0 %2245
        %2247 = vrot.lane.b32.xlu0 %v339, 21
        %v2248 = vpop.permute.xlu0 %2247
        %2249 = vrot.lane.b32.xlu0 %v344, 21
        %v2250 = vpop.permute.xlu0 %2249
        %2251 = vrot.lane.b32.xlu0 %v347, 21
        %v2252 = vpop.permute.xlu0 %2251
        %2253 = vrot.lane.b32.xlu0 %v352, 21
        %v2254 = vpop.permute.xlu0 %2253
        %2255 = vrot.lane.b32.xlu0 %v355, 21
        %v2256 = vpop.permute.xlu0 %2255
        %2257 = vrot.lane.b32.xlu0 %v360, 21
        %v2258 = vpop.permute.xlu0 %2257
        %2259 = vrot.lane.b32.xlu0 %v363, 21
        %v2260 = vpop.permute.xlu0 %2259
        %v2277 = vsub.f32 %v304, %v2230
        %v2278 = vsub.f32 %v307, %v2232
        %v2279 = vsub.f32 %v312, %v2234
        %v2280 = vsub.f32 %v315, %v2236
        %v2281 = vsub.f32 %v320, %v2238
        %v2282 = vsub.f32 %v323, %v2240
        %v2283 = vsub.f32 %v328, %v2242
        %v2284 = vsub.f32 %v331, %v2244
        %v2285 = vsub.f32 %v336, %v2246
        %v2286 = vsub.f32 %v339, %v2248
        %v2287 = vsub.f32 %v344, %v2250
        %v2288 = vsub.f32 %v347, %v2252
        %v2289 = vsub.f32 %v352, %v2254
        %v2290 = vsub.f32 %v355, %v2256
        %v2291 = vsub.f32 %v360, %v2258
        %v2292 = vsub.f32 %v363, %v2260
        %vm2293 = vcmp.ge.s32.totalorder %v216, 0
        %vm2294 = vcmp.ge.s32.totalorder %v217, 0
        %vm2295 = vcmp.ge.s32.totalorder %v218, 0
        %vm2296 = vcmp.ge.s32.totalorder %v219, 0
        %vm2297 = vcmp.lt.s32.totalorder %v216, 32
        %vm2298 = vcmp.lt.s32.totalorder %v217, 32
        %vm2299 = vcmp.lt.s32.totalorder %v218, 32
        %vm2300 = vcmp.lt.s32.totalorder %v219, 32
        %vm2301 = vmand %vm2293, %vm2297
        %vm2302 = vmand %vm2294, %vm2298
        %vm2303 = vmand %vm2295, %vm2299
        %vm2304 = vmand %vm2296, %vm2300
        %v2305 = vsel %vm2301, %v2277, 0.0
        %v2306 = vsel %vm2302, %v2278, 0.0
        %v2307 = vsel %vm2303, %v2279, 0.0
        %v2308 = vsel %vm2304, %v2280, 0.0
        %v2309 = vsel %vm2301, %v2281, 0.0
        %v2310 = vsel %vm2302, %v2282, 0.0
        %v2311 = vsel %vm2303, %v2283, 0.0
        %v2312 = vsel %vm2304, %v2284, 0.0
        %v2313 = vsel %vm2301, %v2285, 0.0
        %v2314 = vsel %vm2302, %v2286, 0.0
        %v2315 = vsel %vm2303, %v2287, 0.0
        %v2316 = vsel %vm2304, %v2288, 0.0
        %v2317 = vsel %vm2301, %v2289, 0.0
        %v2318 = vsel %vm2302, %v2290, 0.0
        %v2319 = vsel %vm2303, %v2291, 0.0
        %v2320 = vsel %vm2304, %v2292, 0.0
        %2337 = vrot.lane.b32.xlu0 %v2305, 124
        %v2338 = vpop.permute.xlu0 %2337
        %2339 = vrot.lane.b32.xlu0 %v2306, 124
        %v2340 = vpop.permute.xlu0 %2339
        %2341 = vrot.lane.b32.xlu0 %v2307, 124
        %v2342 = vpop.permute.xlu0 %2341
        %2343 = vrot.lane.b32.xlu0 %v2308, 124
        %v2344 = vpop.permute.xlu0 %2343
        %2345 = vrot.lane.b32.xlu0 %v2309, 124
        %v2346 = vpop.permute.xlu0 %2345
        %2347 = vrot.lane.b32.xlu0 %v2310, 124
        %v2348 = vpop.permute.xlu0 %2347
        %2349 = vrot.lane.b32.xlu0 %v2311, 124
        %v2350 = vpop.permute.xlu0 %2349
        %2351 = vrot.lane.b32.xlu0 %v2312, 124
        %v2352 = vpop.permute.xlu0 %2351
        %2353 = vrot.lane.b32.xlu0 %v2313, 124
        %v2354 = vpop.permute.xlu0 %2353
        %2355 = vrot.lane.b32.xlu0 %v2314, 124
        %v2356 = vpop.permute.xlu0 %2355
        %2357 = vrot.lane.b32.xlu0 %v2315, 124
        %v2358 = vpop.permute.xlu0 %2357
        %2359 = vrot.lane.b32.xlu0 %v2316, 124
        %v2360 = vpop.permute.xlu0 %2359
        %2361 = vrot.lane.b32.xlu0 %v2317, 124
        %v2362 = vpop.permute.xlu0 %2361
        %2363 = vrot.lane.b32.xlu0 %v2318, 124
        %v2364 = vpop.permute.xlu0 %2363
        %2365 = vrot.lane.b32.xlu0 %v2319, 124
        %v2366 = vpop.permute.xlu0 %2365
        %2367 = vrot.lane.b32.xlu0 %v2320, 124
        %v2368 = vpop.permute.xlu0 %2367
        %v2385 = vadd.f32 %v1636, %v2338
        %v2386 = vadd.f32 %v1637, %v2340
        %v2387 = vadd.f32 %v1638, %v2342
        %v2388 = vadd.f32 %v1639, %v2344
        %v2389 = vadd.f32 %v1640, %v2346
        %v2390 = vadd.f32 %v1641, %v2348
        %v2391 = vadd.f32 %v1642, %v2350
        %v2392 = vadd.f32 %v1643, %v2352
        %v2393 = vadd.f32 %v1644, %v2354
        %v2394 = vadd.f32 %v1645, %v2356
        %v2395 = vadd.f32 %v1646, %v2358
        %v2396 = vadd.f32 %v1647, %v2360
        %v2397 = vadd.f32 %v1648, %v2362
        %v2398 = vadd.f32 %v1649, %v2364
        %v2399 = vadd.f32 %v1650, %v2366
        %v2400 = vadd.f32 %v1651, %v2368
        %2401 = vrot.lane.b32.xlu0 %v847, 19
        %v2402 = vpop.permute.xlu0 %2401
        %2403 = vrot.lane.b32.xlu0 %v846, 19
        %v2404 = vpop.permute.xlu0 %2403
        %2405 = vrot.lane.b32.xlu0 %v845, 19
        %v2406 = vpop.permute.xlu0 %2405
        %2407 = vrot.lane.b32.xlu0 %v844, 19
        %v2408 = vpop.permute.xlu0 %2407
        %2409 = vrot.lane.b32.xlu0 %v843, 19
        %v2410 = vpop.permute.xlu0 %2409
        %2411 = vrot.lane.b32.xlu0 %v842, 19
        %v2412 = vpop.permute.xlu0 %2411
        %2413 = vrot.lane.b32.xlu0 %v841, 19
        %v2414 = vpop.permute.xlu0 %2413
        %2415 = vrot.lane.b32.xlu0 %v840, 19
        %v2416 = vpop.permute.xlu0 %2415
        %2417 = vrot.lane.b32.xlu0 %v839, 19
        %v2418 = vpop.permute.xlu0 %2417
        %2419 = vrot.lane.b32.xlu0 %v838, 19
        %v2420 = vpop.permute.xlu0 %2419
        %2421 = vrot.lane.b32.xlu0 %v837, 19
        %v2422 = vpop.permute.xlu0 %2421
        %2423 = vrot.lane.b32.xlu0 %v836, 19
        %v2424 = vpop.permute.xlu0 %2423
        %2425 = vrot.lane.b32.xlu0 %v835, 19
        %v2426 = vpop.permute.xlu0 %2425
        %2427 = vrot.lane.b32.xlu0 %v834, 19
        %v2428 = vpop.permute.xlu0 %2427
        %2429 = vrot.lane.b32.xlu0 %v833, 19
        %v2430 = vpop.permute.xlu0 %2429
        %2431 = vrot.lane.b32.xlu0 %v848, 19
        %v2432 = vpop.permute.xlu0 %2431
        %v2449 = vsub.f32 %v847, %v2402
        %v2450 = vsub.f32 %v846, %v2404
        %v2451 = vsub.f32 %v845, %v2406
        %v2452 = vsub.f32 %v844, %v2408
        %v2453 = vsub.f32 %v843, %v2410
        %v2454 = vsub.f32 %v842, %v2412
        %v2455 = vsub.f32 %v841, %v2414
        %v2456 = vsub.f32 %v840, %v2416
        %v2457 = vsub.f32 %v839, %v2418
        %v2458 = vsub.f32 %v838, %v2420
        %v2459 = vsub.f32 %v837, %v2422
        %v2460 = vsub.f32 %v836, %v2424
        %v2461 = vsub.f32 %v835, %v2426
        %v2462 = vsub.f32 %v834, %v2428
        %v2463 = vsub.f32 %v833, %v2430
        %v2464 = vsub.f32 %v848, %v2432
        %v2465 = vadd.s32 %v216, 1
        %v2466 = vadd.s32 %v217, 1
        %v2467 = vadd.s32 %v218, 1
        %v2468 = vadd.s32 %v219, 1
        %vm2469 = vcmp.ge.s32.totalorder %v2465, 0
        %vm2470 = vcmp.ge.s32.totalorder %v2466, 0
        %vm2471 = vcmp.ge.s32.totalorder %v2467, 0
        %vm2472 = vcmp.ge.s32.totalorder %v2468, 0
        %vm2473 = vcmp.lt.s32.totalorder %v2465, 32
        %vm2474 = vcmp.lt.s32.totalorder %v2466, 32
        %vm2475 = vcmp.lt.s32.totalorder %v2467, 32
        %vm2476 = vcmp.lt.s32.totalorder %v2468, 32
        %vm2477 = vmand %vm2469, %vm2473
        %vm2478 = vmand %vm2470, %vm2474
        %vm2479 = vmand %vm2471, %vm2475
        %vm2480 = vmand %vm2472, %vm2476
        %v2481 = vsel %vm2477, %v2449, 0.0
        %v2482 = vsel %vm2478, %v2450, 0.0
        %v2483 = vsel %vm2479, %v2451, 0.0
        %v2484 = vsel %vm2480, %v2452, 0.0
        %v2485 = vsel %vm2477, %v2453, 0.0
        %v2486 = vsel %vm2478, %v2454, 0.0
        %v2487 = vsel %vm2479, %v2455, 0.0
        %v2488 = vsel %vm2480, %v2456, 0.0
        %v2489 = vsel %vm2477, %v2457, 0.0
        %v2490 = vsel %vm2478, %v2458, 0.0
        %v2491 = vsel %vm2479, %v2459, 0.0
        %v2492 = vsel %vm2480, %v2460, 0.0
        %v2493 = vsel %vm2477, %v2461, 0.0
        %v2494 = vsel %vm2478, %v2462, 0.0
        %v2495 = vsel %vm2479, %v2463, 0.0
        %v2496 = vsel %vm2480, %v2464, 0.0
        %2513 = vrot.lane.b32.xlu0 %v2481, 126
        %v2514 = vpop.permute.xlu0 %2513
        %2515 = vrot.lane.b32.xlu0 %v2482, 126
        %v2516 = vpop.permute.xlu0 %2515
        %2517 = vrot.lane.b32.xlu0 %v2483, 126
        %v2518 = vpop.permute.xlu0 %2517
        %2519 = vrot.lane.b32.xlu0 %v2484, 126
        %v2520 = vpop.permute.xlu0 %2519
        %2521 = vrot.lane.b32.xlu0 %v2485, 126
        %v2522 = vpop.permute.xlu0 %2521
        %2523 = vrot.lane.b32.xlu0 %v2486, 126
        %v2524 = vpop.permute.xlu0 %2523
        %2525 = vrot.lane.b32.xlu0 %v2487, 126
        %v2526 = vpop.permute.xlu0 %2525
        %2527 = vrot.lane.b32.xlu0 %v2488, 126
        %v2528 = vpop.permute.xlu0 %2527
        %2529 = vrot.lane.b32.xlu0 %v2489, 126
        %v2530 = vpop.permute.xlu0 %2529
        %2531 = vrot.lane.b32.xlu0 %v2490, 126
        %v2532 = vpop.permute.xlu0 %2531
        %2533 = vrot.lane.b32.xlu0 %v2491, 126
        %v2534 = vpop.permute.xlu0 %2533
        %2535 = vrot.lane.b32.xlu0 %v2492, 126
        %v2536 = vpop.permute.xlu0 %2535
        %2537 = vrot.lane.b32.xlu0 %v2493, 126
        %v2538 = vpop.permute.xlu0 %2537
        %2539 = vrot.lane.b32.xlu0 %v2494, 126
        %v2540 = vpop.permute.xlu0 %2539
        %2541 = vrot.lane.b32.xlu0 %v2495, 126
        %v2542 = vpop.permute.xlu0 %2541
        %2543 = vrot.lane.b32.xlu0 %v2496, 126
        %v2544 = vpop.permute.xlu0 %2543
        %v2561 = vadd.f32 %v1861, %v2514
        %v2562 = vadd.f32 %v1862, %v2516
        %v2563 = vadd.f32 %v1863, %v2518
        %v2564 = vadd.f32 %v1864, %v2520
        %v2565 = vadd.f32 %v1865, %v2522
        %v2566 = vadd.f32 %v1866, %v2524
        %v2567 = vadd.f32 %v1867, %v2526
        %v2568 = vadd.f32 %v1868, %v2528
        %v2569 = vadd.f32 %v1869, %v2530
        %v2570 = vadd.f32 %v1870, %v2532
        %v2571 = vadd.f32 %v1871, %v2534
        %v2572 = vadd.f32 %v1872, %v2536
        %v2573 = vadd.f32 %v1873, %v2538
        %v2574 = vadd.f32 %v1874, %v2540
        %v2575 = vadd.f32 %v1875, %v2542
        %v2576 = vadd.f32 %v1876, %v2544
        %2577 = vrot.lane.b32.xlu0 %v1008, 19
        %v2578 = vpop.permute.xlu0 %2577
        %2579 = vrot.lane.b32.xlu0 %v1007, 19
        %v2580 = vpop.permute.xlu0 %2579
        %2581 = vrot.lane.b32.xlu0 %v1006, 19
        %v2582 = vpop.permute.xlu0 %2581
        %2583 = vrot.lane.b32.xlu0 %v1005, 19
        %v2584 = vpop.permute.xlu0 %2583
        %2585 = vrot.lane.b32.xlu0 %v1004, 19
        %v2586 = vpop.permute.xlu0 %2585
        %2587 = vrot.lane.b32.xlu0 %v1003, 19
        %v2588 = vpop.permute.xlu0 %2587
        %2589 = vrot.lane.b32.xlu0 %v1002, 19
        %v2590 = vpop.permute.xlu0 %2589
        %2591 = vrot.lane.b32.xlu0 %v1001, 19
        %v2592 = vpop.permute.xlu0 %2591
        %2593 = vrot.lane.b32.xlu0 %v1000, 19
        %v2594 = vpop.permute.xlu0 %2593
        %2595 = vrot.lane.b32.xlu0 %v999, 19
        %v2596 = vpop.permute.xlu0 %2595
        %2597 = vrot.lane.b32.xlu0 %v998, 19
        %v2598 = vpop.permute.xlu0 %2597
        %2599 = vrot.lane.b32.xlu0 %v997, 19
        %v2600 = vpop.permute.xlu0 %2599
        %2601 = vrot.lane.b32.xlu0 %v996, 19
        %v2602 = vpop.permute.xlu0 %2601
        %2603 = vrot.lane.b32.xlu0 %v995, 19
        %v2604 = vpop.permute.xlu0 %2603
        %2605 = vrot.lane.b32.xlu0 %v994, 19
        %v2606 = vpop.permute.xlu0 %2605
        %2607 = vrot.lane.b32.xlu0 %v1009, 19
        %v2608 = vpop.permute.xlu0 %2607
        %v2625 = vsub.f32 %v1008, %v2578
        %v2626 = vsub.f32 %v1007, %v2580
        %v2627 = vsub.f32 %v1006, %v2582
        %v2628 = vsub.f32 %v1005, %v2584
        %v2629 = vsub.f32 %v1004, %v2586
        %v2630 = vsub.f32 %v1003, %v2588
        %v2631 = vsub.f32 %v1002, %v2590
        %v2632 = vsub.f32 %v1001, %v2592
        %v2633 = vsub.f32 %v1000, %v2594
        %v2634 = vsub.f32 %v999, %v2596
        %v2635 = vsub.f32 %v998, %v2598
        %v2636 = vsub.f32 %v997, %v2600
        %v2637 = vsub.f32 %v996, %v2602
        %v2638 = vsub.f32 %v995, %v2604
        %v2639 = vsub.f32 %v994, %v2606
        %v2640 = vsub.f32 %v1009, %v2608
        %v2641 = vadd.s32 %v216, 2
        %v2642 = vadd.s32 %v217, 2
        %v2643 = vadd.s32 %v218, 2
        %v2644 = vadd.s32 %v219, 2
        %vm2645 = vcmp.ge.s32.totalorder %v2641, 0
        %vm2646 = vcmp.ge.s32.totalorder %v2642, 0
        %vm2647 = vcmp.ge.s32.totalorder %v2643, 0
        %vm2648 = vcmp.ge.s32.totalorder %v2644, 0
        %vm2649 = vcmp.lt.s32.totalorder %v2641, 32
        %vm2650 = vcmp.lt.s32.totalorder %v2642, 32
        %vm2651 = vcmp.lt.s32.totalorder %v2643, 32
        %vm2652 = vcmp.lt.s32.totalorder %v2644, 32
        %vm2653 = vmand %vm2645, %vm2649
        %vm2654 = vmand %vm2646, %vm2650
        %vm2655 = vmand %vm2647, %vm2651
        %vm2656 = vmand %vm2648, %vm2652
        %v2657 = vsel %vm2653, %v2625, 0.0
        %v2658 = vsel %vm2654, %v2626, 0.0
        %v2659 = vsel %vm2655, %v2627, 0.0
        %v2660 = vsel %vm2656, %v2628, 0.0
        %v2661 = vsel %vm2653, %v2629, 0.0
        %v2662 = vsel %vm2654, %v2630, 0.0
        %v2663 = vsel %vm2655, %v2631, 0.0
        %v2664 = vsel %vm2656, %v2632, 0.0
        %v2665 = vsel %vm2653, %v2633, 0.0
        %v2666 = vsel %vm2654, %v2634, 0.0
        %v2667 = vsel %vm2655, %v2635, 0.0
        %v2668 = vsel %vm2656, %v2636, 0.0
        %v2669 = vsel %vm2653, %v2637, 0.0
        %v2670 = vsel %vm2654, %v2638, 0.0
        %v2671 = vsel %vm2655, %v2639, 0.0
        %v2672 = vsel %vm2656, %v2640, 0.0
        %2689 = vrot.lane.b32.xlu0 %v2657, 119
        %v2690 = vpop.permute.xlu0 %2689
        %2691 = vrot.lane.b32.xlu0 %v2658, 119
        %v2692 = vpop.permute.xlu0 %2691
        %2693 = vrot.lane.b32.xlu0 %v2659, 119
        %v2694 = vpop.permute.xlu0 %2693
        %2695 = vrot.lane.b32.xlu0 %v2660, 119
        %v2696 = vpop.permute.xlu0 %2695
        %2697 = vrot.lane.b32.xlu0 %v2661, 119
        %v2698 = vpop.permute.xlu0 %2697
        %2699 = vrot.lane.b32.xlu0 %v2662, 119
        %v2700 = vpop.permute.xlu0 %2699
        %2701 = vrot.lane.b32.xlu0 %v2663, 119
        %v2702 = vpop.permute.xlu0 %2701
        %2703 = vrot.lane.b32.xlu0 %v2664, 119
        %v2704 = vpop.permute.xlu0 %2703
        %2705 = vrot.lane.b32.xlu0 %v2665, 119
        %v2706 = vpop.permute.xlu0 %2705
        %2707 = vrot.lane.b32.xlu0 %v2666, 119
        %v2708 = vpop.permute.xlu0 %2707
        %2709 = vrot.lane.b32.xlu0 %v2667, 119
        %v2710 = vpop.permute.xlu0 %2709
        %2711 = vrot.lane.b32.xlu0 %v2668, 119
        %v2712 = vpop.permute.xlu0 %2711
        %2713 = vrot.lane.b32.xlu0 %v2669, 119
        %v2714 = vpop.permute.xlu0 %2713
        %2715 = vrot.lane.b32.xlu0 %v2670, 119
        %v2716 = vpop.permute.xlu0 %2715
        %2717 = vrot.lane.b32.xlu0 %v2671, 119
        %v2718 = vpop.permute.xlu0 %2717
        %2719 = vrot.lane.b32.xlu0 %v2672, 119
        %v2720 = vpop.permute.xlu0 %2719
        %v2737 = vadd.f32 %v2037, %v2690
        %v2738 = vadd.f32 %v2038, %v2692
        %v2739 = vadd.f32 %v2039, %v2694
        %v2740 = vadd.f32 %v2040, %v2696
        %v2741 = vadd.f32 %v2041, %v2698
        %v2742 = vadd.f32 %v2042, %v2700
        %v2743 = vadd.f32 %v2043, %v2702
        %v2744 = vadd.f32 %v2044, %v2704
        %v2745 = vadd.f32 %v2045, %v2706
        %v2746 = vadd.f32 %v2046, %v2708
        %v2747 = vadd.f32 %v2047, %v2710
        %v2748 = vadd.f32 %v2048, %v2712
        %v2749 = vadd.f32 %v2049, %v2714
        %v2750 = vadd.f32 %v2050, %v2716
        %v2751 = vadd.f32 %v2051, %v2718
        %v2752 = vadd.f32 %v2052, %v2720
        %2753 = vrot.lane.b32.xlu0 %v1233, 19
        %v2754 = vpop.permute.xlu0 %2753
        %2755 = vrot.lane.b32.xlu0 %v1232, 19
        %v2756 = vpop.permute.xlu0 %2755
        %2757 = vrot.lane.b32.xlu0 %v1231, 19
        %v2758 = vpop.permute.xlu0 %2757
        %2759 = vrot.lane.b32.xlu0 %v1230, 19
        %v2760 = vpop.permute.xlu0 %2759
        %2761 = vrot.lane.b32.xlu0 %v1229, 19
        %v2762 = vpop.permute.xlu0 %2761
        %2763 = vrot.lane.b32.xlu0 %v1228, 19
        %v2764 = vpop.permute.xlu0 %2763
        %2765 = vrot.lane.b32.xlu0 %v1227, 19
        %v2766 = vpop.permute.xlu0 %2765
        %2767 = vrot.lane.b32.xlu0 %v1226, 19
        %v2768 = vpop.permute.xlu0 %2767
        %2769 = vrot.lane.b32.xlu0 %v1225, 19
        %v2770 = vpop.permute.xlu0 %2769
        %2771 = vrot.lane.b32.xlu0 %v1224, 19
        %v2772 = vpop.permute.xlu0 %2771
        %2773 = vrot.lane.b32.xlu0 %v1223, 19
        %v2774 = vpop.permute.xlu0 %2773
        %2775 = vrot.lane.b32.xlu0 %v1222, 19
        %v2776 = vpop.permute.xlu0 %2775
        %2777 = vrot.lane.b32.xlu0 %v1221, 19
        %v2778 = vpop.permute.xlu0 %2777
        %2779 = vrot.lane.b32.xlu0 %v1220, 19
        %v2780 = vpop.permute.xlu0 %2779
        %2781 = vrot.lane.b32.xlu0 %v1219, 19
        %v2782 = vpop.permute.xlu0 %2781
        %2783 = vrot.lane.b32.xlu0 %v1234, 19
        %v2784 = vpop.permute.xlu0 %2783
        %v2801 = vsub.f32 %v1233, %v2754
        %v2802 = vsub.f32 %v1232, %v2756
        %v2803 = vsub.f32 %v1231, %v2758
        %v2804 = vsub.f32 %v1230, %v2760
        %v2805 = vsub.f32 %v1229, %v2762
        %v2806 = vsub.f32 %v1228, %v2764
        %v2807 = vsub.f32 %v1227, %v2766
        %v2808 = vsub.f32 %v1226, %v2768
        %v2809 = vsub.f32 %v1225, %v2770
        %v2810 = vsub.f32 %v1224, %v2772
        %v2811 = vsub.f32 %v1223, %v2774
        %v2812 = vsub.f32 %v1222, %v2776
        %v2813 = vsub.f32 %v1221, %v2778
        %v2814 = vsub.f32 %v1220, %v2780
        %v2815 = vsub.f32 %v1219, %v2782
        %v2816 = vsub.f32 %v1234, %v2784
        %v2817 = vadd.s32 %v216, 3
        %v2818 = vadd.s32 %v217, 3
        %v2819 = vadd.s32 %v218, 3
        %v2820 = vadd.s32 %v219, 3
        %vm2821 = vcmp.ge.s32.totalorder %v2817, 0
        %vm2822 = vcmp.ge.s32.totalorder %v2818, 0
        %vm2823 = vcmp.ge.s32.totalorder %v2819, 0
        %vm2824 = vcmp.ge.s32.totalorder %v2820, 0
        %vm2825 = vcmp.lt.s32.totalorder %v2817, 32
        %vm2826 = vcmp.lt.s32.totalorder %v2818, 32
        %vm2827 = vcmp.lt.s32.totalorder %v2819, 32
        %vm2828 = vcmp.lt.s32.totalorder %v2820, 32
        %vm2829 = vmand %vm2821, %vm2825
        %vm2830 = vmand %vm2822, %vm2826
        %vm2831 = vmand %vm2823, %vm2827
        %vm2832 = vmand %vm2824, %vm2828
        %v2833 = vsel %vm2829, %v2801, 0.0
        %v2834 = vsel %vm2830, %v2802, 0.0
        %v2835 = vsel %vm2831, %v2803, 0.0
        %v2836 = vsel %vm2832, %v2804, 0.0
        %v2837 = vsel %vm2829, %v2805, 0.0
        %v2838 = vsel %vm2830, %v2806, 0.0
        %v2839 = vsel %vm2831, %v2807, 0.0
        %v2840 = vsel %vm2832, %v2808, 0.0
        %v2841 = vsel %vm2829, %v2809, 0.0
        %v2842 = vsel %vm2830, %v2810, 0.0
        %v2843 = vsel %vm2831, %v2811, 0.0
        %v2844 = vsel %vm2832, %v2812, 0.0
        %v2845 = vsel %vm2829, %v2813, 0.0
        %v2846 = vsel %vm2830, %v2814, 0.0
        %v2847 = vsel %vm2831, %v2815, 0.0
        %v2848 = vsel %vm2832, %v2816, 0.0
        %2865 = vrot.lane.b32.xlu0 %v2833, 123
        %v2866 = vpop.permute.xlu0 %2865
        %2867 = vrot.lane.b32.xlu0 %v2834, 123
        %v2868 = vpop.permute.xlu0 %2867
        %2869 = vrot.lane.b32.xlu0 %v2835, 123
        %v2870 = vpop.permute.xlu0 %2869
        %2871 = vrot.lane.b32.xlu0 %v2836, 123
        %v2872 = vpop.permute.xlu0 %2871
        %2873 = vrot.lane.b32.xlu0 %v2837, 123
        %v2874 = vpop.permute.xlu0 %2873
        %2875 = vrot.lane.b32.xlu0 %v2838, 123
        %v2876 = vpop.permute.xlu0 %2875
        %2877 = vrot.lane.b32.xlu0 %v2839, 123
        %v2878 = vpop.permute.xlu0 %2877
        %2879 = vrot.lane.b32.xlu0 %v2840, 123
        %v2880 = vpop.permute.xlu0 %2879
        %2881 = vrot.lane.b32.xlu0 %v2841, 123
        %v2882 = vpop.permute.xlu0 %2881
        %2883 = vrot.lane.b32.xlu0 %v2842, 123
        %v2884 = vpop.permute.xlu0 %2883
        %2885 = vrot.lane.b32.xlu0 %v2843, 123
        %v2886 = vpop.permute.xlu0 %2885
        %2887 = vrot.lane.b32.xlu0 %v2844, 123
        %v2888 = vpop.permute.xlu0 %2887
        %2889 = vrot.lane.b32.xlu0 %v2845, 123
        %v2890 = vpop.permute.xlu0 %2889
        %2891 = vrot.lane.b32.xlu0 %v2846, 123
        %v2892 = vpop.permute.xlu0 %2891
        %2893 = vrot.lane.b32.xlu0 %v2847, 123
        %v2894 = vpop.permute.xlu0 %2893
        %2895 = vrot.lane.b32.xlu0 %v2848, 123
        %v2896 = vpop.permute.xlu0 %2895
        %v2913 = vadd.f32 %v2213, %v2866
        %v2914 = vadd.f32 %v2214, %v2868
        %v2915 = vadd.f32 %v2215, %v2870
        %v2916 = vadd.f32 %v2216, %v2872
        %v2917 = vadd.f32 %v2217, %v2874
        %v2918 = vadd.f32 %v2218, %v2876
        %v2919 = vadd.f32 %v2219, %v2878
        %v2920 = vadd.f32 %v2220, %v2880
        %v2921 = vadd.f32 %v2221, %v2882
        %v2922 = vadd.f32 %v2222, %v2884
        %v2923 = vadd.f32 %v2223, %v2886
        %v2924 = vadd.f32 %v2224, %v2888
        %v2925 = vadd.f32 %v2225, %v2890
        %v2926 = vadd.f32 %v2226, %v2892
        %v2927 = vadd.f32 %v2227, %v2894
        %v2928 = vadd.f32 %v2228, %v2896
        %v2929 = vadd.s32 %v216, 4
        %v2930 = vadd.s32 %v217, 4
        %v2931 = vadd.s32 %v218, 4
        %v2932 = vadd.s32 %v219, 4
        %vm2933 = vcmp.ge.s32.totalorder %v2929, 0
        %vm2934 = vcmp.ge.s32.totalorder %v2930, 0
        %vm2935 = vcmp.ge.s32.totalorder %v2931, 0
        %vm2936 = vcmp.ge.s32.totalorder %v2932, 0
        %vm2937 = vcmp.lt.s32.totalorder %v2929, 32
        %vm2938 = vcmp.lt.s32.totalorder %v2930, 32
        %vm2939 = vcmp.lt.s32.totalorder %v2931, 32
        %vm2940 = vcmp.lt.s32.totalorder %v2932, 32
        %vm2941 = vmand %vm2933, %vm2937
        %vm2942 = vmand %vm2934, %vm2938
        %vm2943 = vmand %vm2935, %vm2939
        %vm2944 = vmand %vm2936, %vm2940
        %v2945 = vsel %vm2941, %v1525, 0.0
        %v2946 = vsel %vm2942, %v1526, 0.0
        %v2947 = vsel %vm2943, %v1527, 0.0
        %v2948 = vsel %vm2944, %v1528, 0.0
        %v2949 = vsel %vm2941, %v1529, 0.0
        %v2950 = vsel %vm2942, %v1530, 0.0
        %v2951 = vsel %vm2943, %v1531, 0.0
        %v2952 = vsel %vm2944, %v1532, 0.0
        %v2953 = vsel %vm2941, %v1533, 0.0
        %v2954 = vsel %vm2942, %v1534, 0.0
        %v2955 = vsel %vm2943, %v1535, 0.0
        %v2956 = vsel %vm2944, %v1536, 0.0
        %v2957 = vsel %vm2941, %v1537, 0.0
        %v2958 = vsel %vm2942, %v1538, 0.0
        %v2959 = vsel %vm2943, %v1539, 0.0
        %v2960 = vsel %vm2944, %v1524, 0.0
        %2977 = vrot.lane.b32.xlu0 %v2945, 125
        %v2978 = vpop.permute.xlu0 %2977
        %2979 = vrot.lane.b32.xlu0 %v2946, 125
        %v2980 = vpop.permute.xlu0 %2979
        %2981 = vrot.lane.b32.xlu0 %v2947, 125
        %v2982 = vpop.permute.xlu0 %2981
        %2983 = vrot.lane.b32.xlu0 %v2948, 125
        %v2984 = vpop.permute.xlu0 %2983
        %2985 = vrot.lane.b32.xlu0 %v2949, 125
        %v2986 = vpop.permute.xlu0 %2985
        %2987 = vrot.lane.b32.xlu0 %v2950, 125
        %v2988 = vpop.permute.xlu0 %2987
        %2989 = vrot.lane.b32.xlu0 %v2951, 125
        %v2990 = vpop.permute.xlu0 %2989
        %2991 = vrot.lane.b32.xlu0 %v2952, 125
        %v2992 = vpop.permute.xlu0 %2991
        %2993 = vrot.lane.b32.xlu0 %v2953, 125
        %v2994 = vpop.permute.xlu0 %2993
        %2995 = vrot.lane.b32.xlu0 %v2954, 125
        %v2996 = vpop.permute.xlu0 %2995
        %2997 = vrot.lane.b32.xlu0 %v2955, 125
        %v2998 = vpop.permute.xlu0 %2997
        %2999 = vrot.lane.b32.xlu0 %v2956, 125
        %v3000 = vpop.permute.xlu0 %2999
        %3001 = vrot.lane.b32.xlu0 %v2957, 125
        %v3002 = vpop.permute.xlu0 %3001
        %3003 = vrot.lane.b32.xlu0 %v2958, 125
        %v3004 = vpop.permute.xlu0 %3003
        %3005 = vrot.lane.b32.xlu0 %v2959, 125
        %v3006 = vpop.permute.xlu0 %3005
        %3007 = vrot.lane.b32.xlu0 %v2960, 125
        %v3008 = vpop.permute.xlu0 %3007
        %v3025 = vadd.f32 %v2385, %v2978
        %v3026 = vadd.f32 %v2386, %v2980
        %v3027 = vadd.f32 %v2387, %v2982
        %v3028 = vadd.f32 %v2388, %v2984
        %v3029 = vadd.f32 %v2389, %v2986
        %v3030 = vadd.f32 %v2390, %v2988
        %v3031 = vadd.f32 %v2391, %v2990
        %v3032 = vadd.f32 %v2392, %v2992
        %v3033 = vadd.f32 %v2393, %v2994
        %v3034 = vadd.f32 %v2394, %v2996
        %v3035 = vadd.f32 %v2395, %v2998
        %v3036 = vadd.f32 %v2396, %v3000
        %v3037 = vadd.f32 %v2397, %v3002
        %v3038 = vadd.f32 %v2398, %v3004
        %v3039 = vadd.f32 %v2399, %v3006
        %v3040 = vadd.f32 %v2400, %v3008
        %3041 = vrot.lane.b32.xlu0 %v1683, 17
        %v3042 = vpop.permute.xlu0 %3041
        %3043 = vrot.lane.b32.xlu0 %v1682, 17
        %v3044 = vpop.permute.xlu0 %3043
        %3045 = vrot.lane.b32.xlu0 %v1681, 17
        %v3046 = vpop.permute.xlu0 %3045
        %3047 = vrot.lane.b32.xlu0 %v1680, 17
        %v3048 = vpop.permute.xlu0 %3047
        %3049 = vrot.lane.b32.xlu0 %v1679, 17
        %v3050 = vpop.permute.xlu0 %3049
        %3051 = vrot.lane.b32.xlu0 %v1678, 17
        %v3052 = vpop.permute.xlu0 %3051
        %3053 = vrot.lane.b32.xlu0 %v1677, 17
        %v3054 = vpop.permute.xlu0 %3053
        %3055 = vrot.lane.b32.xlu0 %v1676, 17
        %v3056 = vpop.permute.xlu0 %3055
        %3057 = vrot.lane.b32.xlu0 %v1675, 17
        %v3058 = vpop.permute.xlu0 %3057
        %3059 = vrot.lane.b32.xlu0 %v1674, 17
        %v3060 = vpop.permute.xlu0 %3059
        %3061 = vrot.lane.b32.xlu0 %v1673, 17
        %v3062 = vpop.permute.xlu0 %3061
        %3063 = vrot.lane.b32.xlu0 %v1672, 17
        %v3064 = vpop.permute.xlu0 %3063
        %3065 = vrot.lane.b32.xlu0 %v1671, 17
        %v3066 = vpop.permute.xlu0 %3065
        %3067 = vrot.lane.b32.xlu0 %v1670, 17
        %v3068 = vpop.permute.xlu0 %3067
        %3069 = vrot.lane.b32.xlu0 %v1669, 17
        %v3070 = vpop.permute.xlu0 %3069
        %3071 = vrot.lane.b32.xlu0 %v1684, 17
        %v3072 = vpop.permute.xlu0 %3071
        %v3089 = vsub.f32 %v1683, %v3042
        %v3090 = vsub.f32 %v1682, %v3044
        %v3091 = vsub.f32 %v1681, %v3046
        %v3092 = vsub.f32 %v1680, %v3048
        %v3093 = vsub.f32 %v1679, %v3050
        %v3094 = vsub.f32 %v1678, %v3052
        %v3095 = vsub.f32 %v1677, %v3054
        %v3096 = vsub.f32 %v1676, %v3056
        %v3097 = vsub.f32 %v1675, %v3058
        %v3098 = vsub.f32 %v1674, %v3060
        %v3099 = vsub.f32 %v1673, %v3062
        %v3100 = vsub.f32 %v1672, %v3064
        %v3101 = vsub.f32 %v1671, %v3066
        %v3102 = vsub.f32 %v1670, %v3068
        %v3103 = vsub.f32 %v1669, %v3070
        %v3104 = vsub.f32 %v1684, %v3072
        %v3105 = vadd.s32 %v216, 5
        %v3106 = vadd.s32 %v217, 5
        %v3107 = vadd.s32 %v218, 5
        %v3108 = vadd.s32 %v219, 5
        %vm3109 = vcmp.ge.s32.totalorder %v3105, 0
        %vm3110 = vcmp.ge.s32.totalorder %v3106, 0
        %vm3111 = vcmp.ge.s32.totalorder %v3107, 0
        %vm3112 = vcmp.ge.s32.totalorder %v3108, 0
        %vm3113 = vcmp.lt.s32.totalorder %v3105, 32
        %vm3114 = vcmp.lt.s32.totalorder %v3106, 32
        %vm3115 = vcmp.lt.s32.totalorder %v3107, 32
        %vm3116 = vcmp.lt.s32.totalorder %v3108, 32
        %vm3117 = vmand %vm3109, %vm3113
        %vm3118 = vmand %vm3110, %vm3114
        %vm3119 = vmand %vm3111, %vm3115
        %vm3120 = vmand %vm3112, %vm3116
        %v3121 = vsel %vm3117, %v3089, 0.0
        %v3122 = vsel %vm3118, %v3090, 0.0
        %v3123 = vsel %vm3119, %v3091, 0.0
        %v3124 = vsel %vm3120, %v3092, 0.0
        %v3125 = vsel %vm3117, %v3093, 0.0
        %v3126 = vsel %vm3118, %v3094, 0.0
        %v3127 = vsel %vm3119, %v3095, 0.0
        %v3128 = vsel %vm3120, %v3096, 0.0
        %v3129 = vsel %vm3117, %v3097, 0.0
        %v3130 = vsel %vm3118, %v3098, 0.0
        %v3131 = vsel %vm3119, %v3099, 0.0
        %v3132 = vsel %vm3120, %v3100, 0.0
        %v3133 = vsel %vm3117, %v3101, 0.0
        %v3134 = vsel %vm3118, %v3102, 0.0
        %v3135 = vsel %vm3119, %v3103, 0.0
        %v3136 = vsel %vm3120, %v3104, 0.0
        %3153 = vrot.lane.b32.xlu0 %v3121, 127
        %v3154 = vpop.permute.xlu0 %3153
        %3155 = vrot.lane.b32.xlu0 %v3122, 127
        %v3156 = vpop.permute.xlu0 %3155
        %3157 = vrot.lane.b32.xlu0 %v3123, 127
        %v3158 = vpop.permute.xlu0 %3157
        %3159 = vrot.lane.b32.xlu0 %v3124, 127
        %v3160 = vpop.permute.xlu0 %3159
        %3161 = vrot.lane.b32.xlu0 %v3125, 127
        %v3162 = vpop.permute.xlu0 %3161
        %3163 = vrot.lane.b32.xlu0 %v3126, 127
        %v3164 = vpop.permute.xlu0 %3163
        %3165 = vrot.lane.b32.xlu0 %v3127, 127
        %v3166 = vpop.permute.xlu0 %3165
        %3167 = vrot.lane.b32.xlu0 %v3128, 127
        %v3168 = vpop.permute.xlu0 %3167
        %3169 = vrot.lane.b32.xlu0 %v3129, 127
        %v3170 = vpop.permute.xlu0 %3169
        %3171 = vrot.lane.b32.xlu0 %v3130, 127
        %v3172 = vpop.permute.xlu0 %3171
        %3173 = vrot.lane.b32.xlu0 %v3131, 127
        %v3174 = vpop.permute.xlu0 %3173
        %3175 = vrot.lane.b32.xlu0 %v3132, 127
        %v3176 = vpop.permute.xlu0 %3175
        %3177 = vrot.lane.b32.xlu0 %v3133, 127
        %v3178 = vpop.permute.xlu0 %3177
        %3179 = vrot.lane.b32.xlu0 %v3134, 127
        %v3180 = vpop.permute.xlu0 %3179
        %3181 = vrot.lane.b32.xlu0 %v3135, 127
        %v3182 = vpop.permute.xlu0 %3181
        %3183 = vrot.lane.b32.xlu0 %v3136, 127
        %v3184 = vpop.permute.xlu0 %3183
        %v3201 = vadd.f32 %v2561, %v3154
        %v3202 = vadd.f32 %v2562, %v3156
        %v3203 = vadd.f32 %v2563, %v3158
        %v3204 = vadd.f32 %v2564, %v3160
        %v3205 = vadd.f32 %v2565, %v3162
        %v3206 = vadd.f32 %v2566, %v3164
        %v3207 = vadd.f32 %v2567, %v3166
        %v3208 = vadd.f32 %v2568, %v3168
        %v3209 = vadd.f32 %v2569, %v3170
        %v3210 = vadd.f32 %v2570, %v3172
        %v3211 = vadd.f32 %v2571, %v3174
        %v3212 = vadd.f32 %v2572, %v3176
        %v3213 = vadd.f32 %v2573, %v3178
        %v3214 = vadd.f32 %v2574, %v3180
        %v3215 = vadd.f32 %v2575, %v3182
        %v3216 = vadd.f32 %v2576, %v3184
        %3217 = vrot.lane.b32.xlu0 %v397, 17
        %v3218 = vpop.permute.xlu0 %3217
        %3219 = vrot.lane.b32.xlu0 %v396, 17
        %v3220 = vpop.permute.xlu0 %3219
        %3221 = vrot.lane.b32.xlu0 %v395, 17
        %v3222 = vpop.permute.xlu0 %3221
        %3223 = vrot.lane.b32.xlu0 %v394, 17
        %v3224 = vpop.permute.xlu0 %3223
        %3225 = vrot.lane.b32.xlu0 %v393, 17
        %v3226 = vpop.permute.xlu0 %3225
        %3227 = vrot.lane.b32.xlu0 %v392, 17
        %v3228 = vpop.permute.xlu0 %3227
        %3229 = vrot.lane.b32.xlu0 %v391, 17
        %v3230 = vpop.permute.xlu0 %3229
        %3231 = vrot.lane.b32.xlu0 %v390, 17
        %v3232 = vpop.permute.xlu0 %3231
        %3233 = vrot.lane.b32.xlu0 %v389, 17
        %v3234 = vpop.permute.xlu0 %3233
        %3235 = vrot.lane.b32.xlu0 %v388, 17
        %v3236 = vpop.permute.xlu0 %3235
        %3237 = vrot.lane.b32.xlu0 %v387, 17
        %v3238 = vpop.permute.xlu0 %3237
        %3239 = vrot.lane.b32.xlu0 %v386, 17
        %v3240 = vpop.permute.xlu0 %3239
        %3241 = vrot.lane.b32.xlu0 %v385, 17
        %v3242 = vpop.permute.xlu0 %3241
        %3243 = vrot.lane.b32.xlu0 %v384, 17
        %v3244 = vpop.permute.xlu0 %3243
        %3245 = vrot.lane.b32.xlu0 %v383, 17
        %v3246 = vpop.permute.xlu0 %3245
        %3247 = vrot.lane.b32.xlu0 %v398, 17
        %v3248 = vpop.permute.xlu0 %3247
        %v3265 = vsub.f32 %v397, %v3218
        %v3266 = vsub.f32 %v396, %v3220
        %v3267 = vsub.f32 %v395, %v3222
        %v3268 = vsub.f32 %v394, %v3224
        %v3269 = vsub.f32 %v393, %v3226
        %v3270 = vsub.f32 %v392, %v3228
        %v3271 = vsub.f32 %v391, %v3230
        %v3272 = vsub.f32 %v390, %v3232
        %v3273 = vsub.f32 %v389, %v3234
        %v3274 = vsub.f32 %v388, %v3236
        %v3275 = vsub.f32 %v387, %v3238
        %v3276 = vsub.f32 %v386, %v3240
        %v3277 = vsub.f32 %v385, %v3242
        %v3278 = vsub.f32 %v384, %v3244
        %v3279 = vsub.f32 %v383, %v3246
        %v3280 = vsub.f32 %v398, %v3248
        %v3281 = vadd.s32 %v216, 6
        %v3282 = vadd.s32 %v217, 6
        %v3283 = vadd.s32 %v218, 6
        %v3284 = vadd.s32 %v219, 6
        %vm3285 = vcmp.ge.s32.totalorder %v3281, 0
        %vm3286 = vcmp.ge.s32.totalorder %v3282, 0
        %vm3287 = vcmp.ge.s32.totalorder %v3283, 0
        %vm3288 = vcmp.ge.s32.totalorder %v3284, 0
        %vm3289 = vcmp.lt.s32.totalorder %v3281, 32
        %vm3290 = vcmp.lt.s32.totalorder %v3282, 32
        %vm3291 = vcmp.lt.s32.totalorder %v3283, 32
        %vm3292 = vcmp.lt.s32.totalorder %v3284, 32
        %vm3293 = vmand %vm3285, %vm3289
        %vm3294 = vmand %vm3286, %vm3290
        %vm3295 = vmand %vm3287, %vm3291
        %vm3296 = vmand %vm3288, %vm3292
        %v3297 = vsel %vm3293, %v3265, 0.0
        %v3298 = vsel %vm3294, %v3266, 0.0
        %v3299 = vsel %vm3295, %v3267, 0.0
        %v3300 = vsel %vm3296, %v3268, 0.0
        %v3301 = vsel %vm3293, %v3269, 0.0
        %v3302 = vsel %vm3294, %v3270, 0.0
        %v3303 = vsel %vm3295, %v3271, 0.0
        %v3304 = vsel %vm3296, %v3272, 0.0
        %v3305 = vsel %vm3293, %v3273, 0.0
        %v3306 = vsel %vm3294, %v3274, 0.0
        %v3307 = vsel %vm3295, %v3275, 0.0
        %v3308 = vsel %vm3296, %v3276, 0.0
        %v3309 = vsel %vm3293, %v3277, 0.0
        %v3310 = vsel %vm3294, %v3278, 0.0
        %v3311 = vsel %vm3295, %v3279, 0.0
        %v3312 = vsel %vm3296, %v3280, 0.0
        %3329 = vrot.lane.b32.xlu0 %v3297, 120
        %v3330 = vpop.permute.xlu0 %3329
        %3331 = vrot.lane.b32.xlu0 %v3298, 120
        %v3332 = vpop.permute.xlu0 %3331
        %3333 = vrot.lane.b32.xlu0 %v3299, 120
        %v3334 = vpop.permute.xlu0 %3333
        %3335 = vrot.lane.b32.xlu0 %v3300, 120
        %v3336 = vpop.permute.xlu0 %3335
        %3337 = vrot.lane.b32.xlu0 %v3301, 120
        %v3338 = vpop.permute.xlu0 %3337
        %3339 = vrot.lane.b32.xlu0 %v3302, 120
        %v3340 = vpop.permute.xlu0 %3339
        %3341 = vrot.lane.b32.xlu0 %v3303, 120
        %v3342 = vpop.permute.xlu0 %3341
        %3343 = vrot.lane.b32.xlu0 %v3304, 120
        %v3344 = vpop.permute.xlu0 %3343
        %3345 = vrot.lane.b32.xlu0 %v3305, 120
        %v3346 = vpop.permute.xlu0 %3345
        %3347 = vrot.lane.b32.xlu0 %v3306, 120
        %v3348 = vpop.permute.xlu0 %3347
        %3349 = vrot.lane.b32.xlu0 %v3307, 120
        %v3350 = vpop.permute.xlu0 %3349
        %3351 = vrot.lane.b32.xlu0 %v3308, 120
        %v3352 = vpop.permute.xlu0 %3351
        %3353 = vrot.lane.b32.xlu0 %v3309, 120
        %v3354 = vpop.permute.xlu0 %3353
        %3355 = vrot.lane.b32.xlu0 %v3310, 120
        %v3356 = vpop.permute.xlu0 %3355
        %3357 = vrot.lane.b32.xlu0 %v3311, 120
        %v3358 = vpop.permute.xlu0 %3357
        %3359 = vrot.lane.b32.xlu0 %v3312, 120
        %v3360 = vpop.permute.xlu0 %3359
        %v3377 = vadd.f32 %v2737, %v3330
        %v3378 = vadd.f32 %v2738, %v3332
        %v3379 = vadd.f32 %v2739, %v3334
        %v3380 = vadd.f32 %v2740, %v3336
        %v3381 = vadd.f32 %v2741, %v3338
        %v3382 = vadd.f32 %v2742, %v3340
        %v3383 = vadd.f32 %v2743, %v3342
        %v3384 = vadd.f32 %v2744, %v3344
        %v3385 = vadd.f32 %v2745, %v3346
        %v3386 = vadd.f32 %v2746, %v3348
        %v3387 = vadd.f32 %v2747, %v3350
        %v3388 = vadd.f32 %v2748, %v3352
        %v3389 = vadd.f32 %v2749, %v3354
        %v3390 = vadd.f32 %v2750, %v3356
        %v3391 = vadd.f32 %v2751, %v3358
        %v3392 = vadd.f32 %v2752, %v3360
        %3393 = vrot.lane.b32.xlu0 %v558, 15
        %v3394 = vpop.permute.xlu0 %3393
        %3395 = vrot.lane.b32.xlu0 %v557, 15
        %v3396 = vpop.permute.xlu0 %3395
        %3397 = vrot.lane.b32.xlu0 %v556, 15
        %v3398 = vpop.permute.xlu0 %3397
        %3399 = vrot.lane.b32.xlu0 %v555, 15
        %v3400 = vpop.permute.xlu0 %3399
        %3401 = vrot.lane.b32.xlu0 %v554, 15
        %v3402 = vpop.permute.xlu0 %3401
        %3403 = vrot.lane.b32.xlu0 %v553, 15
        %v3404 = vpop.permute.xlu0 %3403
        %3405 = vrot.lane.b32.xlu0 %v552, 15
        %v3406 = vpop.permute.xlu0 %3405
        %3407 = vrot.lane.b32.xlu0 %v551, 15
        %v3408 = vpop.permute.xlu0 %3407
        %3409 = vrot.lane.b32.xlu0 %v550, 15
        %v3410 = vpop.permute.xlu0 %3409
        %3411 = vrot.lane.b32.xlu0 %v549, 15
        %v3412 = vpop.permute.xlu0 %3411
        %3413 = vrot.lane.b32.xlu0 %v548, 15
        %v3414 = vpop.permute.xlu0 %3413
        %3415 = vrot.lane.b32.xlu0 %v547, 15
        %v3416 = vpop.permute.xlu0 %3415
        %3417 = vrot.lane.b32.xlu0 %v546, 15
        %v3418 = vpop.permute.xlu0 %3417
        %3419 = vrot.lane.b32.xlu0 %v545, 15
        %v3420 = vpop.permute.xlu0 %3419
        %3421 = vrot.lane.b32.xlu0 %v544, 15
        %v3422 = vpop.permute.xlu0 %3421
        %3423 = vrot.lane.b32.xlu0 %v559, 15
        %v3424 = vpop.permute.xlu0 %3423
        %v3441 = vsub.f32 %v558, %v3394
        %v3442 = vsub.f32 %v557, %v3396
        %v3443 = vsub.f32 %v556, %v3398
        %v3444 = vsub.f32 %v555, %v3400
        %v3445 = vsub.f32 %v554, %v3402
        %v3446 = vsub.f32 %v553, %v3404
        %v3447 = vsub.f32 %v552, %v3406
        %v3448 = vsub.f32 %v551, %v3408
        %v3449 = vsub.f32 %v550, %v3410
        %v3450 = vsub.f32 %v549, %v3412
        %v3451 = vsub.f32 %v548, %v3414
        %v3452 = vsub.f32 %v547, %v3416
        %v3453 = vsub.f32 %v546, %v3418
        %v3454 = vsub.f32 %v545, %v3420
        %v3455 = vsub.f32 %v544, %v3422
        %v3456 = vsub.f32 %v559, %v3424
        %v3457 = vadd.s32 %v216, 7
        %v3458 = vadd.s32 %v217, 7
        %v3459 = vadd.s32 %v218, 7
        %v3460 = vadd.s32 %v219, 7
        %vm3461 = vcmp.ge.s32.totalorder %v3457, 0
        %vm3462 = vcmp.ge.s32.totalorder %v3458, 0
        %vm3463 = vcmp.ge.s32.totalorder %v3459, 0
        %vm3464 = vcmp.ge.s32.totalorder %v3460, 0
        %vm3465 = vcmp.lt.s32.totalorder %v3457, 32
        %vm3466 = vcmp.lt.s32.totalorder %v3458, 32
        %vm3467 = vcmp.lt.s32.totalorder %v3459, 32
        %vm3468 = vcmp.lt.s32.totalorder %v3460, 32
        %vm3469 = vmand %vm3461, %vm3465
        %vm3470 = vmand %vm3462, %vm3466
        %vm3471 = vmand %vm3463, %vm3467
        %vm3472 = vmand %vm3464, %vm3468
        %v3473 = vsel %vm3469, %v3441, 0.0
        %v3474 = vsel %vm3470, %v3442, 0.0
        %v3475 = vsel %vm3471, %v3443, 0.0
        %v3476 = vsel %vm3472, %v3444, 0.0
        %v3477 = vsel %vm3469, %v3445, 0.0
        %v3478 = vsel %vm3470, %v3446, 0.0
        %v3479 = vsel %vm3471, %v3447, 0.0
        %v3480 = vsel %vm3472, %v3448, 0.0
        %v3481 = vsel %vm3469, %v3449, 0.0
        %v3482 = vsel %vm3470, %v3450, 0.0
        %v3483 = vsel %vm3471, %v3451, 0.0
        %v3484 = vsel %vm3472, %v3452, 0.0
        %v3485 = vsel %vm3469, %v3453, 0.0
        %v3486 = vsel %vm3470, %v3454, 0.0
        %v3487 = vsel %vm3471, %v3455, 0.0
        %v3488 = vsel %vm3472, %v3456, 0.0
        %3505 = vrot.lane.b32.xlu0 %v3473, 125
        %v3506 = vpop.permute.xlu0 %3505
        %3507 = vrot.lane.b32.xlu0 %v3474, 125
        %v3508 = vpop.permute.xlu0 %3507
        %3509 = vrot.lane.b32.xlu0 %v3475, 125
        %v3510 = vpop.permute.xlu0 %3509
        %3511 = vrot.lane.b32.xlu0 %v3476, 125
        %v3512 = vpop.permute.xlu0 %3511
        %3513 = vrot.lane.b32.xlu0 %v3477, 125
        %v3514 = vpop.permute.xlu0 %3513
        %3515 = vrot.lane.b32.xlu0 %v3478, 125
        %v3516 = vpop.permute.xlu0 %3515
        %3517 = vrot.lane.b32.xlu0 %v3479, 125
        %v3518 = vpop.permute.xlu0 %3517
        %3519 = vrot.lane.b32.xlu0 %v3480, 125
        %v3520 = vpop.permute.xlu0 %3519
        %3521 = vrot.lane.b32.xlu0 %v3481, 125
        %v3522 = vpop.permute.xlu0 %3521
        %3523 = vrot.lane.b32.xlu0 %v3482, 125
        %v3524 = vpop.permute.xlu0 %3523
        %3525 = vrot.lane.b32.xlu0 %v3483, 125
        %v3526 = vpop.permute.xlu0 %3525
        %3527 = vrot.lane.b32.xlu0 %v3484, 125
        %v3528 = vpop.permute.xlu0 %3527
        %3529 = vrot.lane.b32.xlu0 %v3485, 125
        %v3530 = vpop.permute.xlu0 %3529
        %3531 = vrot.lane.b32.xlu0 %v3486, 125
        %v3532 = vpop.permute.xlu0 %3531
        %3533 = vrot.lane.b32.xlu0 %v3487, 125
        %v3534 = vpop.permute.xlu0 %3533
        %3535 = vrot.lane.b32.xlu0 %v3488, 125
        %v3536 = vpop.permute.xlu0 %3535
        %v3553 = vadd.f32 %v2913, %v3506
        %v3554 = vadd.f32 %v2914, %v3508
        %v3555 = vadd.f32 %v2915, %v3510
        %v3556 = vadd.f32 %v2916, %v3512
        %v3557 = vadd.f32 %v2917, %v3514
        %v3558 = vadd.f32 %v2918, %v3516
        %v3559 = vadd.f32 %v2919, %v3518
        %v3560 = vadd.f32 %v2920, %v3520
        %v3561 = vadd.f32 %v2921, %v3522
        %v3562 = vadd.f32 %v2922, %v3524
        %v3563 = vadd.f32 %v2923, %v3526
        %v3564 = vadd.f32 %v2924, %v3528
        %v3565 = vadd.f32 %v2925, %v3530
        %v3566 = vadd.f32 %v2926, %v3532
        %v3567 = vadd.f32 %v2927, %v3534
        %v3568 = vadd.f32 %v2928, %v3536
        %v3569 = vadd.s32 %v217, 8
        %v3570 = vadd.s32 %v218, 8
        %v3571 = vadd.s32 %v219, 8
        %vm3572 = vcmp.ge.s32.totalorder %v3569, 0
        %vm3573 = vcmp.ge.s32.totalorder %v3570, 0
        %vm3574 = vcmp.ge.s32.totalorder %v3571, 0
        %vm3575 = vcmp.lt.s32.totalorder %v3569, 32
        %vm3576 = vcmp.lt.s32.totalorder %v3570, 32
        %vm3577 = vcmp.lt.s32.totalorder %v3571, 32
        %vm3578 = vmand %vm3572, %vm3575
        %vm3579 = vmand %vm3573, %vm3576
        %vm3580 = vmand %vm3574, %vm3577
        %v3581 = vsel %vm2302, %v754, 0.0
        %v3582 = vsel %vm3578, %v755, 0.0
        %v3583 = vsel %vm3579, %v756, 0.0
        %v3584 = vsel %vm3580, %v757, 0.0
        %v3585 = vsel %vm2302, %v758, 0.0
        %v3586 = vsel %vm3578, %v759, 0.0
        %v3587 = vsel %vm3579, %v760, 0.0
        %v3588 = vsel %vm3580, %v761, 0.0
        %v3589 = vsel %vm2302, %v762, 0.0
        %v3590 = vsel %vm3578, %v763, 0.0
        %v3591 = vsel %vm3579, %v764, 0.0
        %v3592 = vsel %vm3580, %v765, 0.0
        %v3593 = vsel %vm2302, %v766, 0.0
        %v3594 = vsel %vm3578, %v767, 0.0
        %v3595 = vsel %vm3579, %v752, 0.0
        %v3596 = vsel %vm3580, %v753, 0.0
        %v3597 = vadd.f32 %v3025, %v3581
        %v3598 = vadd.f32 %v3026, %v3582
        %v3599 = vadd.f32 %v3027, %v3583
        %v3600 = vadd.f32 %v3028, %v3584
        %v3601 = vadd.f32 %v3029, %v3585
        %v3602 = vadd.f32 %v3030, %v3586
        %v3603 = vadd.f32 %v3031, %v3587
        %v3604 = vadd.f32 %v3032, %v3588
        %v3605 = vadd.f32 %v3033, %v3589
        %v3606 = vadd.f32 %v3034, %v3590
        %v3607 = vadd.f32 %v3035, %v3591
        %v3608 = vadd.f32 %v3036, %v3592
        %v3609 = vadd.f32 %v3037, %v3593
        %v3610 = vadd.f32 %v3038, %v3594
        %v3611 = vadd.f32 %v3039, %v3595
        %v3612 = vadd.f32 %v3040, %v3596
        %3613 = vrot.lane.b32.xlu0 %v846, 9
        %v3614 = vpop.permute.xlu0 %3613
        %3615 = vrot.lane.b32.xlu0 %v845, 9
        %v3616 = vpop.permute.xlu0 %3615
        %3617 = vrot.lane.b32.xlu0 %v844, 9
        %v3618 = vpop.permute.xlu0 %3617
        %3619 = vrot.lane.b32.xlu0 %v843, 9
        %v3620 = vpop.permute.xlu0 %3619
        %3621 = vrot.lane.b32.xlu0 %v842, 9
        %v3622 = vpop.permute.xlu0 %3621
        %3623 = vrot.lane.b32.xlu0 %v841, 9
        %v3624 = vpop.permute.xlu0 %3623
        %3625 = vrot.lane.b32.xlu0 %v840, 9
        %v3626 = vpop.permute.xlu0 %3625
        %3627 = vrot.lane.b32.xlu0 %v839, 9
        %v3628 = vpop.permute.xlu0 %3627
        %3629 = vrot.lane.b32.xlu0 %v838, 9
        %v3630 = vpop.permute.xlu0 %3629
        %3631 = vrot.lane.b32.xlu0 %v837, 9
        %v3632 = vpop.permute.xlu0 %3631
        %3633 = vrot.lane.b32.xlu0 %v836, 9
        %v3634 = vpop.permute.xlu0 %3633
        %3635 = vrot.lane.b32.xlu0 %v835, 9
        %v3636 = vpop.permute.xlu0 %3635
        %3637 = vrot.lane.b32.xlu0 %v834, 9
        %v3638 = vpop.permute.xlu0 %3637
        %3639 = vrot.lane.b32.xlu0 %v833, 9
        %v3640 = vpop.permute.xlu0 %3639
        %3641 = vrot.lane.b32.xlu0 %v848, 9
        %v3642 = vpop.permute.xlu0 %3641
        %3643 = vrot.lane.b32.xlu0 %v847, 9
        %v3644 = vpop.permute.xlu0 %3643
        %v3661 = vsub.f32 %v846, %v3614
        %v3662 = vsub.f32 %v845, %v3616
        %v3663 = vsub.f32 %v844, %v3618
        %v3664 = vsub.f32 %v843, %v3620
        %v3665 = vsub.f32 %v842, %v3622
        %v3666 = vsub.f32 %v841, %v3624
        %v3667 = vsub.f32 %v840, %v3626
        %v3668 = vsub.f32 %v839, %v3628
        %v3669 = vsub.f32 %v838, %v3630
        %v3670 = vsub.f32 %v837, %v3632
        %v3671 = vsub.f32 %v836, %v3634
        %v3672 = vsub.f32 %v835, %v3636
        %v3673 = vsub.f32 %v834, %v3638
        %v3674 = vsub.f32 %v833, %v3640
        %v3675 = vsub.f32 %v848, %v3642
        %v3676 = vsub.f32 %v847, %v3644
        %v3677 = vadd.s32 %v216, 9
        %v3678 = vadd.s32 %v217, 9
        %v3679 = vadd.s32 %v218, 9
        %v3680 = vadd.s32 %v219, 9
        %vm3681 = vcmp.ge.s32.totalorder %v3677, 0
        %vm3682 = vcmp.ge.s32.totalorder %v3678, 0
        %vm3683 = vcmp.ge.s32.totalorder %v3679, 0
        %vm3684 = vcmp.ge.s32.totalorder %v3680, 0
        %vm3685 = vcmp.lt.s32.totalorder %v3677, 32
        %vm3686 = vcmp.lt.s32.totalorder %v3678, 32
        %vm3687 = vcmp.lt.s32.totalorder %v3679, 32
        %vm3688 = vcmp.lt.s32.totalorder %v3680, 32
        %vm3689 = vmand %vm3681, %vm3685
        %vm3690 = vmand %vm3682, %vm3686
        %vm3691 = vmand %vm3683, %vm3687
        %vm3692 = vmand %vm3684, %vm3688
        %v3693 = vsel %vm3689, %v3661, 0.0
        %v3694 = vsel %vm3690, %v3662, 0.0
        %v3695 = vsel %vm3691, %v3663, 0.0
        %v3696 = vsel %vm3692, %v3664, 0.0
        %v3697 = vsel %vm3689, %v3665, 0.0
        %v3698 = vsel %vm3690, %v3666, 0.0
        %v3699 = vsel %vm3691, %v3667, 0.0
        %v3700 = vsel %vm3692, %v3668, 0.0
        %v3701 = vsel %vm3689, %v3669, 0.0
        %v3702 = vsel %vm3690, %v3670, 0.0
        %v3703 = vsel %vm3691, %v3671, 0.0
        %v3704 = vsel %vm3692, %v3672, 0.0
        %v3705 = vsel %vm3689, %v3673, 0.0
        %v3706 = vsel %vm3690, %v3674, 0.0
        %v3707 = vsel %vm3691, %v3675, 0.0
        %v3708 = vsel %vm3692, %v3676, 0.0
        %3725 = vrot.lane.b32.xlu0 %v3693, 3
        %v3726 = vpop.permute.xlu0 %3725
        %3727 = vrot.lane.b32.xlu0 %v3694, 3
        %v3728 = vpop.permute.xlu0 %3727
        %3729 = vrot.lane.b32.xlu0 %v3695, 3
        %v3730 = vpop.permute.xlu0 %3729
        %3731 = vrot.lane.b32.xlu0 %v3696, 3
        %v3732 = vpop.permute.xlu0 %3731
        %3733 = vrot.lane.b32.xlu0 %v3697, 3
        %v3734 = vpop.permute.xlu0 %3733
        %3735 = vrot.lane.b32.xlu0 %v3698, 3
        %v3736 = vpop.permute.xlu0 %3735
        %3737 = vrot.lane.b32.xlu0 %v3699, 3
        %v3738 = vpop.permute.xlu0 %3737
        %3739 = vrot.lane.b32.xlu0 %v3700, 3
        %v3740 = vpop.permute.xlu0 %3739
        %3741 = vrot.lane.b32.xlu0 %v3701, 3
        %v3742 = vpop.permute.xlu0 %3741
        %3743 = vrot.lane.b32.xlu0 %v3702, 3
        %v3744 = vpop.permute.xlu0 %3743
        %3745 = vrot.lane.b32.xlu0 %v3703, 3
        %v3746 = vpop.permute.xlu0 %3745
        %3747 = vrot.lane.b32.xlu0 %v3704, 3
        %v3748 = vpop.permute.xlu0 %3747
        %3749 = vrot.lane.b32.xlu0 %v3705, 3
        %v3750 = vpop.permute.xlu0 %3749
        %3751 = vrot.lane.b32.xlu0 %v3706, 3
        %v3752 = vpop.permute.xlu0 %3751
        %3753 = vrot.lane.b32.xlu0 %v3707, 3
        %v3754 = vpop.permute.xlu0 %3753
        %3755 = vrot.lane.b32.xlu0 %v3708, 3
        %v3756 = vpop.permute.xlu0 %3755
        %v3773 = vadd.f32 %v3201, %v3726
        %v3774 = vadd.f32 %v3202, %v3728
        %v3775 = vadd.f32 %v3203, %v3730
        %v3776 = vadd.f32 %v3204, %v3732
        %v3777 = vadd.f32 %v3205, %v3734
        %v3778 = vadd.f32 %v3206, %v3736
        %v3779 = vadd.f32 %v3207, %v3738
        %v3780 = vadd.f32 %v3208, %v3740
        %v3781 = vadd.f32 %v3209, %v3742
        %v3782 = vadd.f32 %v3210, %v3744
        %v3783 = vadd.f32 %v3211, %v3746
        %v3784 = vadd.f32 %v3212, %v3748
        %v3785 = vadd.f32 %v3213, %v3750
        %v3786 = vadd.f32 %v3214, %v3752
        %v3787 = vadd.f32 %v3215, %v3754
        %v3788 = vadd.f32 %v3216, %v3756
        %3789 = vrot.lane.b32.xlu0 %v1007, 1
        %v3790 = vpop.permute.xlu0 %3789
        %3791 = vrot.lane.b32.xlu0 %v1006, 1
        %v3792 = vpop.permute.xlu0 %3791
        %3793 = vrot.lane.b32.xlu0 %v1005, 1
        %v3794 = vpop.permute.xlu0 %3793
        %3795 = vrot.lane.b32.xlu0 %v1004, 1
        %v3796 = vpop.permute.xlu0 %3795
        %3797 = vrot.lane.b32.xlu0 %v1003, 1
        %v3798 = vpop.permute.xlu0 %3797
        %3799 = vrot.lane.b32.xlu0 %v1002, 1
        %v3800 = vpop.permute.xlu0 %3799
        %3801 = vrot.lane.b32.xlu0 %v1001, 1
        %v3802 = vpop.permute.xlu0 %3801
        %3803 = vrot.lane.b32.xlu0 %v1000, 1
        %v3804 = vpop.permute.xlu0 %3803
        %3805 = vrot.lane.b32.xlu0 %v999, 1
        %v3806 = vpop.permute.xlu0 %3805
        %3807 = vrot.lane.b32.xlu0 %v998, 1
        %v3808 = vpop.permute.xlu0 %3807
        %3809 = vrot.lane.b32.xlu0 %v997, 1
        %v3810 = vpop.permute.xlu0 %3809
        %3811 = vrot.lane.b32.xlu0 %v996, 1
        %v3812 = vpop.permute.xlu0 %3811
        %3813 = vrot.lane.b32.xlu0 %v995, 1
        %v3814 = vpop.permute.xlu0 %3813
        %3815 = vrot.lane.b32.xlu0 %v994, 1
        %v3816 = vpop.permute.xlu0 %3815
        %3817 = vrot.lane.b32.xlu0 %v1009, 1
        %v3818 = vpop.permute.xlu0 %3817
        %3819 = vrot.lane.b32.xlu0 %v1008, 1
        %v3820 = vpop.permute.xlu0 %3819
        %v3837 = vsub.f32 %v1007, %v3790
        %v3838 = vsub.f32 %v1006, %v3792
        %v3839 = vsub.f32 %v1005, %v3794
        %v3840 = vsub.f32 %v1004, %v3796
        %v3841 = vsub.f32 %v1003, %v3798
        %v3842 = vsub.f32 %v1002, %v3800
        %v3843 = vsub.f32 %v1001, %v3802
        %v3844 = vsub.f32 %v1000, %v3804
        %v3845 = vsub.f32 %v999, %v3806
        %v3846 = vsub.f32 %v998, %v3808
        %v3847 = vsub.f32 %v997, %v3810
        %v3848 = vsub.f32 %v996, %v3812
        %v3849 = vsub.f32 %v995, %v3814
        %v3850 = vsub.f32 %v994, %v3816
        %v3851 = vsub.f32 %v1009, %v3818
        %v3852 = vsub.f32 %v1008, %v3820
        %v3853 = vadd.s32 %v216, 10
        %v3854 = vadd.s32 %v217, 10
        %v3855 = vadd.s32 %v218, 10
        %v3856 = vadd.s32 %v219, 10
        %vm3857 = vcmp.ge.s32.totalorder %v3853, 0
        %vm3858 = vcmp.ge.s32.totalorder %v3854, 0
        %vm3859 = vcmp.ge.s32.totalorder %v3855, 0
        %vm3860 = vcmp.ge.s32.totalorder %v3856, 0
        %vm3861 = vcmp.lt.s32.totalorder %v3853, 32
        %vm3862 = vcmp.lt.s32.totalorder %v3854, 32
        %vm3863 = vcmp.lt.s32.totalorder %v3855, 32
        %vm3864 = vcmp.lt.s32.totalorder %v3856, 32
        %vm3865 = vmand %vm3857, %vm3861
        %vm3866 = vmand %vm3858, %vm3862
        %vm3867 = vmand %vm3859, %vm3863
        %vm3868 = vmand %vm3860, %vm3864
        %v3869 = vsel %vm3865, %v3837, 0.0
        %v3870 = vsel %vm3866, %v3838, 0.0
        %v3871 = vsel %vm3867, %v3839, 0.0
        %v3872 = vsel %vm3868, %v3840, 0.0
        %v3873 = vsel %vm3865, %v3841, 0.0
        %v3874 = vsel %vm3866, %v3842, 0.0
        %v3875 = vsel %vm3867, %v3843, 0.0
        %v3876 = vsel %vm3868, %v3844, 0.0
        %v3877 = vsel %vm3865, %v3845, 0.0
        %v3878 = vsel %vm3866, %v3846, 0.0
        %v3879 = vsel %vm3867, %v3847, 0.0
        %v3880 = vsel %vm3868, %v3848, 0.0
        %v3881 = vsel %vm3865, %v3849, 0.0
        %v3882 = vsel %vm3866, %v3850, 0.0
        %v3883 = vsel %vm3867, %v3851, 0.0
        %v3884 = vsel %vm3868, %v3852, 0.0
        %v3885 = vadd.f32 %v3377, %v3869
        %v3886 = vadd.f32 %v3378, %v3870
        %v3887 = vadd.f32 %v3379, %v3871
        %v3888 = vadd.f32 %v3380, %v3872
        %v3889 = vadd.f32 %v3381, %v3873
        %v3890 = vadd.f32 %v3382, %v3874
        %v3891 = vadd.f32 %v3383, %v3875
        %v3892 = vadd.f32 %v3384, %v3876
        %v3893 = vadd.f32 %v3385, %v3877
        %v3894 = vadd.f32 %v3386, %v3878
        %v3895 = vadd.f32 %v3387, %v3879
        %v3896 = vadd.f32 %v3388, %v3880
        %v3897 = vadd.f32 %v3389, %v3881
        %v3898 = vadd.f32 %v3390, %v3882
        %v3899 = vadd.f32 %v3391, %v3883
        %v3900 = vadd.f32 %v3392, %v3884
        %3917 = vrot.lane.b32.xlu0 %v3553, 124
        %v3918 = vpop.permute.xlu0 %3917
        %3919 = vrot.lane.b32.xlu0 %v3554, 124
        %v3920 = vpop.permute.xlu0 %3919
        %3921 = vrot.lane.b32.xlu0 %v3555, 124
        %v3922 = vpop.permute.xlu0 %3921
        %3923 = vrot.lane.b32.xlu0 %v3556, 124
        %v3924 = vpop.permute.xlu0 %3923
        %3925 = vrot.lane.b32.xlu0 %v3557, 124
        %v3926 = vpop.permute.xlu0 %3925
        %3927 = vrot.lane.b32.xlu0 %v3558, 124
        %v3928 = vpop.permute.xlu0 %3927
        %3929 = vrot.lane.b32.xlu0 %v3559, 124
        %v3930 = vpop.permute.xlu0 %3929
        %3931 = vrot.lane.b32.xlu0 %v3560, 124
        %v3932 = vpop.permute.xlu0 %3931
        %3933 = vrot.lane.b32.xlu0 %v3561, 124
        %v3934 = vpop.permute.xlu0 %3933
        %3935 = vrot.lane.b32.xlu0 %v3562, 124
        %v3936 = vpop.permute.xlu0 %3935
        %3937 = vrot.lane.b32.xlu0 %v3563, 124
        %v3938 = vpop.permute.xlu0 %3937
        %3939 = vrot.lane.b32.xlu0 %v3564, 124
        %v3940 = vpop.permute.xlu0 %3939
        %3941 = vrot.lane.b32.xlu0 %v3565, 124
        %v3942 = vpop.permute.xlu0 %3941
        %3943 = vrot.lane.b32.xlu0 %v3566, 124
        %v3944 = vpop.permute.xlu0 %3943
        %3945 = vrot.lane.b32.xlu0 %v3567, 124
        %v3946 = vpop.permute.xlu0 %3945
        %3947 = vrot.lane.b32.xlu0 %v3568, 124
        %v3948 = vpop.permute.xlu0 %3947
        %v3965 = vadd.f32 %v3885, %v3918
        %v3966 = vadd.f32 %v3886, %v3920
        %v3967 = vadd.f32 %v3887, %v3922
        %v3968 = vadd.f32 %v3888, %v3924
        %v3969 = vadd.f32 %v3889, %v3926
        %v3970 = vadd.f32 %v3890, %v3928
        %v3971 = vadd.f32 %v3891, %v3930
        %v3972 = vadd.f32 %v3892, %v3932
        %v3973 = vadd.f32 %v3893, %v3934
        %v3974 = vadd.f32 %v3894, %v3936
        %v3975 = vadd.f32 %v3895, %v3938
        %v3976 = vadd.f32 %v3896, %v3940
        %v3977 = vadd.f32 %v3897, %v3942
        %v3978 = vadd.f32 %v3898, %v3944
        %v3979 = vadd.f32 %v3899, %v3946
        %v3980 = vadd.f32 %v3900, %v3948
        %3997 = vrot.lane.b32.xlu0 %v3773, 127
        %v3998 = vpop.permute.xlu0 %3997
        %3999 = vrot.lane.b32.xlu0 %v3774, 127
        %v4000 = vpop.permute.xlu0 %3999
        %4001 = vrot.lane.b32.xlu0 %v3775, 127
        %v4002 = vpop.permute.xlu0 %4001
        %4003 = vrot.lane.b32.xlu0 %v3776, 127
        %v4004 = vpop.permute.xlu0 %4003
        %4005 = vrot.lane.b32.xlu0 %v3777, 127
        %v4006 = vpop.permute.xlu0 %4005
        %4007 = vrot.lane.b32.xlu0 %v3778, 127
        %v4008 = vpop.permute.xlu0 %4007
        %4009 = vrot.lane.b32.xlu0 %v3779, 127
        %v4010 = vpop.permute.xlu0 %4009
        %4011 = vrot.lane.b32.xlu0 %v3780, 127
        %v4012 = vpop.permute.xlu0 %4011
        %4013 = vrot.lane.b32.xlu0 %v3781, 127
        %v4014 = vpop.permute.xlu0 %4013
        %4015 = vrot.lane.b32.xlu0 %v3782, 127
        %v4016 = vpop.permute.xlu0 %4015
        %4017 = vrot.lane.b32.xlu0 %v3783, 127
        %v4018 = vpop.permute.xlu0 %4017
        %4019 = vrot.lane.b32.xlu0 %v3784, 127
        %v4020 = vpop.permute.xlu0 %4019
        %4021 = vrot.lane.b32.xlu0 %v3785, 127
        %v4022 = vpop.permute.xlu0 %4021
        %4023 = vrot.lane.b32.xlu0 %v3786, 127
        %v4024 = vpop.permute.xlu0 %4023
        %4025 = vrot.lane.b32.xlu0 %v3787, 127
        %v4026 = vpop.permute.xlu0 %4025
        %4027 = vrot.lane.b32.xlu0 %v3788, 127
        %v4028 = vpop.permute.xlu0 %4027
        %v4045 = vadd.f32 %v3597, %v3998
        %v4046 = vadd.f32 %v3598, %v4000
        %v4047 = vadd.f32 %v3599, %v4002
        %v4048 = vadd.f32 %v3600, %v4004
        %v4049 = vadd.f32 %v3601, %v4006
        %v4050 = vadd.f32 %v3602, %v4008
        %v4051 = vadd.f32 %v3603, %v4010
        %v4052 = vadd.f32 %v3604, %v4012
        %v4053 = vadd.f32 %v3605, %v4014
        %v4054 = vadd.f32 %v3606, %v4016
        %v4055 = vadd.f32 %v3607, %v4018
        %v4056 = vadd.f32 %v3608, %v4020
        %v4057 = vadd.f32 %v3609, %v4022
        %v4058 = vadd.f32 %v3610, %v4024
        %v4059 = vadd.f32 %v3611, %v4026
        %v4060 = vadd.f32 %v3612, %v4028
        %4077 = vrot.lane.b32.xlu0 %v4045, 122
        %v4078 = vpop.permute.xlu0 %4077
        %4079 = vrot.lane.b32.xlu0 %v4046, 122
        %v4080 = vpop.permute.xlu0 %4079
        %4081 = vrot.lane.b32.xlu0 %v4047, 122
        %v4082 = vpop.permute.xlu0 %4081
        %4083 = vrot.lane.b32.xlu0 %v4048, 122
        %v4084 = vpop.permute.xlu0 %4083
        %4085 = vrot.lane.b32.xlu0 %v4049, 122
        %v4086 = vpop.permute.xlu0 %4085
        %4087 = vrot.lane.b32.xlu0 %v4050, 122
        %v4088 = vpop.permute.xlu0 %4087
        %4089 = vrot.lane.b32.xlu0 %v4051, 122
        %v4090 = vpop.permute.xlu0 %4089
        %4091 = vrot.lane.b32.xlu0 %v4052, 122
        %v4092 = vpop.permute.xlu0 %4091
        %4093 = vrot.lane.b32.xlu0 %v4053, 122
        %v4094 = vpop.permute.xlu0 %4093
        %4095 = vrot.lane.b32.xlu0 %v4054, 122
        %v4096 = vpop.permute.xlu0 %4095
        %4097 = vrot.lane.b32.xlu0 %v4055, 122
        %v4098 = vpop.permute.xlu0 %4097
        %4099 = vrot.lane.b32.xlu0 %v4056, 122
        %v4100 = vpop.permute.xlu0 %4099
        %4101 = vrot.lane.b32.xlu0 %v4057, 122
        %v4102 = vpop.permute.xlu0 %4101
        %4103 = vrot.lane.b32.xlu0 %v4058, 122
        %v4104 = vpop.permute.xlu0 %4103
        %4105 = vrot.lane.b32.xlu0 %v4059, 122
        %v4106 = vpop.permute.xlu0 %4105
        %4107 = vrot.lane.b32.xlu0 %v4060, 122
        %v4108 = vpop.permute.xlu0 %4107
        %v4125 = vadd.f32 %v3965, %v4078
        %v4126 = vadd.f32 %v3966, %v4080
        %v4127 = vadd.f32 %v3967, %v4082
        %v4128 = vadd.f32 %v3968, %v4084
        %v4129 = vadd.f32 %v3969, %v4086
        %v4130 = vadd.f32 %v3970, %v4088
        %v4131 = vadd.f32 %v3971, %v4090
        %v4132 = vadd.f32 %v3972, %v4092
        %v4133 = vadd.f32 %v3973, %v4094
        %v4134 = vadd.f32 %v3974, %v4096
        %v4135 = vadd.f32 %v3975, %v4098
        %v4136 = vadd.f32 %v3976, %v4100
        %v4137 = vadd.f32 %v3977, %v4102
        %v4138 = vadd.f32 %v3978, %v4104
        %v4139 = vadd.f32 %v3979, %v4106
        %v4140 = vadd.f32 %v3980, %v4108
        %v4141 = vmax.f32 %v4125, 0.0
        %v4142 = vmax.f32 %v4126, 0.0
        %v4143 = vmax.f32 %v4127, 0.0
        %v4144 = vmax.f32 %v4128, 0.0
        %v4145 = vmax.f32 %v4129, 0.0
        %v4146 = vmax.f32 %v4130, 0.0
        %v4147 = vmax.f32 %v4131, 0.0
        %v4148 = vmax.f32 %v4132, 0.0
        %v4149 = vmax.f32 %v4133, 0.0
        %v4150 = vmax.f32 %v4134, 0.0
        %v4151 = vmax.f32 %v4135, 0.0
        %v4152 = vmax.f32 %v4136, 0.0
        %v4153 = vmax.f32 %v4137, 0.0
        %v4154 = vmax.f32 %v4138, 0.0
        %v4155 = vmax.f32 %v4139, 0.0
        %v4156 = vmax.f32 %v4140, 0.0
        %v4157 = vmin.f32 %v4141, 1.0
        %v4158 = vmin.f32 %v4142, 1.0
        %v4159 = vmin.f32 %v4143, 1.0
        %v4160 = vmin.f32 %v4144, 1.0
        %v4161 = vmin.f32 %v4145, 1.0
        %v4162 = vmin.f32 %v4146, 1.0
        %v4163 = vmin.f32 %v4147, 1.0
        %v4164 = vmin.f32 %v4148, 1.0
        %v4165 = vmin.f32 %v4149, 1.0
        %v4166 = vmin.f32 %v4150, 1.0
        %v4167 = vmin.f32 %v4151, 1.0
        %v4168 = vmin.f32 %v4152, 1.0
        %v4169 = vmin.f32 %v4153, 1.0
        %v4170 = vmin.f32 %v4154, 1.0
        %v4171 = vmin.f32 %v4155, 1.0
        %v4172 = vmin.f32 %v4156, 1.0
        %v4173 = vsub.f32 1.0, %v4157
        %v4174 = vsub.f32 1.0, %v4158
        %v4175 = vsub.f32 1.0, %v4159
        %v4176 = vsub.f32 1.0, %v4160
        %v4177 = vsub.f32 1.0, %v4161
        %v4178 = vsub.f32 1.0, %v4162
        %v4179 = vsub.f32 1.0, %v4163
        %v4180 = vsub.f32 1.0, %v4164
        %v4181 = vsub.f32 1.0, %v4165
        %v4182 = vsub.f32 1.0, %v4166
        %v4183 = vsub.f32 1.0, %v4167
        %v4184 = vsub.f32 1.0, %v4168
        %v4185 = vsub.f32 1.0, %v4169
        %v4186 = vsub.f32 1.0, %v4170
        %v4187 = vsub.f32 1.0, %v4171
        %v4188 = vsub.f32 1.0, %v4172
        %v4189 = vsub.s32 %v216, %v221
        %v4190 = vsub.s32 %v217, %v221
        %v4191 = vsub.s32 %v218, %v221
        %v4192 = vsub.s32 %v219, %v221
        %vm4193 = vcmp.lt.s32.totalorder %v4189, 0
        %v4194 = vsub.s32 0, %v4189
        %v4195 = vsel %vm4193, %v4194, %v4189
        %vm4196 = vcmp.lt.s32.totalorder %v4190, 0
        %v4197 = vsub.s32 0, %v4190
        %v4198 = vsel %vm4196, %v4197, %v4190
        %vm4199 = vcmp.lt.s32.totalorder %v4191, 0
        %v4200 = vsub.s32 0, %v4191
        %v4201 = vsel %vm4199, %v4200, %v4191
        %vm4202 = vcmp.lt.s32.totalorder %v4192, 0
        %v4203 = vsub.s32 0, %v4192
        %v4204 = vsel %vm4202, %v4203, %v4192
        %vm4205 = vcmp.le.s32.totalorder %v4195, 1
        %vm4206 = vcmp.le.s32.totalorder %v4198, 1
        %vm4207 = vcmp.le.s32.totalorder %v4201, 1
        %vm4208 = vcmp.le.s32.totalorder %v4204, 1
        %v4209 = vsel %vm4205, 1.0, 0.0
        %v4210 = vsel %vm4206, 1.0, 0.0
        %v4211 = vsel %vm4207, 1.0, 0.0
        %v4212 = vsel %vm4208, 1.0, 0.0
        %v4213 = vpack.c.bf16 %v4210, %v4209
        %v4214 = vpack.c.bf16 %v4212, %v4211
        %v4215 = vpack.c.bf16 %v4174, %v4173
        %v4216 = vpack.c.bf16 %v4176, %v4175
        %v4217 = vpack.c.bf16 %v4178, %v4177
        %v4218 = vpack.c.bf16 %v4180, %v4179
        %v4219 = vpack.c.bf16 %v4182, %v4181
        %v4220 = vpack.c.bf16 %v4184, %v4183
        %v4221 = vpack.c.bf16 %v4186, %v4185
        %v4222 = vpack.c.bf16 %v4188, %v4187
        %vm4223 = vcmp.eq.s32.totalorder %v216, 31
        %vm4224 = vcmp.eq.s32.totalorder %v217, 31
        %vm4225 = vcmp.eq.s32.totalorder %v218, 31
        %vm4226 = vcmp.eq.s32.totalorder %v219, 31
        %4243 = vrot.lane.b32.xlu0 %v4173, 117
        %v4244 = vpop.permute.xlu0 %4243
        %4245 = vrot.lane.b32.xlu0 %v4174, 117
        %v4246 = vpop.permute.xlu0 %4245
        %4247 = vrot.lane.b32.xlu0 %v4175, 117
        %v4248 = vpop.permute.xlu0 %4247
        %4249 = vrot.lane.b32.xlu0 %v4176, 117
        %v4250 = vpop.permute.xlu0 %4249
        %4251 = vrot.lane.b32.xlu0 %v4177, 117
        %v4252 = vpop.permute.xlu0 %4251
        %4253 = vrot.lane.b32.xlu0 %v4178, 117
        %v4254 = vpop.permute.xlu0 %4253
        %4255 = vrot.lane.b32.xlu0 %v4179, 117
        %v4256 = vpop.permute.xlu0 %4255
        %4257 = vrot.lane.b32.xlu0 %v4180, 117
        %v4258 = vpop.permute.xlu0 %4257
        %4259 = vrot.lane.b32.xlu0 %v4181, 117
        %v4260 = vpop.permute.xlu0 %4259
        %4261 = vrot.lane.b32.xlu0 %v4182, 117
        %v4262 = vpop.permute.xlu0 %4261
        %4263 = vrot.lane.b32.xlu0 %v4183, 117
        %v4264 = vpop.permute.xlu0 %4263
        %4265 = vrot.lane.b32.xlu0 %v4184, 117
        %v4266 = vpop.permute.xlu0 %4265
        %4267 = vrot.lane.b32.xlu0 %v4185, 117
        %v4268 = vpop.permute.xlu0 %4267
        %4269 = vrot.lane.b32.xlu0 %v4186, 117
        %v4270 = vpop.permute.xlu0 %4269
        %4271 = vrot.lane.b32.xlu0 %v4187, 117
        %v4272 = vpop.permute.xlu0 %4271
        %4273 = vrot.lane.b32.xlu0 %v4188, 117
        %v4274 = vpop.permute.xlu0 %4273
        %v4291 = vrot.slane %v4244, 1
        %v4292 = vrot.slane %v4246, 1
        %v4293 = vrot.slane %v4248, 1
        %v4294 = vrot.slane %v4250, 1
        %v4295 = vrot.slane %v4252, 1
        %v4296 = vrot.slane %v4254, 1
        %v4297 = vrot.slane %v4256, 1
        %v4298 = vrot.slane %v4258, 1
        %v4299 = vrot.slane %v4260, 1
        %v4300 = vrot.slane %v4262, 1
        %v4301 = vrot.slane %v4264, 1
        %v4302 = vrot.slane %v4266, 1
        %v4303 = vrot.slane %v4268, 1
        %v4304 = vrot.slane %v4270, 1
        %v4305 = vrot.slane %v4272, 1
        %v4306 = vrot.slane %v4274, 1
        %v4307 = vsel %vm832, %v4305, %v4306
        %v4308 = vsel %vm832, %v4304, %v4305
        %v4309 = vsel %vm832, %v4303, %v4304
        %v4310 = vsel %vm832, %v4302, %v4303
        %v4311 = vsel %vm832, %v4301, %v4302
        %v4312 = vsel %vm832, %v4300, %v4301
        %v4313 = vsel %vm832, %v4299, %v4300
        %v4314 = vsel %vm832, %v4298, %v4299
        %v4315 = vsel %vm832, %v4297, %v4298
        %v4316 = vsel %vm832, %v4296, %v4297
        %v4317 = vsel %vm832, %v4295, %v4296
        %v4318 = vsel %vm832, %v4294, %v4295
        %v4319 = vsel %vm832, %v4293, %v4294
        %v4320 = vsel %vm832, %v4292, %v4293
        %v4321 = vsel %vm832, %v4291, %v4292
        %v4322 = vsel %vm832, %v4306, %v4291
        %v4323 = vsel %vm4223, 0.0, %v4321
        %v4324 = vsel %vm4224, 0.0, %v4320
        %v4325 = vsel %vm4225, 0.0, %v4319
        %v4326 = vsel %vm4226, 0.0, %v4318
        %v4327 = vsel %vm4223, 0.0, %v4317
        %v4328 = vsel %vm4224, 0.0, %v4316
        %v4329 = vsel %vm4225, 0.0, %v4315
        %v4330 = vsel %vm4226, 0.0, %v4314
        %v4331 = vsel %vm4223, 0.0, %v4313
        %v4332 = vsel %vm4224, 0.0, %v4312
        %v4333 = vsel %vm4225, 0.0, %v4311
        %v4334 = vsel %vm4226, 0.0, %v4310
        %v4335 = vsel %vm4223, 0.0, %v4309
        %v4336 = vsel %vm4224, 0.0, %v4308
        %v4337 = vsel %vm4225, 0.0, %v4307
        %v4338 = vsel %vm4226, 0.0, %v4322
        %vm4339 = vcmp.eq.s32.totalorder %v216, 0
        %vm4340 = vcmp.eq.s32.totalorder %v217, 0
        %vm4341 = vcmp.eq.s32.totalorder %v218, 0
        %vm4342 = vcmp.eq.s32.totalorder %v219, 0
        %v4343 = vrot.slane %v4244, 7
        %v4344 = vrot.slane %v4246, 7
        %v4345 = vrot.slane %v4248, 7
        %v4346 = vrot.slane %v4250, 7
        %v4347 = vrot.slane %v4252, 7
        %v4348 = vrot.slane %v4254, 7
        %v4349 = vrot.slane %v4256, 7
        %v4350 = vrot.slane %v4258, 7
        %v4351 = vrot.slane %v4260, 7
        %v4352 = vrot.slane %v4262, 7
        %v4353 = vrot.slane %v4264, 7
        %v4354 = vrot.slane %v4266, 7
        %v4355 = vrot.slane %v4268, 7
        %v4356 = vrot.slane %v4270, 7
        %v4357 = vrot.slane %v4272, 7
        %v4358 = vrot.slane %v4274, 7
        %v4359 = vsel %vm543, %v4357, %v4358
        %v4360 = vsel %vm543, %v4356, %v4357
        %v4361 = vsel %vm543, %v4355, %v4356
        %v4362 = vsel %vm543, %v4354, %v4355
        %v4363 = vsel %vm543, %v4353, %v4354
        %v4364 = vsel %vm543, %v4352, %v4353
        %v4365 = vsel %vm543, %v4351, %v4352
        %v4366 = vsel %vm543, %v4350, %v4351
        %v4367 = vsel %vm543, %v4349, %v4350
        %v4368 = vsel %vm543, %v4348, %v4349
        %v4369 = vsel %vm543, %v4347, %v4348
        %v4370 = vsel %vm543, %v4346, %v4347
        %v4371 = vsel %vm543, %v4345, %v4346
        %v4372 = vsel %vm543, %v4344, %v4345
        %v4373 = vsel %vm543, %v4343, %v4344
        %v4374 = vsel %vm543, %v4358, %v4343
        %v4375 = vsel %vm4339, 0.0, %v4374
        %v4376 = vsel %vm4340, 0.0, %v4373
        %v4377 = vsel %vm4341, 0.0, %v4372
        %v4378 = vsel %vm4342, 0.0, %v4371
        %v4379 = vsel %vm4339, 0.0, %v4370
        %v4380 = vsel %vm4340, 0.0, %v4369
        %v4381 = vsel %vm4341, 0.0, %v4368
        %v4382 = vsel %vm4342, 0.0, %v4367
        %v4383 = vsel %vm4339, 0.0, %v4366
        %v4384 = vsel %vm4340, 0.0, %v4365
        %v4385 = vsel %vm4341, 0.0, %v4364
        %v4386 = vsel %vm4342, 0.0, %v4363
        %v4387 = vsel %vm4339, 0.0, %v4362
        %v4388 = vsel %vm4340, 0.0, %v4361
        %v4389 = vsel %vm4341, 0.0, %v4360
        %v4390 = vsel %vm4342, 0.0, %v4359
        %4399 = vrot.lane.b32.xlu0 %v4215, 117
        %v4400 = vpop.permute.xlu0 %4399
        %4401 = vrot.lane.b32.xlu0 %v4216, 117
        %v4402 = vpop.permute.xlu0 %4401
        %4403 = vrot.lane.b32.xlu0 %v4217, 117
        %v4404 = vpop.permute.xlu0 %4403
        %4405 = vrot.lane.b32.xlu0 %v4218, 117
        %v4406 = vpop.permute.xlu0 %4405
        %4407 = vrot.lane.b32.xlu0 %v4219, 117
        %v4408 = vpop.permute.xlu0 %4407
        %4409 = vrot.lane.b32.xlu0 %v4220, 117
        %v4410 = vpop.permute.xlu0 %4409
        %4411 = vrot.lane.b32.xlu0 %v4221, 117
        %v4412 = vpop.permute.xlu0 %4411
        %4413 = vrot.lane.b32.xlu0 %v4222, 117
        %v4414 = vpop.permute.xlu0 %4413
        %v4416 = vsel %vm244, %v4400, 0
        %v4419 = vsel %vm244, %v4402, 0
        %v4422 = vsel %vm244, %v4404, 0
        %v4425 = vsel %vm244, %v4406, 0
        %v4428 = vsel %vm244, %v4408, 0
        %v4431 = vsel %vm244, %v4410, 0
        %v4434 = vsel %vm244, %v4412, 0
        %v4437 = vsel %vm244, %v4414, 0
        %4439 = vmatprep.subr.bf16.mxu0 0
        %4440 = vmatpush1.bf16.msra.mxu0 %v4213
        %4441 = vmatprep.subr.bf16.mxu0 0
        %4442 = vmatpush1.bf16.msra.mxu0 %v4214
        %4443 = vmatprep.subr.bf16.mxu0 0
        %4444 = vmatpush1.bf16.msra.mxu0 0
        %4445 = vmatprep.subr.bf16.mxu0 0
        %4446 = vmatpush1.bf16.msra.mxu0 0
        %4447 = vmatprep.subr.bf16.mxu0 0
        %4448 = vmatpush1.bf16.msra.mxu0 0
        %4449 = vmatprep.subr.bf16.mxu0 0
        %4450 = vmatpush1.bf16.msra.mxu0 0
        %4451 = vmatprep.subr.bf16.mxu0 0
        %4452 = vmatpush1.bf16.msra.mxu0 0
        %4453 = vmatprep.subr.bf16.mxu0 0
        %4454 = vmatpush1.bf16.msra.mxu0 0
        %4455 = vmatprep.subr.bf16.mxu0 0
        %4456 = vmatpush1.bf16.msra.mxu0 0
        %4457 = vmatprep.subr.bf16.mxu0 0
        %4458 = vmatpush1.bf16.msra.mxu0 0
        %4459 = vmatprep.subr.bf16.mxu0 0
        %4460 = vmatpush1.bf16.msra.mxu0 0
        %4461 = vmatprep.subr.bf16.mxu0 0
        %4462 = vmatpush1.bf16.msra.mxu0 0
        %4463 = vmatprep.subr.bf16.mxu0 0
        %4464 = vmatpush1.bf16.msra.mxu0 0
        %4465 = vmatprep.subr.bf16.mxu0 0
        %4466 = vmatpush1.bf16.msra.mxu0 0
        %4467 = vmatprep.subr.bf16.mxu0 0
        %4468 = vmatpush1.bf16.msra.mxu0 0
        %4469 = vmatprep.subr.bf16.mxu0 0
        %4470 = vmatpush1.bf16.msra.mxu0 0
        %4471 = vmatprep.mubr.bf16.mxu0 0
        %4472 = vmatmul.mubr.bf16.gmra.mrb[0].mxu0 %v4416
        %v4473 = vpop.f32.mrb[0].mxu0
        %v4474 = vadd.f32 %v4323, %v4473
        %v4475 = vpop.f32.mrb[0].mxu0
        %v4476 = vpop.f32.mrb[0].mxu0
        %v4477 = vadd.f32 %v4324, %v4476
        %v4478 = vpop.f32.mrb[0].mxu0
        %4479 = vmatprep.mubr.bf16.mxu0 0
        %4480 = vmatmul.mubr.bf16.gmra.mrb[0].mxu0 %v4419
        %v4481 = vpop.f32.mrb[0].mxu0
        %v4482 = vadd.f32 %v4325, %v4481
        %v4483 = vpop.f32.mrb[0].mxu0
        %v4484 = vpop.f32.mrb[0].mxu0
        %v4485 = vadd.f32 %v4326, %v4484
        %v4486 = vpop.f32.mrb[0].mxu0
        %4487 = vmatprep.mubr.bf16.mxu0 0
        %4488 = vmatmul.mubr.bf16.gmra.mrb[0].mxu0 %v4422
        %v4489 = vpop.f32.mrb[0].mxu0
        %v4490 = vadd.f32 %v4327, %v4489
        %v4491 = vpop.f32.mrb[0].mxu0
        %v4492 = vpop.f32.mrb[0].mxu0
        %v4493 = vadd.f32 %v4328, %v4492
        %v4494 = vpop.f32.mrb[0].mxu0
        %4495 = vmatprep.mubr.bf16.mxu0 0
        %4496 = vmatmul.mubr.bf16.gmra.mrb[0].mxu0 %v4425
        %v4497 = vpop.f32.mrb[0].mxu0
        %v4498 = vadd.f32 %v4329, %v4497
        %v4499 = vpop.f32.mrb[0].mxu0
        %v4500 = vpop.f32.mrb[0].mxu0
        %v4501 = vadd.f32 %v4330, %v4500
        %v4502 = vpop.f32.mrb[0].mxu0
        %4503 = vmatprep.mubr.bf16.mxu0 0
        %4504 = vmatmul.mubr.bf16.gmra.mrb[0].mxu0 %v4428
        %v4505 = vpop.f32.mrb[0].mxu0
        %v4506 = vadd.f32 %v4331, %v4505
        %v4507 = vpop.f32.mrb[0].mxu0
        %v4508 = vpop.f32.mrb[0].mxu0
        %v4509 = vadd.f32 %v4332, %v4508
        %v4510 = vpop.f32.mrb[0].mxu0
        %4511 = vmatprep.mubr.bf16.mxu0 0
        %4512 = vmatmul.mubr.bf16.gmra.mrb[0].mxu0 %v4431
        %v4513 = vpop.f32.mrb[0].mxu0
        %v4514 = vadd.f32 %v4333, %v4513
        %v4515 = vpop.f32.mrb[0].mxu0
        %v4516 = vpop.f32.mrb[0].mxu0
        %v4517 = vadd.f32 %v4334, %v4516
        %v4518 = vpop.f32.mrb[0].mxu0
        %4519 = vmatprep.mubr.bf16.mxu0 0
        %4520 = vmatmul.mubr.bf16.gmra.mrb[0].mxu0 %v4434
        %v4521 = vpop.f32.mrb[0].mxu0
        %v4522 = vadd.f32 %v4335, %v4521
        %v4523 = vpop.f32.mrb[0].mxu0
        %v4524 = vpop.f32.mrb[0].mxu0
        %v4525 = vadd.f32 %v4336, %v4524
        %v4526 = vpop.f32.mrb[0].mxu0
        %4527 = vmatprep.mubr.bf16.mxu0 0
        %4528 = vmatmul.mubr.bf16.gmra.mrb[0].mxu0 %v4437
        %v4529 = vpop.f32.mrb[0].mxu0
        %v4530 = vadd.f32 %v4337, %v4529
        %v4531 = vpop.f32.mrb[0].mxu0
        %v4532 = vpop.f32.mrb[0].mxu0
        %v4533 = vadd.f32 %v4338, %v4532
        %v4534 = vpop.f32.mrb[0].mxu0
        %4535 = vdwg.mxu0
        %v4536 = vadd.f32 %v4474, %v4375
        %v4537 = vadd.f32 %v4477, %v4376
        %v4538 = vadd.f32 %v4482, %v4377
        %v4539 = vadd.f32 %v4485, %v4378
        %v4540 = vadd.f32 %v4490, %v4379
        %v4541 = vadd.f32 %v4493, %v4380
        %v4542 = vadd.f32 %v4498, %v4381
        %v4543 = vadd.f32 %v4501, %v4382
        %v4544 = vadd.f32 %v4506, %v4383
        %v4545 = vadd.f32 %v4509, %v4384
        %v4546 = vadd.f32 %v4514, %v4385
        %v4547 = vadd.f32 %v4517, %v4386
        %v4548 = vadd.f32 %v4522, %v4387
        %v4549 = vadd.f32 %v4525, %v4388
        %v4550 = vadd.f32 %v4530, %v4389
        %v4551 = vadd.f32 %v4533, %v4390
        %v4552 = vmax.f32 %v4536, 0.0
        %v4553 = vmax.f32 %v4537, 0.0
        %v4554 = vmax.f32 %v4538, 0.0
        %v4555 = vmax.f32 %v4539, 0.0
        %v4556 = vmax.f32 %v4540, 0.0
        %v4557 = vmax.f32 %v4541, 0.0
        %v4558 = vmax.f32 %v4542, 0.0
        %v4559 = vmax.f32 %v4543, 0.0
        %v4560 = vmax.f32 %v4544, 0.0
        %v4561 = vmax.f32 %v4545, 0.0
        %v4562 = vmax.f32 %v4546, 0.0
        %v4563 = vmax.f32 %v4547, 0.0
        %v4564 = vmax.f32 %v4548, 0.0
        %v4565 = vmax.f32 %v4549, 0.0
        %v4566 = vmax.f32 %v4550, 0.0
        %v4567 = vmax.f32 %v4551, 0.0
        %v4568 = vmin.f32 %v4552, 1.0
        %v4569 = vmin.f32 %v4553, 1.0
        %v4570 = vmin.f32 %v4554, 1.0
        %v4571 = vmin.f32 %v4555, 1.0
        %v4572 = vmin.f32 %v4556, 1.0
        %v4573 = vmin.f32 %v4557, 1.0
        %v4574 = vmin.f32 %v4558, 1.0
        %v4575 = vmin.f32 %v4559, 1.0
        %v4576 = vmin.f32 %v4560, 1.0
        %v4577 = vmin.f32 %v4561, 1.0
        %v4578 = vmin.f32 %v4562, 1.0
        %v4579 = vmin.f32 %v4563, 1.0
        %v4580 = vmin.f32 %v4564, 1.0
        %v4581 = vmin.f32 %v4565, 1.0
        %v4582 = vmin.f32 %v4566, 1.0
        %v4583 = vmin.f32 %v4567, 1.0
        %v4584 = vsub.f32 %v4568, %v4244
        %v4585 = vsub.f32 %v4569, %v4246
        %v4586 = vsub.f32 %v4570, %v4248
        %v4587 = vsub.f32 %v4571, %v4250
        %v4588 = vsub.f32 %v4572, %v4252
        %v4589 = vsub.f32 %v4573, %v4254
        %v4590 = vsub.f32 %v4574, %v4256
        %v4591 = vsub.f32 %v4575, %v4258
        %v4592 = vsub.f32 %v4576, %v4260
        %v4593 = vsub.f32 %v4577, %v4262
        %v4594 = vsub.f32 %v4578, %v4264
        %v4595 = vsub.f32 %v4579, %v4266
        %v4596 = vsub.f32 %v4580, %v4268
        %v4597 = vsub.f32 %v4581, %v4270
        %v4598 = vsub.f32 %v4582, %v4272
        %v4599 = vsub.f32 %v4583, %v4274
        %4600 = vst.msk [vmem:[%s164] sm:$0xff] %vm244, %v4584
        %4601 = vst.msk [vmem:[%s164 + $0x8] sm:$0xff] %vm244, %v4585
        %4602 = vst.msk [vmem:[%s164 + $0x10] sm:$0xff] %vm244, %v4586
        %4603 = vst.msk [vmem:[%s164 + $0x18] sm:$0xff] %vm244, %v4587
        %4604 = vst.msk [vmem:[%s164 + $0x20] sm:$0xff] %vm244, %v4588
        %4605 = vst.msk [vmem:[%s164 + $0x28] sm:$0xff] %vm244, %v4589
        %4606 = vst.msk [vmem:[%s164 + $0x30] sm:$0xff] %vm244, %v4590
        %4607 = vst.msk [vmem:[%s164 + $0x38] sm:$0xff] %vm244, %v4591
        %4608 = vst.msk [vmem:[%s164 + $0x40] sm:$0xff] %vm244, %v4592
        %4609 = vst.msk [vmem:[%s164 + $0x48] sm:$0xff] %vm244, %v4593
        %4610 = vst.msk [vmem:[%s164 + $0x50] sm:$0xff] %vm244, %v4594
        %4611 = vst.msk [vmem:[%s164 + $0x58] sm:$0xff] %vm244, %v4595
        %4612 = vst.msk [vmem:[%s164 + $0x60] sm:$0xff] %vm244, %v4596
        %4613 = vst.msk [vmem:[%s164 + $0x68] sm:$0xff] %vm244, %v4597
        %4614 = vst.msk [vmem:[%s164 + $0x70] sm:$0xff] %vm244, %v4598
        %4615 = vst.msk [vmem:[%s164 + $0x78] sm:$0xff] %vm244, %v4599
        %s4616 = smul.u32 16, %s15
        %p4617 = scmp.lt.s32.totalorder %s4616, 31
        %s4618 = scalar_select %p4617, %s4616, 31
        %s4619 = smul.addr %s4618, 8
        %s4620 = scalar_lea.vmem %s1, %s4619
        // Predicated region
        $region29: #{tpu_custom_call.1} parent=23 // pred_check
          %p4621 = pneg %p59
        $region30: #{tpu_custom_call.1} parent=23 // pred_check_branch
          %4623 = sbr.rel (%p4621) target = $region32
        $region31: #{tpu_custom_call.1} parent=23 // pred_region
          %s4624 = smul.u32 16, %s15
        $region32: #{tpu_custom_call.1} parent=23 // pred_fallthru
          _
      $region24: #{tpu_custom_call.1} parent=5 // pred_fallthru
        _
      %p4625 = scmp.le.s32.totalorder 2, %s10
      // Predicated region
      $region33: #{tpu_custom_call.1} parent=5 // pred_check
        %p4626 = pneg %p4625
      $region34: #{tpu_custom_call.1} parent=5 // pred_check_branch
        %4628 = sbr.rel (%p4626) target = $region36
      $region35: #{tpu_custom_call.1} parent=5 // pred_region
        %s4629 = ssub.s32 %s10, 2
        // Predicated region
        $region37: #{tpu_custom_call.1} parent=35 // pred_check
          %p4630 = pneg %p65
        $region38: #{tpu_custom_call.1} parent=35 // pred_check_branch
          %4632 = sbr.rel (%p4630) target = $region40
        $region39: #{tpu_custom_call.1} parent=35 // pred_region
          %s4633 = smul.u32 16, %s16
          %p4634 = scmp.lt.s32.totalorder %s4633, 31
          %s4635 = scalar_select %p4634, %s4633, 31
          %s4636 = smul.addr %s4635, 8
          %s4637 = scalar_lea.vmem %s1, %s4636
        $region40: #{tpu_custom_call.1} parent=35 // pred_fallthru
          _
      $region36: #{tpu_custom_call.1} parent=5 // pred_fallthru
        _
    $region6: #{tpu_custom_call.1} parent=1 // loop_footer
      %s14 = sadd.s32 1, %s10
    $region7: #{tpu_custom_call.1} parent=1 // loop_footer_branch
      %9 = sbr.rel target = $region3
    $region8: #{tpu_custom_call.1} parent=1 // loop_exit
      _
    %4638 = vsyncpa [#allocation3], 1
    %s4639 = scalar_lea.sflag [#allocation3], 1
    %4640 = vsyncpa %s4639, 1

</llo_original>
